<compile_context>
chip_gen: v7x
topology: tpu7x:2x2x1
jax: 0.10.0
libtpu: 0.0.40
codegen_flags: <defaults>
</compile_context>

<pallas_src>
import numpy as np
import jax
import jax.numpy as jnp
from jax.experimental import pallas as pl
from jax.experimental.pallas import tpu as pltpu


# ------------------------------ fused kernel --------------------------------

def _fused_net_kernel(x_ref, r1_ref, b1_ref, r2_ref, b2_ref,
                      wfc1_ref, bfc1_ref, wfc2_ref, bfc2_ref, out_ref):
    f32, bf16 = jnp.float32, jnp.bfloat16

    # ---- conv1 (5x5, 1->10) + 2x2 maxpool + relu ----------------------------
    # One (B_TILE,168)x(168,512) matmul per output-row pair g.  RHS lanes are
    # laid out as (oh%2)*256 + (ow%2)*128 + (ow//2)*10 + oc, so the 2x2 pool is
    # a max over the four 128-lane quarters (lane-aligned, pure VPU).
    w1 = r1_ref[...]
    b1 = b1_ref[...]
    pieces = []
    for g in range(12):
        a = jnp.dot(x_ref[g], w1, preferred_element_type=f32)          # (bt, 512)
        m = jnp.maximum(jnp.maximum(a[:, 0:128], a[:, 128:256]),
                        jnp.maximum(a[:, 256:384], a[:, 384:512]))     # 2x2 pool
        pieces.append(jnp.maximum(m + b1, 0.0))                        # bias+relu
    # pooled conv1 map: lane = y*128 + x*10 + c   (y,x in [0,12), c in [0,10))
    p1 = jnp.concatenate(pieces, axis=1).astype(bf16)                  # (bt, 1536)

    # TODO(synk): nn.Dropout2d is stochastic; implemented as eval-mode identity.

    # ---- conv2 (5x5, 10->20) + 2x2 maxpool + relu ----------------------------
    # One (B_TILE,768)x(768,512) matmul per output-row pair h, consuming the
    # lane-aligned slice of p1 that holds pooled rows 2h..2h+5.
    w2 = r2_ref[...]
    b2 = b2_ref[...]
    pieces2 = []
    for h in range(4):
        lhs = p1[:, 256 * h:256 * h + 768]                             # aligned
        a = jnp.dot(lhs, w2, preferred_element_type=f32)               # (bt, 512)
        m = jnp.maximum(jnp.maximum(a[:, 0:128], a[:, 128:256]),
                        jnp.maximum(a[:, 256:384], a[:, 384:512]))
        pieces2.append(jnp.maximum(m + b2, 0.0))
    # pooled conv2 map: lane = v2*128 + u2*20 + oc  (v2,u2 in [0,4), oc in [0,20))
    p2 = jnp.concatenate(pieces2, axis=1).astype(bf16)                 # (bt, 512)

    # ---- fc1 (320->50) + relu: the .view(-1,320) flatten order is baked into
    # wfc1, so no data permutation is needed.
    h1 = jnp.maximum(jnp.dot(p2, wfc1_ref[...], preferred_element_type=f32)
                     + bfc1_ref[...], 0.0)                             # (bt, 128)

    # TODO(synk): F.dropout(training=...) is stochastic; eval-mode identity.

    # ---- fc2 (50->10) + log_softmax over the 10 valid lanes ------------------
    z = jnp.dot(h1.astype(bf16), wfc2_ref[...], preferred_element_type=f32)
    z = z + bfc2_ref[...]                                              # (bt, 128)
    lane = jax.lax.broadcasted_iota(jnp.int32, z.shape, 1)
    valid = lane < 10
    zm = jnp.where(valid, z, jnp.float32(-1e30))
    mx = jnp.max(zm, axis=-1, keepdims=True)
    e = jnp.where(valid, jnp.exp(zm - mx), 0.0)
    lse = jnp.log(jnp.sum(e, axis=-1, keepdims=True))
    out_ref[...] = jnp.where(valid, zm - mx - lse, 0.0)                # lane-dense


# ------------------------ one-time weight transforms -------------------------

def prepare_kernel_params(params):
    """Expand the PyTorch-layout weights into lane-mapped, pool-aware matmul
    weights (done once, outside the kernel, in plain numpy)."""
    w1 = np.asarray(params["conv1_w"], np.float32)   # (10, 1, 5, 5)
    b1 = np.asarray(params["conv1_b"], np.float32)   # (10,)
    w2 = np.asarray(params["conv2_w"], np.float32)   # (20, 10, 5, 5)
    b2 = np.asarray(params["conv2_b"], np.float32)   # (20,)
    fw1 = np.asarray(params["fc1_w"], np.float32)    # (50, 320)
    fb1 = np.asarray(params["fc1_b"], np.float32)    # (50,)
    fw2 = np.asarray(params["fc2_w"], np.float32)    # (10, 50)
    fb2 = np.asarray(params["fc2_b"], np.float32)    # (10,)

    # conv1 RHS: K = dh*28 + iw (dh<6, iw<28); lane = ohp*256 + owp*128 + xx*10 + oc
    r1 = np.zeros((6, 28, 2, 2, 128), np.float32)
    for ohp in range(2):
        for owp in range(2):
            for xx in range(12):
                for kh in range(5):
                    for kw in range(5):
                        dh = ohp + kh
                        iw = 2 * xx + owp + kw
                        r1[dh, iw, ohp, owp, xx * 10:xx * 10 + 10] = w1[:, 0, kh, kw]
    r1 = r1.reshape(168, 512)
    b1p = np.zeros((1, 128), np.float32)
    for xx in range(12):
        b1p[0, xx * 10:xx * 10 + 10] = b1

    # conv2 RHS: K = dy*128 + xx*10 + c ; lane = vp*256 + up*128 + u2*20 + oc2
    r2 = np.zeros((6, 128, 2, 2, 128), np.float32)
    for vp in range(2):
        for up in range(2):
            for u2 in range(4):
                for kh in range(5):
                    for kw in range(5):
                        dy = vp + kh
                        xx = 2 * u2 + up + kw
                        r2[dy, xx * 10:xx * 10 + 10, vp, up,
                           u2 * 20:u2 * 20 + 20] = w2[:, :, kh, kw].T
    r2 = r2.reshape(768, 512)
    b2p = np.zeros((1, 128), np.float32)
    for u2 in range(4):
        b2p[0, u2 * 20:u2 * 20 + 20] = b2

    # fc1: absorb the NCHW .view(-1, 320) flatten order (flat = oc*16 + v2*4 + u2)
    # against the kernel's pooled-map lane layout (lane = v2*128 + u2*20 + oc).
    wfc1 = np.zeros((4, 128, 128), np.float32)
    for v2 in range(4):
        for u2 in range(4):
            for oc in range(20):
                wfc1[v2, u2 * 20 + oc, :50] = fw1[:, oc * 16 + v2 * 4 + u2]
    wfc1 = wfc1.reshape(512, 128)
    bfc1 = np.zeros((1, 128), np.float32)
    bfc1[0, :50] = fb1

    wfc2 = np.zeros((128, 128), np.float32)
    wfc2[:50, :10] = fw2.T
    bfc2 = np.zeros((1, 128), np.float32)
    bfc2[0, :10] = fb2

    bf16 = jnp.bfloat16
    return {
        "r1": jnp.asarray(r1, bf16), "b1": jnp.asarray(b1p),
        "r2": jnp.asarray(r2, bf16), "b2": jnp.asarray(b2p),
        "wfc1": jnp.asarray(wfc1, bf16), "bfc1": jnp.asarray(bfc1),
        "wfc2": jnp.asarray(wfc2, bf16), "bfc2": jnp.asarray(bfc2),
    }


# --------------------------------- forward ----------------------------------

def _round_up(n, m):
    return ((n + m - 1) // m) * m


def net_forward(kparams, x, b_tile=None):
    """x: (B, 1, 28, 28) float32 (NCHW).  Returns (B, 10) log-probabilities."""
    B = x.shape[0]
    if b_tile is None:
        # >= 2 grid steps whenever possible (keeps both v7x TensorCores busy),
        # capped at 256 rows (one full MXU M-tile on v6e/v7x, two on v5e).
        b_tile = min(256, max(8, _round_up(-(-B // 2), 8)))
    Bp = _round_up(max(B, b_tile), b_tile)

    x2 = x.reshape(B, 28, 28).astype(jnp.float32)
    if Bp != B:
        x2 = jnp.pad(x2, ((0, Bp - B), (0, 0), (0, 0)))

    # Wrapper-side layout plumbing (tiny XLA gather): for output-row pair g the
    # kernel needs input rows 2g..2g+5, flattened into 6*28 = 168 lanes.
    rows = 2 * jnp.arange(12)[:, None] + jnp.arange(6)[None, :]        # (12, 6)
    xg = x2[:, rows, :]                                                # (Bp,12,6,28)
    xg = jnp.transpose(xg, (1, 0, 2, 3)).reshape(12, Bp, 168)
    xg = xg.astype(jnp.bfloat16)                                       # cast once

    names = ["r1", "b1", "r2", "b2", "wfc1", "bfc1", "wfc2", "bfc2"]
    weights = [kparams[n] for n in names]
    wspecs = [pl.BlockSpec(w.shape, lambda i, nd=w.ndim: (0,) * nd) for w in weights]

    grid = (Bp // b_tile,)
    out = pl.pallas_call(
        _fused_net_kernel,
        out_shape=jax.ShapeDtypeStruct((Bp, 128), jnp.float32),
        grid=grid,
        in_specs=[pl.BlockSpec((12, b_tile, 168), lambda i: (0, i, 0))] + wspecs,
        out_specs=pl.BlockSpec((b_tile, 128), lambda i: (i, 0)),
        compiler_params=pltpu.CompilerParams(
            dimension_semantics=("parallel",),
            vmem_limit_bytes=32 * 1024 * 1024,
        ),
    )(xg, *weights)
    return out[:B, :10]


# ------------------------- pure-JAX reference (check) ------------------------

def reference_forward(params, x):
    """XLA reference of the PyTorch Net.forward (eval mode)."""
    x = x.reshape(x.shape[0], 1, 28, 28).astype(jnp.float32)
    dn = ("NCHW", "OIHW", "NCHW")
    y = jax.lax.conv_general_dilated(x, params["conv1_w"], (1, 1), "VALID",
                                     dimension_numbers=dn)
    y = y + params["conv1_b"][None, :, None, None]
    y = jax.lax.reduce_window(y, -jnp.inf, jax.lax.max,
                              (1, 1, 2, 2), (1, 1, 2, 2), "VALID")
    y = jnp.maximum(y, 0.0)
    y = jax.lax.conv_general_dilated(y, params["conv2_w"], (1, 1), "VALID",
                                     dimension_numbers=dn)
    y = y + params["conv2_b"][None, :, None, None]
    y = jax.lax.reduce_window(y, -jnp.inf, jax.lax.max,
                              (1, 1, 2, 2), (1, 1, 2, 2), "VALID")
    y = jnp.maximum(y, 0.0)
    y = y.reshape(y.shape[0], 320)
    y = jnp.maximum(y @ params["fc1_w"].T + params["fc1_b"], 0.0)
    y = y @ params["fc2_w"].T + params["fc2_b"]
    return jax.nn.log_softmax(y, axis=-1)


# ------------------------------ init / driver --------------------------------

def init_params(key):
    ks = jax.random.split(key, 8)

    def u(k, shape, fan_in):
        bound = 1.0 / jnp.sqrt(fan_in)
        return jax.random.uniform(k, shape, jnp.float32, -bound, bound)

    return {
        "conv1_w": u(ks[0], (10, 1, 5, 5), 1 * 5 * 5),
        "conv1_b": u(ks[1], (10,), 1 * 5 * 5),
        "conv2_w": u(ks[2], (20, 10, 5, 5), 10 * 5 * 5),
        "conv2_b": u(ks[3], (20,), 10 * 5 * 5),
        "fc1_w": u(ks[4], (50, 320), 320),
        "fc1_b": u(ks[5], (50,), 320),
        "fc2_w": u(ks[6], (10, 50), 50),
        "fc2_b": u(ks[7], (10,), 50),
    }


if __name__ == "__main__":
    key = jax.random.PRNGKey(0)
    pkey, xkey = jax.random.split(key)
    params = init_params(pkey)
    kparams = prepare_kernel_params(params)

    # Input spatial size is pinned to 1x28x28 by the module's .view(-1, 320).
    # B=30 exercises batch padding (->32) and a 2-step parallel grid.
    B = 30
    x = jax.random.normal(xkey, (B, 1, 28, 28), jnp.float32)

    fwd = jax.jit(net_forward)
    out = jax.block_until_ready(fwd(kparams, x))
    assert out.shape == (B, 10)

    # Numerical parity vs. the pure-JAX reference (validates the lane-mapped
    # weight transforms; loose tolerance because matmuls run in bf16).
    ref = jax.block_until_ready(jax.jit(reference_forward)(params, x))
    err = float(jnp.max(jnp.abs(out - ref)))
    assert err < 1e-1, f"mismatch vs reference: max |diff| = {err}"

    assert bool(jnp.all(jnp.isfinite(out)))
    assert bool(jnp.all(jnp.abs(jnp.sum(jnp.exp(out), axis=-1) - 1.0) < 1e-3))
    print("KERNEL_OK")
</pallas_src>

<mosaic_0001>
module attributes {stable_mosaic.version = 11 : i64} {
  func.func @_fused_net_kernel(%arg0: i32, %arg1: memref<12x16x168xbf16, #tpu.memory_space<vmem>>, %arg2: memref<168x512xbf16, #tpu.memory_space<vmem>>, %arg3: memref<1x128xf32, #tpu.memory_space<vmem>>, %arg4: memref<768x512xbf16, #tpu.memory_space<vmem>>, %arg5: memref<1x128xf32, #tpu.memory_space<vmem>>, %arg6: memref<512x128xbf16, #tpu.memory_space<vmem>>, %arg7: memref<1x128xf32, #tpu.memory_space<vmem>>, %arg8: memref<128x128xbf16, #tpu.memory_space<vmem>>, %arg9: memref<1x128xf32, #tpu.memory_space<vmem>>, %arg10: memref<16x128xf32, #tpu.memory_space<vmem>>) attributes {dimension_semantics = [#tpu.dimension_semantics<parallel>], iteration_bounds = array<i64: 2>, scalar_prefetch = 0 : i64, scratch_operands = 0 : i64, tpu.core_type = #tpu.core_type<tc>, window_params = [{transform_indices = @transform_0, window_bounds = array<i64: 12, 16, 168>}, {pipeline_mode = #tpu.pipeline_mode<synchronous>, transform_indices = @transform_1, window_bounds = array<i64: 168, 512>}, {pipeline_mode = #tpu.pipeline_mode<synchronous>, transform_indices = @transform_2, window_bounds = array<i64: 1, 128>}, {pipeline_mode = #tpu.pipeline_mode<synchronous>, transform_indices = @transform_3, window_bounds = array<i64: 768, 512>}, {pipeline_mode = #tpu.pipeline_mode<synchronous>, transform_indices = @transform_4, window_bounds = array<i64: 1, 128>}, {pipeline_mode = #tpu.pipeline_mode<synchronous>, transform_indices = @transform_5, window_bounds = array<i64: 512, 128>}, {pipeline_mode = #tpu.pipeline_mode<synchronous>, transform_indices = @transform_6, window_bounds = array<i64: 1, 128>}, {pipeline_mode = #tpu.pipeline_mode<synchronous>, transform_indices = @transform_7, window_bounds = array<i64: 128, 128>}, {pipeline_mode = #tpu.pipeline_mode<synchronous>, transform_indices = @transform_8, window_bounds = array<i64: 1, 128>}, {transform_indices = @transform_9, window_bounds = array<i64: 16, 128>}]} {
    %c0 = arith.constant 0 : index
    %c0_0 = arith.constant 0 : index
    %0 = vector.load %arg2[%c0, %c0_0] : memref<168x512xbf16, #tpu.memory_space<vmem>>, vector<168x512xbf16>
    %c0_1 = arith.constant 0 : index
    %c0_2 = arith.constant 0 : index
    %1 = vector.load %arg3[%c0_1, %c0_2] : memref<1x128xf32, #tpu.memory_space<vmem>>, vector<1x128xf32>
    %c0_3 = arith.constant 0 : index
    %c0_4 = arith.constant 0 : index
    %c0_5 = arith.constant 0 : index
    %2 = vector.load %arg1[%c0_3, %c0_4, %c0_5] : memref<12x16x168xbf16, #tpu.memory_space<vmem>>, vector<1x16x168xbf16>
    %3 = vector.shape_cast %2 : vector<1x16x168xbf16> to vector<16x168xbf16>
    %cst = arith.constant dense<0.000000e+00> : vector<16x512xf32>
    %4 = tpu.matmul %3, %0, %cst {dimension_numbers = #tpu.dot_dimension_numbers<[1], [0], [0], [1], [0, 0, 1, 1], [], []>} : vector<16x168xbf16>, vector<168x512xbf16>, vector<16x512xf32> -> vector<16x512xf32>
    %5 = vector.extract_strided_slice %4 {offsets = [0, 0], sizes = [16, 128], strides = [1, 1]} : vector<16x512xf32> to vector<16x128xf32>
    %6 = vector.extract_strided_slice %4 {offsets = [0, 128], sizes = [16, 128], strides = [1, 1]} : vector<16x512xf32> to vector<16x128xf32>
    %7 = arith.maximumf %5, %6 : vector<16x128xf32>
    %8 = vector.extract_strided_slice %4 {offsets = [0, 256], sizes = [16, 128], strides = [1, 1]} : vector<16x512xf32> to vector<16x128xf32>
    %9 = vector.extract_strided_slice %4 {offsets = [0, 384], sizes = [16, 128], strides = [1, 1]} : vector<16x512xf32> to vector<16x128xf32>
    %10 = arith.maximumf %8, %9 : vector<16x128xf32>
    %11 = arith.maximumf %7, %10 : vector<16x128xf32>
    %12 = vector.broadcast %1 : vector<1x128xf32> to vector<16x128xf32>
    %13 = arith.addf %11, %12 : vector<16x128xf32>
    %cst_6 = arith.constant 0.000000e+00 : f32
    %14 = vector.broadcast %cst_6 : f32 to vector<16x128xf32>
    %15 = arith.maximumf %13, %14 : vector<16x128xf32>
    %c1 = arith.constant 1 : index
    %c0_7 = arith.constant 0 : index
    %c0_8 = arith.constant 0 : index
    %16 = vector.load %arg1[%c1, %c0_7, %c0_8] : memref<12x16x168xbf16, #tpu.memory_space<vmem>>, vector<1x16x168xbf16>
    %17 = vector.shape_cast %16 : vector<1x16x168xbf16> to vector<16x168xbf16>
    %cst_9 = arith.constant dense<0.000000e+00> : vector<16x512xf32>
    %18 = tpu.matmul %17, %0, %cst_9 {dimension_numbers = #tpu.dot_dimension_numbers<[1], [0], [0], [1], [0, 0, 1, 1], [], []>} : vector<16x168xbf16>, vector<168x512xbf16>, vector<16x512xf32> -> vector<16x512xf32>
    %19 = vector.extract_strided_slice %18 {offsets = [0, 0], sizes = [16, 128], strides = [1, 1]} : vector<16x512xf32> to vector<16x128xf32>
    %20 = vector.extract_strided_slice %18 {offsets = [0, 128], sizes = [16, 128], strides = [1, 1]} : vector<16x512xf32> to vector<16x128xf32>
    %21 = arith.maximumf %19, %20 : vector<16x128xf32>
    %22 = vector.extract_strided_slice %18 {offsets = [0, 256], sizes = [16, 128], strides = [1, 1]} : vector<16x512xf32> to vector<16x128xf32>
    %23 = vector.extract_strided_slice %18 {offsets = [0, 384], sizes = [16, 128], strides = [1, 1]} : vector<16x512xf32> to vector<16x128xf32>
    %24 = arith.maximumf %22, %23 : vector<16x128xf32>
    %25 = arith.maximumf %21, %24 : vector<16x128xf32>
    %26 = vector.broadcast %1 : vector<1x128xf32> to vector<16x128xf32>
    %27 = arith.addf %25, %26 : vector<16x128xf32>
    %cst_10 = arith.constant 0.000000e+00 : f32
    %28 = vector.broadcast %cst_10 : f32 to vector<16x128xf32>
    %29 = arith.maximumf %27, %28 : vector<16x128xf32>
    %c2 = arith.constant 2 : index
    %c0_11 = arith.constant 0 : index
    %c0_12 = arith.constant 0 : index
    %30 = vector.load %arg1[%c2, %c0_11, %c0_12] : memref<12x16x168xbf16, #tpu.memory_space<vmem>>, vector<1x16x168xbf16>
    %31 = vector.shape_cast %30 : vector<1x16x168xbf16> to vector<16x168xbf16>
    %cst_13 = arith.constant dense<0.000000e+00> : vector<16x512xf32>
    %32 = tpu.matmul %31, %0, %cst_13 {dimension_numbers = #tpu.dot_dimension_numbers<[1], [0], [0], [1], [0, 0, 1, 1], [], []>} : vector<16x168xbf16>, vector<168x512xbf16>, vector<16x512xf32> -> vector<16x512xf32>
    %33 = vector.extract_strided_slice %32 {offsets = [0, 0], sizes = [16, 128], strides = [1, 1]} : vector<16x512xf32> to vector<16x128xf32>
    %34 = vector.extract_strided_slice %32 {offsets = [0, 128], sizes = [16, 128], strides = [1, 1]} : vector<16x512xf32> to vector<16x128xf32>
    %35 = arith.maximumf %33, %34 : vector<16x128xf32>
    %36 = vector.extract_strided_slice %32 {offsets = [0, 256], sizes = [16, 128], strides = [1, 1]} : vector<16x512xf32> to vector<16x128xf32>
    %37 = vector.extract_strided_slice %32 {offsets = [0, 384], sizes = [16, 128], strides = [1, 1]} : vector<16x512xf32> to vector<16x128xf32>
    %38 = arith.maximumf %36, %37 : vector<16x128xf32>
    %39 = arith.maximumf %35, %38 : vector<16x128xf32>
    %40 = vector.broadcast %1 : vector<1x128xf32> to vector<16x128xf32>
    %41 = arith.addf %39, %40 : vector<16x128xf32>
    %cst_14 = arith.constant 0.000000e+00 : f32
    %42 = vector.broadcast %cst_14 : f32 to vector<16x128xf32>
    %43 = arith.maximumf %41, %42 : vector<16x128xf32>
    %c3 = arith.constant 3 : index
    %c0_15 = arith.constant 0 : index
    %c0_16 = arith.constant 0 : index
    %44 = vector.load %arg1[%c3, %c0_15, %c0_16] : memref<12x16x168xbf16, #tpu.memory_space<vmem>>, vector<1x16x168xbf16>
    %45 = vector.shape_cast %44 : vector<1x16x168xbf16> to vector<16x168xbf16>
    %cst_17 = arith.constant dense<0.000000e+00> : vector<16x512xf32>
    %46 = tpu.matmul %45, %0, %cst_17 {dimension_numbers = #tpu.dot_dimension_numbers<[1], [0], [0], [1], [0, 0, 1, 1], [], []>} : vector<16x168xbf16>, vector<168x512xbf16>, vector<16x512xf32> -> vector<16x512xf32>
    %47 = vector.extract_strided_slice %46 {offsets = [0, 0], sizes = [16, 128], strides = [1, 1]} : vector<16x512xf32> to vector<16x128xf32>
    %48 = vector.extract_strided_slice %46 {offsets = [0, 128], sizes = [16, 128], strides = [1, 1]} : vector<16x512xf32> to vector<16x128xf32>
    %49 = arith.maximumf %47, %48 : vector<16x128xf32>
    %50 = vector.extract_strided_slice %46 {offsets = [0, 256], sizes = [16, 128], strides = [1, 1]} : vector<16x512xf32> to vector<16x128xf32>
    %51 = vector.extract_strided_slice %46 {offsets = [0, 384], sizes = [16, 128], strides = [1, 1]} : vector<16x512xf32> to vector<16x128xf32>
    %52 = arith.maximumf %50, %51 : vector<16x128xf32>
    %53 = arith.maximumf %49, %52 : vector<16x128xf32>
    %54 = vector.broadcast %1 : vector<1x128xf32> to vector<16x128xf32>
    %55 = arith.addf %53, %54 : vector<16x128xf32>
    %cst_18 = arith.constant 0.000000e+00 : f32
    %56 = vector.broadcast %cst_18 : f32 to vector<16x128xf32>
    %57 = arith.maximumf %55, %56 : vector<16x128xf32>
    %c4 = arith.constant 4 : index
    %c0_19 = arith.constant 0 : index
    %c0_20 = arith.constant 0 : index
    %58 = vector.load %arg1[%c4, %c0_19, %c0_20] : memref<12x16x168xbf16, #tpu.memory_space<vmem>>, vector<1x16x168xbf16>
    %59 = vector.shape_cast %58 : vector<1x16x168xbf16> to vector<16x168xbf16>
    %cst_21 = arith.constant dense<0.000000e+00> : vector<16x512xf32>
    %60 = tpu.matmul %59, %0, %cst_21 {dimension_numbers = #tpu.dot_dimension_numbers<[1], [0], [0], [1], [0, 0, 1, 1], [], []>} : vector<16x168xbf16>, vector<168x512xbf16>, vector<16x512xf32> -> vector<16x512xf32>
    %61 = vector.extract_strided_slice %60 {offsets = [0, 0], sizes = [16, 128], strides = [1, 1]} : vector<16x512xf32> to vector<16x128xf32>
    %62 = vector.extract_strided_slice %60 {offsets = [0, 128], sizes = [16, 128], strides = [1, 1]} : vector<16x512xf32> to vector<16x128xf32>
    %63 = arith.maximumf %61, %62 : vector<16x128xf32>
    %64 = vector.extract_strided_slice %60 {offsets = [0, 256], sizes = [16, 128], strides = [1, 1]} : vector<16x512xf32> to vector<16x128xf32>
    %65 = vector.extract_strided_slice %60 {offsets = [0, 384], sizes = [16, 128], strides = [1, 1]} : vector<16x512xf32> to vector<16x128xf32>
    %66 = arith.maximumf %64, %65 : vector<16x128xf32>
    %67 = arith.maximumf %63, %66 : vector<16x128xf32>
    %68 = vector.broadcast %1 : vector<1x128xf32> to vector<16x128xf32>
    %69 = arith.addf %67, %68 : vector<16x128xf32>
    %cst_22 = arith.constant 0.000000e+00 : f32
    %70 = vector.broadcast %cst_22 : f32 to vector<16x128xf32>
    %71 = arith.maximumf %69, %70 : vector<16x128xf32>
    %c5 = arith.constant 5 : index
    %c0_23 = arith.constant 0 : index
    %c0_24 = arith.constant 0 : index
    %72 = vector.load %arg1[%c5, %c0_23, %c0_24] : memref<12x16x168xbf16, #tpu.memory_space<vmem>>, vector<1x16x168xbf16>
    %73 = vector.shape_cast %72 : vector<1x16x168xbf16> to vector<16x168xbf16>
    %cst_25 = arith.constant dense<0.000000e+00> : vector<16x512xf32>
    %74 = tpu.matmul %73, %0, %cst_25 {dimension_numbers = #tpu.dot_dimension_numbers<[1], [0], [0], [1], [0, 0, 1, 1], [], []>} : vector<16x168xbf16>, vector<168x512xbf16>, vector<16x512xf32> -> vector<16x512xf32>
    %75 = vector.extract_strided_slice %74 {offsets = [0, 0], sizes = [16, 128], strides = [1, 1]} : vector<16x512xf32> to vector<16x128xf32>
    %76 = vector.extract_strided_slice %74 {offsets = [0, 128], sizes = [16, 128], strides = [1, 1]} : vector<16x512xf32> to vector<16x128xf32>
    %77 = arith.maximumf %75, %76 : vector<16x128xf32>
    %78 = vector.extract_strided_slice %74 {offsets = [0, 256], sizes = [16, 128], strides = [1, 1]} : vector<16x512xf32> to vector<16x128xf32>
    %79 = vector.extract_strided_slice %74 {offsets = [0, 384], sizes = [16, 128], strides = [1, 1]} : vector<16x512xf32> to vector<16x128xf32>
    %80 = arith.maximumf %78, %79 : vector<16x128xf32>
    %81 = arith.maximumf %77, %80 : vector<16x128xf32>
    %82 = vector.broadcast %1 : vector<1x128xf32> to vector<16x128xf32>
    %83 = arith.addf %81, %82 : vector<16x128xf32>
    %cst_26 = arith.constant 0.000000e+00 : f32
    %84 = vector.broadcast %cst_26 : f32 to vector<16x128xf32>
    %85 = arith.maximumf %83, %84 : vector<16x128xf32>
    %c6 = arith.constant 6 : index
    %c0_27 = arith.constant 0 : index
    %c0_28 = arith.constant 0 : index
    %86 = vector.load %arg1[%c6, %c0_27, %c0_28] : memref<12x16x168xbf16, #tpu.memory_space<vmem>>, vector<1x16x168xbf16>
    %87 = vector.shape_cast %86 : vector<1x16x168xbf16> to vector<16x168xbf16>
    %cst_29 = arith.constant dense<0.000000e+00> : vector<16x512xf32>
    %88 = tpu.matmul %87, %0, %cst_29 {dimension_numbers = #tpu.dot_dimension_numbers<[1], [0], [0], [1], [0, 0, 1, 1], [], []>} : vector<16x168xbf16>, vector<168x512xbf16>, vector<16x512xf32> -> vector<16x512xf32>
    %89 = vector.extract_strided_slice %88 {offsets = [0, 0], sizes = [16, 128], strides = [1, 1]} : vector<16x512xf32> to vector<16x128xf32>
    %90 = vector.extract_strided_slice %88 {offsets = [0, 128], sizes = [16, 128], strides = [1, 1]} : vector<16x512xf32> to vector<16x128xf32>
    %91 = arith.maximumf %89, %90 : vector<16x128xf32>
    %92 = vector.extract_strided_slice %88 {offsets = [0, 256], sizes = [16, 128], strides = [1, 1]} : vector<16x512xf32> to vector<16x128xf32>
    %93 = vector.extract_strided_slice %88 {offsets = [0, 384], sizes = [16, 128], strides = [1, 1]} : vector<16x512xf32> to vector<16x128xf32>
    %94 = arith.maximumf %92, %93 : vector<16x128xf32>
    %95 = arith.maximumf %91, %94 : vector<16x128xf32>
    %96 = vector.broadcast %1 : vector<1x128xf32> to vector<16x128xf32>
    %97 = arith.addf %95, %96 : vector<16x128xf32>
    %cst_30 = arith.constant 0.000000e+00 : f32
    %98 = vector.broadcast %cst_30 : f32 to vector<16x128xf32>
    %99 = arith.maximumf %97, %98 : vector<16x128xf32>
    %c7 = arith.constant 7 : index
    %c0_31 = arith.constant 0 : index
    %c0_32 = arith.constant 0 : index
    %100 = vector.load %arg1[%c7, %c0_31, %c0_32] : memref<12x16x168xbf16, #tpu.memory_space<vmem>>, vector<1x16x168xbf16>
    %101 = vector.shape_cast %100 : vector<1x16x168xbf16> to vector<16x168xbf16>
    %cst_33 = arith.constant dense<0.000000e+00> : vector<16x512xf32>
    %102 = tpu.matmul %101, %0, %cst_33 {dimension_numbers = #tpu.dot_dimension_numbers<[1], [0], [0], [1], [0, 0, 1, 1], [], []>} : vector<16x168xbf16>, vector<168x512xbf16>, vector<16x512xf32> -> vector<16x512xf32>
    %103 = vector.extract_strided_slice %102 {offsets = [0, 0], sizes = [16, 128], strides = [1, 1]} : vector<16x512xf32> to vector<16x128xf32>
    %104 = vector.extract_strided_slice %102 {offsets = [0, 128], sizes = [16, 128], strides = [1, 1]} : vector<16x512xf32> to vector<16x128xf32>
    %105 = arith.maximumf %103, %104 : vector<16x128xf32>
    %106 = vector.extract_strided_slice %102 {offsets = [0, 256], sizes = [16, 128], strides = [1, 1]} : vector<16x512xf32> to vector<16x128xf32>
    %107 = vector.extract_strided_slice %102 {offsets = [0, 384], sizes = [16, 128], strides = [1, 1]} : vector<16x512xf32> to vector<16x128xf32>
    %108 = arith.maximumf %106, %107 : vector<16x128xf32>
    %109 = arith.maximumf %105, %108 : vector<16x128xf32>
    %110 = vector.broadcast %1 : vector<1x128xf32> to vector<16x128xf32>
    %111 = arith.addf %109, %110 : vector<16x128xf32>
    %cst_34 = arith.constant 0.000000e+00 : f32
    %112 = vector.broadcast %cst_34 : f32 to vector<16x128xf32>
    %113 = arith.maximumf %111, %112 : vector<16x128xf32>
    %c8 = arith.constant 8 : index
    %c0_35 = arith.constant 0 : index
    %c0_36 = arith.constant 0 : index
    %114 = vector.load %arg1[%c8, %c0_35, %c0_36] : memref<12x16x168xbf16, #tpu.memory_space<vmem>>, vector<1x16x168xbf16>
    %115 = vector.shape_cast %114 : vector<1x16x168xbf16> to vector<16x168xbf16>
    %cst_37 = arith.constant dense<0.000000e+00> : vector<16x512xf32>
    %116 = tpu.matmul %115, %0, %cst_37 {dimension_numbers = #tpu.dot_dimension_numbers<[1], [0], [0], [1], [0, 0, 1, 1], [], []>} : vector<16x168xbf16>, vector<168x512xbf16>, vector<16x512xf32> -> vector<16x512xf32>
    %117 = vector.extract_strided_slice %116 {offsets = [0, 0], sizes = [16, 128], strides = [1, 1]} : vector<16x512xf32> to vector<16x128xf32>
    %118 = vector.extract_strided_slice %116 {offsets = [0, 128], sizes = [16, 128], strides = [1, 1]} : vector<16x512xf32> to vector<16x128xf32>
    %119 = arith.maximumf %117, %118 : vector<16x128xf32>
    %120 = vector.extract_strided_slice %116 {offsets = [0, 256], sizes = [16, 128], strides = [1, 1]} : vector<16x512xf32> to vector<16x128xf32>
    %121 = vector.extract_strided_slice %116 {offsets = [0, 384], sizes = [16, 128], strides = [1, 1]} : vector<16x512xf32> to vector<16x128xf32>
    %122 = arith.maximumf %120, %121 : vector<16x128xf32>
    %123 = arith.maximumf %119, %122 : vector<16x128xf32>
    %124 = vector.broadcast %1 : vector<1x128xf32> to vector<16x128xf32>
    %125 = arith.addf %123, %124 : vector<16x128xf32>
    %cst_38 = arith.constant 0.000000e+00 : f32
    %126 = vector.broadcast %cst_38 : f32 to vector<16x128xf32>
    %127 = arith.maximumf %125, %126 : vector<16x128xf32>
    %c9 = arith.constant 9 : index
    %c0_39 = arith.constant 0 : index
    %c0_40 = arith.constant 0 : index
    %128 = vector.load %arg1[%c9, %c0_39, %c0_40] : memref<12x16x168xbf16, #tpu.memory_space<vmem>>, vector<1x16x168xbf16>
    %129 = vector.shape_cast %128 : vector<1x16x168xbf16> to vector<16x168xbf16>
    %cst_41 = arith.constant dense<0.000000e+00> : vector<16x512xf32>
    %130 = tpu.matmul %129, %0, %cst_41 {dimension_numbers = #tpu.dot_dimension_numbers<[1], [0], [0], [1], [0, 0, 1, 1], [], []>} : vector<16x168xbf16>, vector<168x512xbf16>, vector<16x512xf32> -> vector<16x512xf32>
    %131 = vector.extract_strided_slice %130 {offsets = [0, 0], sizes = [16, 128], strides = [1, 1]} : vector<16x512xf32> to vector<16x128xf32>
    %132 = vector.extract_strided_slice %130 {offsets = [0, 128], sizes = [16, 128], strides = [1, 1]} : vector<16x512xf32> to vector<16x128xf32>
    %133 = arith.maximumf %131, %132 : vector<16x128xf32>
    %134 = vector.extract_strided_slice %130 {offsets = [0, 256], sizes = [16, 128], strides = [1, 1]} : vector<16x512xf32> to vector<16x128xf32>
    %135 = vector.extract_strided_slice %130 {offsets = [0, 384], sizes = [16, 128], strides = [1, 1]} : vector<16x512xf32> to vector<16x128xf32>
    %136 = arith.maximumf %134, %135 : vector<16x128xf32>
    %137 = arith.maximumf %133, %136 : vector<16x128xf32>
    %138 = vector.broadcast %1 : vector<1x128xf32> to vector<16x128xf32>
    %139 = arith.addf %137, %138 : vector<16x128xf32>
    %cst_42 = arith.constant 0.000000e+00 : f32
    %140 = vector.broadcast %cst_42 : f32 to vector<16x128xf32>
    %141 = arith.maximumf %139, %140 : vector<16x128xf32>
    %c10 = arith.constant 10 : index
    %c0_43 = arith.constant 0 : index
    %c0_44 = arith.constant 0 : index
    %142 = vector.load %arg1[%c10, %c0_43, %c0_44] : memref<12x16x168xbf16, #tpu.memory_space<vmem>>, vector<1x16x168xbf16>
    %143 = vector.shape_cast %142 : vector<1x16x168xbf16> to vector<16x168xbf16>
    %cst_45 = arith.constant dense<0.000000e+00> : vector<16x512xf32>
    %144 = tpu.matmul %143, %0, %cst_45 {dimension_numbers = #tpu.dot_dimension_numbers<[1], [0], [0], [1], [0, 0, 1, 1], [], []>} : vector<16x168xbf16>, vector<168x512xbf16>, vector<16x512xf32> -> vector<16x512xf32>
    %145 = vector.extract_strided_slice %144 {offsets = [0, 0], sizes = [16, 128], strides = [1, 1]} : vector<16x512xf32> to vector<16x128xf32>
    %146 = vector.extract_strided_slice %144 {offsets = [0, 128], sizes = [16, 128], strides = [1, 1]} : vector<16x512xf32> to vector<16x128xf32>
    %147 = arith.maximumf %145, %146 : vector<16x128xf32>
    %148 = vector.extract_strided_slice %144 {offsets = [0, 256], sizes = [16, 128], strides = [1, 1]} : vector<16x512xf32> to vector<16x128xf32>
    %149 = vector.extract_strided_slice %144 {offsets = [0, 384], sizes = [16, 128], strides = [1, 1]} : vector<16x512xf32> to vector<16x128xf32>
    %150 = arith.maximumf %148, %149 : vector<16x128xf32>
    %151 = arith.maximumf %147, %150 : vector<16x128xf32>
    %152 = vector.broadcast %1 : vector<1x128xf32> to vector<16x128xf32>
    %153 = arith.addf %151, %152 : vector<16x128xf32>
    %cst_46 = arith.constant 0.000000e+00 : f32
    %154 = vector.broadcast %cst_46 : f32 to vector<16x128xf32>
    %155 = arith.maximumf %153, %154 : vector<16x128xf32>
    %c11 = arith.constant 11 : index
    %c0_47 = arith.constant 0 : index
    %c0_48 = arith.constant 0 : index
    %156 = vector.load %arg1[%c11, %c0_47, %c0_48] : memref<12x16x168xbf16, #tpu.memory_space<vmem>>, vector<1x16x168xbf16>
    %157 = vector.shape_cast %156 : vector<1x16x168xbf16> to vector<16x168xbf16>
    %cst_49 = arith.constant dense<0.000000e+00> : vector<16x512xf32>
    %158 = tpu.matmul %157, %0, %cst_49 {dimension_numbers = #tpu.dot_dimension_numbers<[1], [0], [0], [1], [0, 0, 1, 1], [], []>} : vector<16x168xbf16>, vector<168x512xbf16>, vector<16x512xf32> -> vector<16x512xf32>
    %159 = vector.extract_strided_slice %158 {offsets = [0, 0], sizes = [16, 128], strides = [1, 1]} : vector<16x512xf32> to vector<16x128xf32>
    %160 = vector.extract_strided_slice %158 {offsets = [0, 128], sizes = [16, 128], strides = [1, 1]} : vector<16x512xf32> to vector<16x128xf32>
    %161 = arith.maximumf %159, %160 : vector<16x128xf32>
    %162 = vector.extract_strided_slice %158 {offsets = [0, 256], sizes = [16, 128], strides = [1, 1]} : vector<16x512xf32> to vector<16x128xf32>
    %163 = vector.extract_strided_slice %158 {offsets = [0, 384], sizes = [16, 128], strides = [1, 1]} : vector<16x512xf32> to vector<16x128xf32>
    %164 = arith.maximumf %162, %163 : vector<16x128xf32>
    %165 = arith.maximumf %161, %164 : vector<16x128xf32>
    %166 = vector.broadcast %1 : vector<1x128xf32> to vector<16x128xf32>
    %167 = arith.addf %165, %166 : vector<16x128xf32>
    %cst_50 = arith.constant 0.000000e+00 : f32
    %168 = vector.broadcast %cst_50 : f32 to vector<16x128xf32>
    %169 = arith.maximumf %167, %168 : vector<16x128xf32>
    %170 = tpu.concatenate %15, %29, %43, %57, %71, %85, %99, %113, %127, %141, %155, %169 in 1 : vector<16x128xf32>, vector<16x128xf32>, vector<16x128xf32>, vector<16x128xf32>, vector<16x128xf32>, vector<16x128xf32>, vector<16x128xf32>, vector<16x128xf32>, vector<16x128xf32>, vector<16x128xf32>, vector<16x128xf32>, vector<16x128xf32> -> vector<16x1536xf32>
    %171 = arith.truncf %170 : vector<16x1536xf32> to vector<16x1536xbf16>
    %c0_51 = arith.constant 0 : index
    %c0_52 = arith.constant 0 : index
    %172 = vector.load %arg4[%c0_51, %c0_52] : memref<768x512xbf16, #tpu.memory_space<vmem>>, vector<768x512xbf16>
    %c0_53 = arith.constant 0 : index
    %c0_54 = arith.constant 0 : index
    %173 = vector.load %arg5[%c0_53, %c0_54] : memref<1x128xf32, #tpu.memory_space<vmem>>, vector<1x128xf32>
    %174 = vector.extract_strided_slice %171 {offsets = [0, 0], sizes = [16, 768], strides = [1, 1]} : vector<16x1536xbf16> to vector<16x768xbf16>
    %cst_55 = arith.constant dense<0.000000e+00> : vector<16x512xf32>
    %175 = tpu.matmul %174, %172, %cst_55 {dimension_numbers = #tpu.dot_dimension_numbers<[1], [0], [0], [1], [0, 0, 1, 1], [], []>} : vector<16x768xbf16>, vector<768x512xbf16>, vector<16x512xf32> -> vector<16x512xf32>
    %176 = vector.extract_strided_slice %175 {offsets = [0, 0], sizes = [16, 128], strides = [1, 1]} : vector<16x512xf32> to vector<16x128xf32>
    %177 = vector.extract_strided_slice %175 {offsets = [0, 128], sizes = [16, 128], strides = [1, 1]} : vector<16x512xf32> to vector<16x128xf32>
    %178 = arith.maximumf %176, %177 : vector<16x128xf32>
    %179 = vector.extract_strided_slice %175 {offsets = [0, 256], sizes = [16, 128], strides = [1, 1]} : vector<16x512xf32> to vector<16x128xf32>
    %180 = vector.extract_strided_slice %175 {offsets = [0, 384], sizes = [16, 128], strides = [1, 1]} : vector<16x512xf32> to vector<16x128xf32>
    %181 = arith.maximumf %179, %180 : vector<16x128xf32>
    %182 = arith.maximumf %178, %181 : vector<16x128xf32>
    %183 = vector.broadcast %173 : vector<1x128xf32> to vector<16x128xf32>
    %184 = arith.addf %182, %183 : vector<16x128xf32>
    %cst_56 = arith.constant 0.000000e+00 : f32
    %185 = vector.broadcast %cst_56 : f32 to vector<16x128xf32>
    %186 = arith.maximumf %184, %185 : vector<16x128xf32>
    %187 = vector.extract_strided_slice %171 {offsets = [0, 256], sizes = [16, 768], strides = [1, 1]} : vector<16x1536xbf16> to vector<16x768xbf16>
    %cst_57 = arith.constant dense<0.000000e+00> : vector<16x512xf32>
    %188 = tpu.matmul %187, %172, %cst_57 {dimension_numbers = #tpu.dot_dimension_numbers<[1], [0], [0], [1], [0, 0, 1, 1], [], []>} : vector<16x768xbf16>, vector<768x512xbf16>, vector<16x512xf32> -> vector<16x512xf32>
    %189 = vector.extract_strided_slice %188 {offsets = [0, 0], sizes = [16, 128], strides = [1, 1]} : vector<16x512xf32> to vector<16x128xf32>
    %190 = vector.extract_strided_slice %188 {offsets = [0, 128], sizes = [16, 128], strides = [1, 1]} : vector<16x512xf32> to vector<16x128xf32>
    %191 = arith.maximumf %189, %190 : vector<16x128xf32>
    %192 = vector.extract_strided_slice %188 {offsets = [0, 256], sizes = [16, 128], strides = [1, 1]} : vector<16x512xf32> to vector<16x128xf32>
    %193 = vector.extract_strided_slice %188 {offsets = [0, 384], sizes = [16, 128], strides = [1, 1]} : vector<16x512xf32> to vector<16x128xf32>
    %194 = arith.maximumf %192, %193 : vector<16x128xf32>
    %195 = arith.maximumf %191, %194 : vector<16x128xf32>
    %196 = vector.broadcast %173 : vector<1x128xf32> to vector<16x128xf32>
    %197 = arith.addf %195, %196 : vector<16x128xf32>
    %cst_58 = arith.constant 0.000000e+00 : f32
    %198 = vector.broadcast %cst_58 : f32 to vector<16x128xf32>
    %199 = arith.maximumf %197, %198 : vector<16x128xf32>
    %200 = vector.extract_strided_slice %171 {offsets = [0, 512], sizes = [16, 768], strides = [1, 1]} : vector<16x1536xbf16> to vector<16x768xbf16>
    %cst_59 = arith.constant dense<0.000000e+00> : vector<16x512xf32>
    %201 = tpu.matmul %200, %172, %cst_59 {dimension_numbers = #tpu.dot_dimension_numbers<[1], [0], [0], [1], [0, 0, 1, 1], [], []>} : vector<16x768xbf16>, vector<768x512xbf16>, vector<16x512xf32> -> vector<16x512xf32>
    %202 = vector.extract_strided_slice %201 {offsets = [0, 0], sizes = [16, 128], strides = [1, 1]} : vector<16x512xf32> to vector<16x128xf32>
    %203 = vector.extract_strided_slice %201 {offsets = [0, 128], sizes = [16, 128], strides = [1, 1]} : vector<16x512xf32> to vector<16x128xf32>
    %204 = arith.maximumf %202, %203 : vector<16x128xf32>
    %205 = vector.extract_strided_slice %201 {offsets = [0, 256], sizes = [16, 128], strides = [1, 1]} : vector<16x512xf32> to vector<16x128xf32>
    %206 = vector.extract_strided_slice %201 {offsets = [0, 384], sizes = [16, 128], strides = [1, 1]} : vector<16x512xf32> to vector<16x128xf32>
    %207 = arith.maximumf %205, %206 : vector<16x128xf32>
    %208 = arith.maximumf %204, %207 : vector<16x128xf32>
    %209 = vector.broadcast %173 : vector<1x128xf32> to vector<16x128xf32>
    %210 = arith.addf %208, %209 : vector<16x128xf32>
    %cst_60 = arith.constant 0.000000e+00 : f32
    %211 = vector.broadcast %cst_60 : f32 to vector<16x128xf32>
    %212 = arith.maximumf %210, %211 : vector<16x128xf32>
    %213 = vector.extract_strided_slice %171 {offsets = [0, 768], sizes = [16, 768], strides = [1, 1]} : vector<16x1536xbf16> to vector<16x768xbf16>
    %cst_61 = arith.constant dense<0.000000e+00> : vector<16x512xf32>
    %214 = tpu.matmul %213, %172, %cst_61 {dimension_numbers = #tpu.dot_dimension_numbers<[1], [0], [0], [1], [0, 0, 1, 1], [], []>} : vector<16x768xbf16>, vector<768x512xbf16>, vector<16x512xf32> -> vector<16x512xf32>
    %215 = vector.extract_strided_slice %214 {offsets = [0, 0], sizes = [16, 128], strides = [1, 1]} : vector<16x512xf32> to vector<16x128xf32>
    %216 = vector.extract_strided_slice %214 {offsets = [0, 128], sizes = [16, 128], strides = [1, 1]} : vector<16x512xf32> to vector<16x128xf32>
    %217 = arith.maximumf %215, %216 : vector<16x128xf32>
    %218 = vector.extract_strided_slice %214 {offsets = [0, 256], sizes = [16, 128], strides = [1, 1]} : vector<16x512xf32> to vector<16x128xf32>
    %219 = vector.extract_strided_slice %214 {offsets = [0, 384], sizes = [16, 128], strides = [1, 1]} : vector<16x512xf32> to vector<16x128xf32>
    %220 = arith.maximumf %218, %219 : vector<16x128xf32>
    %221 = arith.maximumf %217, %220 : vector<16x128xf32>
    %222 = vector.broadcast %173 : vector<1x128xf32> to vector<16x128xf32>
    %223 = arith.addf %221, %222 : vector<16x128xf32>
    %cst_62 = arith.constant 0.000000e+00 : f32
    %224 = vector.broadcast %cst_62 : f32 to vector<16x128xf32>
    %225 = arith.maximumf %223, %224 : vector<16x128xf32>
    %226 = tpu.concatenate %186, %199, %212, %225 in 1 : vector<16x128xf32>, vector<16x128xf32>, vector<16x128xf32>, vector<16x128xf32> -> vector<16x512xf32>
    %227 = arith.truncf %226 : vector<16x512xf32> to vector<16x512xbf16>
    %c0_63 = arith.constant 0 : index
    %c0_64 = arith.constant 0 : index
    %228 = vector.load %arg6[%c0_63, %c0_64] : memref<512x128xbf16, #tpu.memory_space<vmem>>, vector<512x128xbf16>
    %cst_65 = arith.constant dense<0.000000e+00> : vector<16x128xf32>
    %229 = tpu.matmul %227, %228, %cst_65 {dimension_numbers = #tpu.dot_dimension_numbers<[1], [0], [0], [1], [0, 0, 1, 1], [], []>} : vector<16x512xbf16>, vector<512x128xbf16>, vector<16x128xf32> -> vector<16x128xf32>
    %c0_66 = arith.constant 0 : index
    %c0_67 = arith.constant 0 : index
    %230 = vector.load %arg7[%c0_66, %c0_67] : memref<1x128xf32, #tpu.memory_space<vmem>>, vector<1x128xf32>
    %231 = vector.broadcast %230 : vector<1x128xf32> to vector<16x128xf32>
    %232 = arith.addf %229, %231 : vector<16x128xf32>
    %cst_68 = arith.constant 0.000000e+00 : f32
    %233 = vector.broadcast %cst_68 : f32 to vector<16x128xf32>
    %234 = arith.maximumf %232, %233 : vector<16x128xf32>
    %235 = arith.truncf %234 : vector<16x128xf32> to vector<16x128xbf16>
    %c0_69 = arith.constant 0 : index
    %c0_70 = arith.constant 0 : index
    %236 = vector.load %arg8[%c0_69, %c0_70] : memref<128x128xbf16, #tpu.memory_space<vmem>>, vector<128x128xbf16>
    %cst_71 = arith.constant dense<0.000000e+00> : vector<16x128xf32>
    %237 = tpu.matmul %235, %236, %cst_71 {dimension_numbers = #tpu.dot_dimension_numbers<[1], [0], [0], [1], [0, 0, 1, 1], [], []>} : vector<16x128xbf16>, vector<128x128xbf16>, vector<16x128xf32> -> vector<16x128xf32>
    %c0_72 = arith.constant 0 : index
    %c0_73 = arith.constant 0 : index
    %238 = vector.load %arg9[%c0_72, %c0_73] : memref<1x128xf32, #tpu.memory_space<vmem>>, vector<1x128xf32>
    %239 = vector.broadcast %238 : vector<1x128xf32> to vector<16x128xf32>
    %240 = arith.addf %237, %239 : vector<16x128xf32>
    %241 = tpu.iota {dimensions = array<i32: 1>} : vector<16x128xi32>
    %c10_i32 = arith.constant 10 : i32
    %242 = vector.broadcast %c10_i32 : i32 to vector<16x128xi32>
    %243 = arith.cmpi slt, %241, %242 : vector<16x128xi32>
    %cst_74 = arith.constant -1.000000e+30 : f32
    %244 = vector.broadcast %cst_74 : f32 to vector<16x128xf32>
    %245 = arith.select %243, %240, %244 : vector<16x128xi1>, vector<16x128xf32>
    %cst_75 = arith.constant dense<0xFF800000> : vector<16xf32>
    %246 = vector.multi_reduction <maximumf>, %245, %cst_75 [1] : vector<16x128xf32> to vector<16xf32>
    %247 = vector.shape_cast %246 : vector<16xf32> to vector<16x1xf32>
    %248 = vector.broadcast %247 : vector<16x1xf32> to vector<16x128xf32>
    %249 = arith.subf %245, %248 : vector<16x128xf32>
    %250 = math.exp %249 : vector<16x128xf32>
    %cst_76 = arith.constant 0.000000e+00 : f32
    %251 = vector.broadcast %cst_76 : f32 to vector<16x128xf32>
    %252 = arith.select %243, %250, %251 : vector<16x128xi1>, vector<16x128xf32>
    %cst_77 = arith.constant dense<0.000000e+00> : vector<16xf32>
    %253 = vector.multi_reduction <add>, %252, %cst_77 [1] : vector<16x128xf32> to vector<16xf32>
    %254 = vector.shape_cast %253 : vector<16xf32> to vector<16x1xf32>
    %255 = math.log %254 : vector<16x1xf32>
    %256 = vector.broadcast %247 : vector<16x1xf32> to vector<16x128xf32>
    %257 = arith.subf %245, %256 : vector<16x128xf32>
    %258 = vector.broadcast %255 : vector<16x1xf32> to vector<16x128xf32>
    %259 = arith.subf %257, %258 : vector<16x128xf32>
    %cst_78 = arith.constant 0.000000e+00 : f32
    %260 = vector.broadcast %cst_78 : f32 to vector<16x128xf32>
    %261 = arith.select %243, %259, %260 : vector<16x128xi1>, vector<16x128xf32>
    %c0_79 = arith.constant 0 : index
    %c0_80 = arith.constant 0 : index
    %262 = vector.load %arg10[%c0_79, %c0_80] : memref<16x128xf32, #tpu.memory_space<vmem>>, vector<16x128xf32>
    tpu.vector_store %arg10[%c0_79, %c0_80], %261 {strides = array<i32>} : memref<16x128xf32, #tpu.memory_space<vmem>>, vector<16x128xf32>,
    return
  }
  func.func @transform_0(%arg0: i32) -> (i32, i32, i32) {
    %c0_i32 = arith.constant 0 : i32
    %c0_i32_0 = arith.constant 0 : i32
    %c0_i32_1 = arith.constant 0 : i32
    return %c0_i32, %arg0, %c0_i32_0 : i32, i32, i32
  }
  func.func @transform_1(%arg0: i32) -> (i32, i32) {
    %c0_i32 = arith.constant 0 : i32
    %c0_i32_0 = arith.constant 0 : i32
    %c0_i32_1 = arith.constant 0 : i32
    return %c0_i32, %c0_i32_0 : i32, i32
  }
  func.func @transform_2(%arg0: i32) -> (i32, i32) {
    %c0_i32 = arith.constant 0 : i32
    %c0_i32_0 = arith.constant 0 : i32
    %c0_i32_1 = arith.constant 0 : i32
    return %c0_i32, %c0_i32_0 : i32, i32
  }
  func.func @transform_3(%arg0: i32) -> (i32, i32) {
    %c0_i32 = arith.constant 0 : i32
    %c0_i32_0 = arith.constant 0 : i32
    %c0_i32_1 = arith.constant 0 : i32
    return %c0_i32, %c0_i32_0 : i32, i32
  }
  func.func @transform_4(%arg0: i32) -> (i32, i32) {
    %c0_i32 = arith.constant 0 : i32
    %c0_i32_0 = arith.constant 0 : i32
    %c0_i32_1 = arith.constant 0 : i32
    return %c0_i32, %c0_i32_0 : i32, i32
  }
  func.func @transform_5(%arg0: i32) -> (i32, i32) {
    %c0_i32 = arith.constant 0 : i32
    %c0_i32_0 = arith.constant 0 : i32
    %c0_i32_1 = arith.constant 0 : i32
    return %c0_i32, %c0_i32_0 : i32, i32
  }
  func.func @transform_6(%arg0: i32) -> (i32, i32) {
    %c0_i32 = arith.constant 0 : i32
    %c0_i32_0 = arith.constant 0 : i32
    %c0_i32_1 = arith.constant 0 : i32
    return %c0_i32, %c0_i32_0 : i32, i32
  }
  func.func @transform_7(%arg0: i32) -> (i32, i32) {
    %c0_i32 = arith.constant 0 : i32
    %c0_i32_0 = arith.constant 0 : i32
    %c0_i32_1 = arith.constant 0 : i32
    return %c0_i32, %c0_i32_0 : i32, i32
  }
  func.func @transform_8(%arg0: i32) -> (i32, i32) {
    %c0_i32 = arith.constant 0 : i32
    %c0_i32_0 = arith.constant 0 : i32
    %c0_i32_1 = arith.constant 0 : i32
    return %c0_i32, %c0_i32_0 : i32, i32
  }
  func.func @transform_9(%arg0: i32) -> (i32, i32) {
    %c0_i32 = arith.constant 0 : i32
    %c0_i32_0 = arith.constant 0 : i32
    return %arg0, %c0_i32 : i32, i32
  }
}

</mosaic_0001>

<llo_original>
// kernel: net_forward.1
$region0: #{net_forward.1}
  #allocation0 [shape = 'u32[]', space=smem, size = 0x4, offset = 0x4, fixed_abs, tag = 'smem constant byte address 0x4 - core index']
  #allocation1 [shape = 'u32[144,128]{1,0:T(1,128)}', space=vmem, size = 0x12000, scoped, tag = 'internal scratch']
  %s0 = inlined_call_operand.vmem [shape: bf16[12,32,168], index: 0, kind: input, shape index: {}]
  %s1 = inlined_call_operand.vmem [shape: bf16[168,512], index: 1, kind: input, shape index: {}]
  %s2 = inlined_call_operand.vmem [shape: f32[1,128], index: 2, kind: input, shape index: {}]
  %s3 = inlined_call_operand.vmem [shape: bf16[768,512], index: 3, kind: input, shape index: {}]
  %s4 = inlined_call_operand.vmem [shape: f32[1,128], index: 4, kind: input, shape index: {}]
  %s5 = inlined_call_operand.vmem [shape: bf16[512,128], index: 5, kind: input, shape index: {}]
  %s6 = inlined_call_operand.vmem [shape: f32[1,128], index: 6, kind: input, shape index: {}]
  %s7 = inlined_call_operand.vmem [shape: bf16[128,128], index: 7, kind: input, shape index: {}]
  %s8 = inlined_call_operand.vmem [shape: f32[1,128], index: 8, kind: input, shape index: {}]
  %s9 = inlined_call_operand.vmem [shape: f32[32,128], index: 9, kind: output, shape index: {}]
  %s10 = sld [smem:[#allocation0]]
  $region107: #{net_forward.1} parent=0
    _
  %s12 = ssub.s32 1, %s10
  %s13 = scalar_select 0, %s12, %s10
  $region1: #{net_forward.1} parent=0
    #allocation2 [shape = 'u8[196608]{0}', space=vmem, size = 0x30000, scoped, tag = 'input window, operand 0']
    loop: start=0, step=1, limit=4
    $region2: #{net_forward.1} parent=1 // loop_pre_header
      _
    $region3: #{net_forward.1} parent=1 // loop_header
      %s15 = sphi 0, %s19
      %p16 = scmp.ge.s32.totalorder %s15, 4
      %s25 = sphi 0, %s27
      %s28 = sphi 0, %s25
      %s29 = sphi 0, %s28
      %s45 = sphi 0, %s29
      %s49 = sphi 0, %s49
      %s51 = sphi 0, %s49
      %s52 = sphi 0, %s51
      %s66 = sphi 0, %s52
      %s70 = sphi 0, %s70
      %s72 = sphi 0, %s70
      %s73 = sphi 0, %s72
      %s87 = sphi 0, %s73
      %s91 = sphi 0, %s91
      %s93 = sphi 0, %s91
      %s94 = sphi 0, %s93
      %s108 = sphi 0, %s94
      %s112 = sphi 0, %s112
      %s114 = sphi 0, %s112
      %s115 = sphi 0, %s114
      %s129 = sphi 0, %s115
      %s133 = sphi 0, %s133
      %s135 = sphi 0, %s133
      %s136 = sphi 0, %s135
      %s150 = sphi 0, %s136
      %s154 = sphi 0, %s154
      %s156 = sphi 0, %s154
      %s157 = sphi 0, %s156
      %s171 = sphi 0, %s157
      %s175 = sphi 0, %s175
      %s177 = sphi 0, %s175
      %s178 = sphi 0, %s177
      %s192 = sphi 0, %s178
      %s196 = sphi 0, %s196
      %s198 = sphi 0, %s196
      %s199 = sphi 0, %s198
      %s213 = sphi 0, %s199
      %s219 = sphi 0, %s221
      %s222 = sphi 0, %s219
      %s223 = sphi 0, %s222
      %s239 = sphi 0, %s223
    $region4: #{net_forward.1} parent=1 // loop_header_branch
      %18 = sbr.rel (%p16) target = $region8
    $region5: #{net_forward.1} parent=1 // loop_body
      %s20 = ssub.s32 %s15, 1
      %s21 = ssub.s32 %s15, 2
      %s22 = sadd.s32 %s15, 1
      %s23 = ssub.s32 %s15, %s22
      %p24 = scmp.eq.s32.totalorder %s23, 0
      %s26 = sadd.s32 %s25, 1
      %s27 = scalar_select %p24, %s25, %s26
      %p30 = pneg %p24
      %p31 = scmp.eq.s32.totalorder %s15, 1
      %p32 = por %p30, %p31
      %p33 = scmp.ne.s32.totalorder %s25, %s28
      %p34 = scmp.eq.s32.totalorder %s15, 0
      %p35 = por %p33, %p34
      %p36 = scmp.ne.s32.totalorder %s25, %s28
      %p37 = scmp.eq.s32.totalorder %s20, 1
      %p38 = por %p36, %p37
      %p39 = scmp.ne.s32.totalorder %s28, %s29
      %p40 = scmp.eq.s32.totalorder %s20, 0
      %p41 = por %p39, %p40
      %p42 = scmp.ne.s32.totalorder %s28, %s29
      %p43 = scmp.eq.s32.totalorder %s21, 1
      %p44 = por %p42, %p43
      %p46 = scmp.ne.s32.totalorder %s29, %s45
      %p47 = scmp.eq.s32.totalorder %s21, 0
      %p48 = por %p46, %p47
      %s50 = sadd.s32 %s49, 1
      %p53 = scmp.eq.s32.totalorder %s15, 1
      %p54 = scmp.ne.s32.totalorder %s49, %s51
      %p55 = scmp.eq.s32.totalorder %s15, 0
      %p56 = por %p54, %p55
      %p57 = scmp.ne.s32.totalorder %s49, %s51
      %p58 = scmp.eq.s32.totalorder %s20, 1
      %p59 = por %p57, %p58
      %p60 = scmp.ne.s32.totalorder %s51, %s52
      %p61 = scmp.eq.s32.totalorder %s20, 0
      %p62 = por %p60, %p61
      %p63 = scmp.ne.s32.totalorder %s51, %s52
      %p64 = scmp.eq.s32.totalorder %s21, 1
      %p65 = por %p63, %p64
      %p67 = scmp.ne.s32.totalorder %s52, %s66
      %p68 = scmp.eq.s32.totalorder %s21, 0
      %p69 = por %p67, %p68
      %s71 = sadd.s32 %s70, 1
      %p74 = scmp.eq.s32.totalorder %s15, 1
      %p75 = scmp.ne.s32.totalorder %s70, %s72
      %p76 = scmp.eq.s32.totalorder %s15, 0
      %p77 = por %p75, %p76
      %p78 = scmp.ne.s32.totalorder %s70, %s72
      %p79 = scmp.eq.s32.totalorder %s20, 1
      %p80 = por %p78, %p79
      %p81 = scmp.ne.s32.totalorder %s72, %s73
      %p82 = scmp.eq.s32.totalorder %s20, 0
      %p83 = por %p81, %p82
      %p84 = scmp.ne.s32.totalorder %s72, %s73
      %p85 = scmp.eq.s32.totalorder %s21, 1
      %p86 = por %p84, %p85
      %p88 = scmp.ne.s32.totalorder %s73, %s87
      %p89 = scmp.eq.s32.totalorder %s21, 0
      %p90 = por %p88, %p89
      %s92 = sadd.s32 %s91, 1
      %p95 = scmp.eq.s32.totalorder %s15, 1
      %p96 = scmp.ne.s32.totalorder %s91, %s93
      %p97 = scmp.eq.s32.totalorder %s15, 0
      %p98 = por %p96, %p97
      %p99 = scmp.ne.s32.totalorder %s91, %s93
      %p100 = scmp.eq.s32.totalorder %s20, 1
      %p101 = por %p99, %p100
      %p102 = scmp.ne.s32.totalorder %s93, %s94
      %p103 = scmp.eq.s32.totalorder %s20, 0
      %p104 = por %p102, %p103
      %p105 = scmp.ne.s32.totalorder %s93, %s94
      %p106 = scmp.eq.s32.totalorder %s21, 1
      %p107 = por %p105, %p106
      %p109 = scmp.ne.s32.totalorder %s94, %s108
      %p110 = scmp.eq.s32.totalorder %s21, 0
      %p111 = por %p109, %p110
      %s113 = sadd.s32 %s112, 1
      %p116 = scmp.eq.s32.totalorder %s15, 1
      %p117 = scmp.ne.s32.totalorder %s112, %s114
      %p118 = scmp.eq.s32.totalorder %s15, 0
      %p119 = por %p117, %p118
      %p120 = scmp.ne.s32.totalorder %s112, %s114
      %p121 = scmp.eq.s32.totalorder %s20, 1
      %p122 = por %p120, %p121
      %p123 = scmp.ne.s32.totalorder %s114, %s115
      %p124 = scmp.eq.s32.totalorder %s20, 0
      %p125 = por %p123, %p124
      %p126 = scmp.ne.s32.totalorder %s114, %s115
      %p127 = scmp.eq.s32.totalorder %s21, 1
      %p128 = por %p126, %p127
      %p130 = scmp.ne.s32.totalorder %s115, %s129
      %p131 = scmp.eq.s32.totalorder %s21, 0
      %p132 = por %p130, %p131
      %s134 = sadd.s32 %s133, 1
      %p137 = scmp.eq.s32.totalorder %s15, 1
      %p138 = scmp.ne.s32.totalorder %s133, %s135
      %p139 = scmp.eq.s32.totalorder %s15, 0
      %p140 = por %p138, %p139
      %p141 = scmp.ne.s32.totalorder %s133, %s135
      %p142 = scmp.eq.s32.totalorder %s20, 1
      %p143 = por %p141, %p142
      %p144 = scmp.ne.s32.totalorder %s135, %s136
      %p145 = scmp.eq.s32.totalorder %s20, 0
      %p146 = por %p144, %p145
      %p147 = scmp.ne.s32.totalorder %s135, %s136
      %p148 = scmp.eq.s32.totalorder %s21, 1
      %p149 = por %p147, %p148
      %p151 = scmp.ne.s32.totalorder %s136, %s150
      %p152 = scmp.eq.s32.totalorder %s21, 0
      %p153 = por %p151, %p152
      %s155 = sadd.s32 %s154, 1
      %p158 = scmp.eq.s32.totalorder %s15, 1
      %p159 = scmp.ne.s32.totalorder %s154, %s156
      %p160 = scmp.eq.s32.totalorder %s15, 0
      %p161 = por %p159, %p160
      %p162 = scmp.ne.s32.totalorder %s154, %s156
      %p163 = scmp.eq.s32.totalorder %s20, 1
      %p164 = por %p162, %p163
      %p165 = scmp.ne.s32.totalorder %s156, %s157
      %p166 = scmp.eq.s32.totalorder %s20, 0
      %p167 = por %p165, %p166
      %p168 = scmp.ne.s32.totalorder %s156, %s157
      %p169 = scmp.eq.s32.totalorder %s21, 1
      %p170 = por %p168, %p169
      %p172 = scmp.ne.s32.totalorder %s157, %s171
      %p173 = scmp.eq.s32.totalorder %s21, 0
      %p174 = por %p172, %p173
      %s176 = sadd.s32 %s175, 1
      %p179 = scmp.eq.s32.totalorder %s15, 1
      %p180 = scmp.ne.s32.totalorder %s175, %s177
      %p181 = scmp.eq.s32.totalorder %s15, 0
      %p182 = por %p180, %p181
      %p183 = scmp.ne.s32.totalorder %s175, %s177
      %p184 = scmp.eq.s32.totalorder %s20, 1
      %p185 = por %p183, %p184
      %p186 = scmp.ne.s32.totalorder %s177, %s178
      %p187 = scmp.eq.s32.totalorder %s20, 0
      %p188 = por %p186, %p187
      %p189 = scmp.ne.s32.totalorder %s177, %s178
      %p190 = scmp.eq.s32.totalorder %s21, 1
      %p191 = por %p189, %p190
      %p193 = scmp.ne.s32.totalorder %s178, %s192
      %p194 = scmp.eq.s32.totalorder %s21, 0
      %p195 = por %p193, %p194
      %s197 = sadd.s32 %s196, 1
      %p200 = scmp.eq.s32.totalorder %s15, 1
      %p201 = scmp.ne.s32.totalorder %s196, %s198
      %p202 = scmp.eq.s32.totalorder %s15, 0
      %p203 = por %p201, %p202
      %p204 = scmp.ne.s32.totalorder %s196, %s198
      %p205 = scmp.eq.s32.totalorder %s20, 1
      %p206 = por %p204, %p205
      %p207 = scmp.ne.s32.totalorder %s198, %s199
      %p208 = scmp.eq.s32.totalorder %s20, 0
      %p209 = por %p207, %p208
      %p210 = scmp.ne.s32.totalorder %s198, %s199
      %p211 = scmp.eq.s32.totalorder %s21, 1
      %p212 = por %p210, %p211
      %p214 = scmp.ne.s32.totalorder %s199, %s213
      %p215 = scmp.eq.s32.totalorder %s21, 0
      %p216 = por %p214, %p215
      %s217 = ssub.s32 %s15, %s22
      %p218 = scmp.eq.s32.totalorder %s217, 0
      %s220 = sadd.s32 %s219, 1
      %s221 = scalar_select %p218, %s219, %s220
      %p224 = pneg %p218
      %p225 = scmp.eq.s32.totalorder %s15, 1
      %p226 = por %p224, %p225
      %p227 = scmp.ne.s32.totalorder %s219, %s222
      %p228 = scmp.eq.s32.totalorder %s15, 0
      %p229 = por %p227, %p228
      %p230 = scmp.ne.s32.totalorder %s219, %s222
      %p231 = scmp.eq.s32.totalorder %s20, 1
      %p232 = por %p230, %p231
      %p233 = scmp.ne.s32.totalorder %s222, %s223
      %p234 = scmp.eq.s32.totalorder %s20, 0
      %p235 = por %p233, %p234
      %p236 = scmp.ne.s32.totalorder %s222, %s223
      %p237 = scmp.eq.s32.totalorder %s21, 1
      %p238 = por %p236, %p237
      %p240 = scmp.ne.s32.totalorder %s223, %s239
      %p241 = scmp.eq.s32.totalorder %s21, 0
      %p242 = por %p240, %p241
      %p243 = scmp.le.s32.totalorder 1, %s15
      %p244 = scmp.lt.s32.totalorder %s15, 3
      %p245 = pnand %p243, %p244
      %p246 = pneg %p245
      // Predicated region
      $region9: #{net_forward.1} parent=5 // pred_check
        _
      $region10: #{net_forward.1} parent=5 // pred_check_branch
        %248 = sbr.rel (%p245) target = $region12
      $region11: #{net_forward.1} parent=5 // pred_region
        %s249 = ssub.s32 %s15, 1
        // Predicated region
        $region13: #{net_forward.1} parent=11 // pred_check
          %p250 = pneg %p62
        $region14: #{net_forward.1} parent=11 // pred_check_branch
          %252 = sbr.rel (%p250) target = $region16
        $region15: #{net_forward.1} parent=11 // pred_region
          _
        $region16: #{net_forward.1} parent=11 // pred_fallthru
          _
        // Predicated region
        $region17: #{net_forward.1} parent=11 // pred_check
          %p253 = pneg %p83
        $region18: #{net_forward.1} parent=11 // pred_check_branch
          %255 = sbr.rel (%p253) target = $region20
        $region19: #{net_forward.1} parent=11 // pred_region
          _
        $region20: #{net_forward.1} parent=11 // pred_fallthru
          _
        // Predicated region
        $region21: #{net_forward.1} parent=11 // pred_check
          %p256 = pneg %p104
        $region22: #{net_forward.1} parent=11 // pred_check_branch
          %258 = sbr.rel (%p256) target = $region24
        $region23: #{net_forward.1} parent=11 // pred_region
          _
        $region24: #{net_forward.1} parent=11 // pred_fallthru
          _
        // Predicated region
        $region25: #{net_forward.1} parent=11 // pred_check
          %p259 = pneg %p125
        $region26: #{net_forward.1} parent=11 // pred_check_branch
          %261 = sbr.rel (%p259) target = $region28
        $region27: #{net_forward.1} parent=11 // pred_region
          _
        $region28: #{net_forward.1} parent=11 // pred_fallthru
          _
        // Predicated region
        $region29: #{net_forward.1} parent=11 // pred_check
          %p262 = pneg %p146
        $region30: #{net_forward.1} parent=11 // pred_check_branch
          %264 = sbr.rel (%p262) target = $region32
        $region31: #{net_forward.1} parent=11 // pred_region
          _
        $region32: #{net_forward.1} parent=11 // pred_fallthru
          _
        // Predicated region
        $region33: #{net_forward.1} parent=11 // pred_check
          %p265 = pneg %p167
        $region34: #{net_forward.1} parent=11 // pred_check_branch
          %267 = sbr.rel (%p265) target = $region36
        $region35: #{net_forward.1} parent=11 // pred_region
          _
        $region36: #{net_forward.1} parent=11 // pred_fallthru
          _
        // Predicated region
        $region37: #{net_forward.1} parent=11 // pred_check
          %p268 = pneg %p188
        $region38: #{net_forward.1} parent=11 // pred_check_branch
          %270 = sbr.rel (%p268) target = $region40
        $region39: #{net_forward.1} parent=11 // pred_region
          _
        $region40: #{net_forward.1} parent=11 // pred_fallthru
          _
        // Predicated region
        $region41: #{net_forward.1} parent=11 // pred_check
          %p271 = pneg %p209
        $region42: #{net_forward.1} parent=11 // pred_check_branch
          %273 = sbr.rel (%p271) target = $region44
        $region43: #{net_forward.1} parent=11 // pred_region
          _
        $region44: #{net_forward.1} parent=11 // pred_fallthru
          _
      $region12: #{net_forward.1} parent=5 // pred_fallthru
        _
      %p274 = scmp.lt.s32.totalorder %s15, 2
      // Predicated region
      $region45: #{net_forward.1} parent=5 // pred_check
        %p275 = pneg %p274
      $region46: #{net_forward.1} parent=5 // pred_check_branch
        %277 = sbr.rel (%p275) target = $region48
      $region47: #{net_forward.1} parent=5 // pred_region
        // Predicated region
        $region49: #{net_forward.1} parent=47 // pred_check
          %p278 = pneg %p35
        $region50: #{net_forward.1} parent=47 // pred_check_branch
          %280 = sbr.rel (%p278) target = $region52
        $region51: #{net_forward.1} parent=47 // pred_region
          %s281 = sand.u32 %s25, 1
          %s282 = sand.u32 %s25, 1
          %s283 = smul.addr %s282, 192
          %s284 = scalar_lea.vmem [#allocation2], %s283
          %s285 = smul.u32 2, %s15
          %s286 = smul.addr %s285, 2
          %s287 = smul.addr %s286, 4
          %s288 = scalar_lea.vmem %s0, %s287
          // Predicated region
          $region53: #{net_forward.1} parent=51 // pred_check
            _
          $region54: #{net_forward.1} parent=51 // pred_check_branch
            %290 = sbr.rel (0) target = $region56
          $region55: #{net_forward.1} parent=51 // pred_region
            // Predicated region
            $region57: #{net_forward.1} parent=55 // pred_check
              _
            $region58: #{net_forward.1} parent=55 // pred_check_branch
              %292 = sbr.rel (0) target = $region60
            $region59: #{net_forward.1} parent=55 // pred_region
              // Predicated region
              $region72: #{net_forward.1} parent=59 // pred_check
                _
              $region73: #{net_forward.1} parent=59 // pred_check_branch
                %353 = sbr.rel (0) target = $region75
              $region74: #{net_forward.1} parent=59 // pred_region
                loop: start=0, step=1, limit=1
                $region76: #{net_forward.1} parent=74 // loop_pre_header
                  _
                $region77: #{net_forward.1} parent=74 // loop_header
                  %s355 = sphi 0, %s359
                  %p356 = scmp.ge.s32.totalorder %s355, 1
                  %s360 = sphi %s288, %s288
                  %s361 = sphi %s284, %s284
                $region78: #{net_forward.1} parent=74 // loop_header_branch
                  %358 = sbr.rel (%p356) target = $region82
                $region79: #{net_forward.1} parent=74 // loop_body
                  %v362 = vld [vmem:[%s360] sm:$0xff]
                  %363 = vst [vmem:[%s361] sm:$0xff] %v362
                  %v364 = vld [vmem:[%s360 + $0x8] sm:$0xff]
                  %365 = vst [vmem:[%s361 + $0x8] sm:$0xff] %v364
                  %v366 = vld [vmem:[%s360 + $0x20] sm:$0xff]
                  %367 = vst [vmem:[%s361 + $0x10] sm:$0xff] %v366
                  %v368 = vld [vmem:[%s360 + $0x28] sm:$0xff]
                  %369 = vst [vmem:[%s361 + $0x18] sm:$0xff] %v368
                  %v370 = vld [vmem:[%s360 + $0x40] sm:$0xff]
                  %371 = vst [vmem:[%s361 + $0x20] sm:$0xff] %v370
                  %v372 = vld [vmem:[%s360 + $0x48] sm:$0xff]
                  %373 = vst [vmem:[%s361 + $0x28] sm:$0xff] %v372
                  %v374 = vld [vmem:[%s360 + $0x60] sm:$0xff]
                  %375 = vst [vmem:[%s361 + $0x30] sm:$0xff] %v374
                  %v376 = vld [vmem:[%s360 + $0x68] sm:$0xff]
                  %377 = vst [vmem:[%s361 + $0x38] sm:$0xff] %v376
                  %v378 = vld [vmem:[%s360 + $0x80] sm:$0xff]
                  %379 = vst [vmem:[%s361 + $0x40] sm:$0xff] %v378
                  %v380 = vld [vmem:[%s360 + $0x88] sm:$0xff]
                  %381 = vst [vmem:[%s361 + $0x48] sm:$0xff] %v380
                  %v382 = vld [vmem:[%s360 + $0xa0] sm:$0xff]
                  %383 = vst [vmem:[%s361 + $0x50] sm:$0xff] %v382
                  %v384 = vld [vmem:[%s360 + $0xa8] sm:$0xff]
                  %385 = vst [vmem:[%s361 + $0x58] sm:$0xff] %v384
                  %v386 = vld [vmem:[%s360 + $0xc0] sm:$0xff]
                  %387 = vst [vmem:[%s361 + $0x60] sm:$0xff] %v386
                  %v388 = vld [vmem:[%s360 + $0xc8] sm:$0xff]
                  %389 = vst [vmem:[%s361 + $0x68] sm:$0xff] %v388
                  %v390 = vld [vmem:[%s360 + $0xe0] sm:$0xff]
                  %391 = vst [vmem:[%s361 + $0x70] sm:$0xff] %v390
                  %v392 = vld [vmem:[%s360 + $0xe8] sm:$0xff]
                  %393 = vst [vmem:[%s361 + $0x78] sm:$0xff] %v392
                  %v394 = vld [vmem:[%s360 + $0x100] sm:$0xff]
                  %395 = vst [vmem:[%s361 + $0x80] sm:$0xff] %v394
                  %v396 = vld [vmem:[%s360 + $0x108] sm:$0xff]
                  %397 = vst [vmem:[%s361 + $0x88] sm:$0xff] %v396
                  %v398 = vld [vmem:[%s360 + $0x120] sm:$0xff]
                  %399 = vst [vmem:[%s361 + $0x90] sm:$0xff] %v398
                  %v400 = vld [vmem:[%s360 + $0x128] sm:$0xff]
                  %401 = vst [vmem:[%s361 + $0x98] sm:$0xff] %v400
                  %v402 = vld [vmem:[%s360 + $0x140] sm:$0xff]
                  %403 = vst [vmem:[%s361 + $0xa0] sm:$0xff] %v402
                  %v404 = vld [vmem:[%s360 + $0x148] sm:$0xff]
                  %405 = vst [vmem:[%s361 + $0xa8] sm:$0xff] %v404
                  %v406 = vld [vmem:[%s360 + $0x160] sm:$0xff]
                  %407 = vst [vmem:[%s361 + $0xb0] sm:$0xff] %v406
                  %v408 = vld [vmem:[%s360 + $0x168] sm:$0xff]
                  %409 = vst [vmem:[%s361 + $0xb8] sm:$0xff] %v408
                $region80: #{net_forward.1} parent=74 // loop_footer
                  %s359 = sadd.s32 1, %s355
                $region81: #{net_forward.1} parent=74 // loop_footer_branch
                  %354 = sbr.rel target = $region77
                $region82: #{net_forward.1} parent=74 // loop_exit
                  _
              $region75: #{net_forward.1} parent=59 // pred_fallthru
                _
              // Predicated region
              $region83: #{net_forward.1} parent=59 // pred_check
                _
              $region84: #{net_forward.1} parent=59 // pred_check_branch
                %411 = sbr.rel target = $region86
              $region85: #{net_forward.1} parent=59 // pred_region
                _
              $region86: #{net_forward.1} parent=59 // pred_fallthru
                _
            $region60: #{net_forward.1} parent=55 // pred_fallthru
              _
            // Predicated region
            $region61: #{net_forward.1} parent=55 // pred_check
              _
            $region62: #{net_forward.1} parent=55 // pred_check_branch
              %294 = sbr.rel target = $region64
            $region63: #{net_forward.1} parent=55 // pred_region
              loop: start=0, step=1, limit=1
              $region65: #{net_forward.1} parent=63 // loop_pre_header
                _
              $region66: #{net_forward.1} parent=63 // loop_header
                %s297 = sphi 0, %s301
                %p298 = scmp.ge.s32.totalorder %s297, 1
                %s302 = sphi %s288, %s288
                %s303 = sphi %s284, %s284
              $region67: #{net_forward.1} parent=63 // loop_header_branch
                %300 = sbr.rel (%p298) target = $region71
              $region68: #{net_forward.1} parent=63 // loop_body
                %v304 = vld [vmem:[%s302] sm:$0xff]
                %305 = vst [vmem:[%s303] sm:$0xff] %v304
                %v306 = vld [vmem:[%s302 + $0x8] sm:$0xff]
                %307 = vst [vmem:[%s303 + $0x8] sm:$0xff] %v306
                %v308 = vld [vmem:[%s302 + $0x20] sm:$0xff]
                %309 = vst [vmem:[%s303 + $0x10] sm:$0xff] %v308
                %v310 = vld [vmem:[%s302 + $0x28] sm:$0xff]
                %311 = vst [vmem:[%s303 + $0x18] sm:$0xff] %v310
                %v312 = vld [vmem:[%s302 + $0x40] sm:$0xff]
                %313 = vst [vmem:[%s303 + $0x20] sm:$0xff] %v312
                %v314 = vld [vmem:[%s302 + $0x48] sm:$0xff]
                %315 = vst [vmem:[%s303 + $0x28] sm:$0xff] %v314
                %v316 = vld [vmem:[%s302 + $0x60] sm:$0xff]
                %317 = vst [vmem:[%s303 + $0x30] sm:$0xff] %v316
                %v318 = vld [vmem:[%s302 + $0x68] sm:$0xff]
                %319 = vst [vmem:[%s303 + $0x38] sm:$0xff] %v318
                %v320 = vld [vmem:[%s302 + $0x80] sm:$0xff]
                %321 = vst [vmem:[%s303 + $0x40] sm:$0xff] %v320
                %v322 = vld [vmem:[%s302 + $0x88] sm:$0xff]
                %323 = vst [vmem:[%s303 + $0x48] sm:$0xff] %v322
                %v324 = vld [vmem:[%s302 + $0xa0] sm:$0xff]
                %325 = vst [vmem:[%s303 + $0x50] sm:$0xff] %v324
                %v326 = vld [vmem:[%s302 + $0xa8] sm:$0xff]
                %327 = vst [vmem:[%s303 + $0x58] sm:$0xff] %v326
                %v328 = vld [vmem:[%s302 + $0xc0] sm:$0xff]
                %329 = vst [vmem:[%s303 + $0x60] sm:$0xff] %v328
                %v330 = vld [vmem:[%s302 + $0xc8] sm:$0xff]
                %331 = vst [vmem:[%s303 + $0x68] sm:$0xff] %v330
                %v332 = vld [vmem:[%s302 + $0xe0] sm:$0xff]
                %333 = vst [vmem:[%s303 + $0x70] sm:$0xff] %v332
                %v334 = vld [vmem:[%s302 + $0xe8] sm:$0xff]
                %335 = vst [vmem:[%s303 + $0x78] sm:$0xff] %v334
                %v336 = vld [vmem:[%s302 + $0x100] sm:$0xff]
                %337 = vst [vmem:[%s303 + $0x80] sm:$0xff] %v336
                %v338 = vld [vmem:[%s302 + $0x108] sm:$0xff]
                %339 = vst [vmem:[%s303 + $0x88] sm:$0xff] %v338
                %v340 = vld [vmem:[%s302 + $0x120] sm:$0xff]
                %341 = vst [vmem:[%s303 + $0x90] sm:$0xff] %v340
                %v342 = vld [vmem:[%s302 + $0x128] sm:$0xff]
                %343 = vst [vmem:[%s303 + $0x98] sm:$0xff] %v342
                %v344 = vld [vmem:[%s302 + $0x140] sm:$0xff]
                %345 = vst [vmem:[%s303 + $0xa0] sm:$0xff] %v344
                %v346 = vld [vmem:[%s302 + $0x148] sm:$0xff]
                %347 = vst [vmem:[%s303 + $0xa8] sm:$0xff] %v346
                %v348 = vld [vmem:[%s302 + $0x160] sm:$0xff]
                %349 = vst [vmem:[%s303 + $0xb0] sm:$0xff] %v348
                %v350 = vld [vmem:[%s302 + $0x168] sm:$0xff]
                %351 = vst [vmem:[%s303 + $0xb8] sm:$0xff] %v350
              $region69: #{net_forward.1} parent=63 // loop_footer
                %s301 = sadd.s32 1, %s297
              $region70: #{net_forward.1} parent=63 // loop_footer_branch
                %296 = sbr.rel target = $region66
              $region71: #{net_forward.1} parent=63 // loop_exit
                _
            $region64: #{net_forward.1} parent=55 // pred_fallthru
              _
          $region56: #{net_forward.1} parent=51 // pred_fallthru
            _
          %412 = vnop
        $region52: #{net_forward.1} parent=47 // pred_fallthru
          _
      $region48: #{net_forward.1} parent=5 // pred_fallthru
        _
      %p413 = scmp.le.s32.totalorder 1, %s15
      %p414 = scmp.lt.s32.totalorder %s15, 3
      %p415 = pnand %p413, %p414
      %p416 = pneg %p415
      // Predicated region
      $region87: #{net_forward.1} parent=5 // pred_check
        _
      $region88: #{net_forward.1} parent=5 // pred_check_branch
        %418 = sbr.rel (%p415) target = $region90
      $region89: #{net_forward.1} parent=5 // pred_region
        %s419 = ssub.s32 %s15, 1
        %s420 = sand.u32 %s28, 1
        %s421 = sand.u32 %s28, 1
        %s422 = smul.addr %s421, 192
        %s423 = scalar_lea.vmem [#allocation2], %s422
        // Predicated region
        $region91: #{net_forward.1} parent=89 // pred_check
          %p424 = pneg %p41
        $region92: #{net_forward.1} parent=89 // pred_check_branch
          %426 = sbr.rel (%p424) target = $region94
        $region93: #{net_forward.1} parent=89 // pred_region
          _
        $region94: #{net_forward.1} parent=89 // pred_fallthru
          _
        %s427 = sand.u32 %s28, 1
        %s428 = sand.u32 %s28, 1
        %s429 = smul.addr %s428, 192
        %s430 = scalar_lea.vmem [#allocation2], %s429
        %p431 = pneg %p41
        %p432 = pneg %p38
        %p433 = pneg %p62
        %p434 = pneg %p59
        %p435 = pneg %p83
        %p436 = pneg %p80
        %p437 = pneg %p104
        %p438 = pneg %p101
        %p439 = pneg %p125
        %p440 = pneg %p122
        %p441 = pneg %p146
        %p442 = pneg %p143
        %p443 = pneg %p167
        %p444 = pneg %p164
        %p445 = pneg %p188
        %p446 = pneg %p185
        %p447 = pneg %p209
        %p448 = pneg %p206
        %p449 = pneg %p235
        %p450 = pneg %p232
        %s451 = smul.u32 2, %s20
        %p452 = scmp.lt.s32.totalorder %s451, 3
        %s453 = scalar_select %p452, %s451, 3
        %s454 = smul.addr %s453, 8
        %s455 = scalar_lea.vmem %s9, %s454
        %s456 = smul.u32 2, %s20
        %s457 = smul.u32 2, %s20
        %p458 = scmp.lt.s32.totalorder %s457, 3
        %s459 = scalar_select %p458, %s457, 3
        %s460 = smul.addr %s459, 8
        %s461 = scalar_lea.vmem %s9, %s460
        %s462 = smul.u32 2, %s20
        %v464 = vld [vmem:[%s1] sm:$0xff]
        %v465 = vld [vmem:[%s1 + $0x8] sm:$0xff]
        %v466 = vld [vmem:[%s1 + $0x10] sm:$0xff]
        %v467 = vld [vmem:[%s1 + $0x18] sm:$0xff]
        %v468 = vld [vmem:[%s1 + $0x20] sm:$0xff]
        %v469 = vld [vmem:[%s1 + $0x28] sm:$0xff]
        %v470 = vld [vmem:[%s1 + $0x30] sm:$0xff]
        %v471 = vld [vmem:[%s1 + $0x38] sm:$0xff]
        %v472 = vld [vmem:[%s1 + $0x40] sm:$0xff]
        %v473 = vld [vmem:[%s1 + $0x48] sm:$0xff]
        %v474 = vld [vmem:[%s1 + $0x50] sm:$0xff]
        %v475 = vld [vmem:[%s1 + $0x58] sm:$0xff]
        %v476 = vld [vmem:[%s1 + $0x60] sm:$0xff]
        %v477 = vld [vmem:[%s1 + $0x68] sm:$0xff]
        %v478 = vld [vmem:[%s1 + $0x70] sm:$0xff]
        %v479 = vld [vmem:[%s1 + $0x78] sm:$0xff]
        %v480 = vld [vmem:[%s1 + $0x80] sm:$0xff]
        %v481 = vld [vmem:[%s1 + $0x88] sm:$0xff]
        %v482 = vld [vmem:[%s1 + $0x90] sm:$0xff]
        %v483 = vld [vmem:[%s1 + $0x98] sm:$0xff]
        %v484 = vld [vmem:[%s1 + $0xa0] sm:$0xff]
        %v485 = vld [vmem:[%s1 + $0xa8] sm:$0xff]
        %v486 = vld [vmem:[%s1 + $0xb0] sm:$0xff]
        %v487 = vld [vmem:[%s1 + $0xb8] sm:$0xff]
        %v488 = vld [vmem:[%s1 + $0xc0] sm:$0xff]
        %v489 = vld [vmem:[%s1 + $0xc8] sm:$0xff]
        %v490 = vld [vmem:[%s1 + $0xd0] sm:$0xff]
        %v491 = vld [vmem:[%s1 + $0xd8] sm:$0xff]
        %v492 = vld [vmem:[%s1 + $0xe0] sm:$0xff]
        %v493 = vld [vmem:[%s1 + $0xe8] sm:$0xff]
        %v494 = vld [vmem:[%s1 + $0xf0] sm:$0xff]
        %v495 = vld [vmem:[%s1 + $0xf8] sm:$0xff]
        %v496 = vld [vmem:[%s1 + $0x100] sm:$0xff]
        %v497 = vld [vmem:[%s1 + $0x108] sm:$0xff]
        %v498 = vld [vmem:[%s1 + $0x110] sm:$0xff]
        %v499 = vld [vmem:[%s1 + $0x118] sm:$0xff]
        %v500 = vld [vmem:[%s1 + $0x120] sm:$0xff]
        %v501 = vld [vmem:[%s1 + $0x128] sm:$0xff]
        %v502 = vld [vmem:[%s1 + $0x130] sm:$0xff]
        %v503 = vld [vmem:[%s1 + $0x138] sm:$0xff]
        %v504 = vld [vmem:[%s1 + $0x140] sm:$0xff]
        %v505 = vld [vmem:[%s1 + $0x148] sm:$0xff]
        %v506 = vld [vmem:[%s2] sm:$0x1]
        %v507 = vld [vmem:[%s423] sm:$0xff]
        %v508 = vld [vmem:[%s423 + $0x8] sm:$0xff]
        %v511 = vunpack.c.l.b16 %v507
        %v512 = vunpack.c.h.b16 %v507
        %v513 = vunpack.c.l.b16 %v508
        %v514 = vunpack.c.h.b16 %v508
        %v515 = vpack.c.b16 %v513, %v511
        %v516 = vpack.c.b16 %v514, %v512
        %v560 = vunpack.c.l.b16 %v464
        %v561 = vunpack.c.h.b16 %v464
        %v562 = vunpack.c.l.b16 %v465
        %v563 = vunpack.c.h.b16 %v465
        %v564 = vunpack.c.l.b16 %v466
        %v565 = vunpack.c.h.b16 %v466
        %v566 = vunpack.c.l.b16 %v467
        %v567 = vunpack.c.h.b16 %v467
        %v568 = vunpack.c.l.b16 %v468
        %v569 = vunpack.c.h.b16 %v468
        %v570 = vunpack.c.l.b16 %v469
        %v571 = vunpack.c.h.b16 %v469
        %v572 = vunpack.c.l.b16 %v470
        %v573 = vunpack.c.h.b16 %v470
        %v574 = vunpack.c.l.b16 %v471
        %v575 = vunpack.c.h.b16 %v471
        %v576 = vunpack.c.l.b16 %v472
        %v577 = vunpack.c.h.b16 %v472
        %v578 = vunpack.c.l.b16 %v473
        %v579 = vunpack.c.h.b16 %v473
        %v580 = vunpack.c.l.b16 %v474
        %v581 = vunpack.c.h.b16 %v474
        %v582 = vunpack.c.l.b16 %v475
        %v583 = vunpack.c.h.b16 %v475
        %v584 = vunpack.c.l.b16 %v476
        %v585 = vunpack.c.h.b16 %v476
        %v586 = vunpack.c.l.b16 %v477
        %v587 = vunpack.c.h.b16 %v477
        %v588 = vunpack.c.l.b16 %v478
        %v589 = vunpack.c.h.b16 %v478
        %v590 = vunpack.c.l.b16 %v479
        %v591 = vunpack.c.h.b16 %v479
        %v592 = vunpack.c.l.b16 %v480
        %v593 = vunpack.c.h.b16 %v480
        %v594 = vunpack.c.l.b16 %v481
        %v595 = vunpack.c.h.b16 %v481
        %v596 = vunpack.c.l.b16 %v482
        %v597 = vunpack.c.h.b16 %v482
        %v598 = vunpack.c.l.b16 %v483
        %v599 = vunpack.c.h.b16 %v483
        %v600 = vunpack.c.l.b16 %v484
        %v601 = vunpack.c.h.b16 %v484
        %v602 = vunpack.c.l.b16 %v485
        %v603 = vunpack.c.h.b16 %v485
        %v604 = vunpack.c.l.b16 %v486
        %v605 = vunpack.c.h.b16 %v486
        %v606 = vunpack.c.l.b16 %v487
        %v607 = vunpack.c.h.b16 %v487
        %v608 = vunpack.c.l.b16 %v488
        %v609 = vunpack.c.h.b16 %v488
        %v610 = vunpack.c.l.b16 %v489
        %v611 = vunpack.c.h.b16 %v489
        %v612 = vunpack.c.l.b16 %v490
        %v613 = vunpack.c.h.b16 %v490
        %v614 = vunpack.c.l.b16 %v491
        %v615 = vunpack.c.h.b16 %v491
        %v616 = vunpack.c.l.b16 %v492
        %v617 = vunpack.c.h.b16 %v492
        %v618 = vunpack.c.l.b16 %v493
        %v619 = vunpack.c.h.b16 %v493
        %v620 = vunpack.c.l.b16 %v494
        %v621 = vunpack.c.h.b16 %v494
        %v622 = vunpack.c.l.b16 %v495
        %v623 = vunpack.c.h.b16 %v495
        %v624 = vunpack.c.l.b16 %v496
        %v625 = vunpack.c.h.b16 %v496
        %v626 = vunpack.c.l.b16 %v497
        %v627 = vunpack.c.h.b16 %v497
        %v628 = vunpack.c.l.b16 %v498
        %v629 = vunpack.c.h.b16 %v498
        %v630 = vunpack.c.l.b16 %v499
        %v631 = vunpack.c.h.b16 %v499
        %v632 = vunpack.c.l.b16 %v500
        %v633 = vunpack.c.h.b16 %v500
        %v634 = vunpack.c.l.b16 %v501
        %v635 = vunpack.c.h.b16 %v501
        %v636 = vunpack.c.l.b16 %v502
        %v637 = vunpack.c.h.b16 %v502
        %v638 = vunpack.c.l.b16 %v503
        %v639 = vunpack.c.h.b16 %v503
        %v640 = vunpack.c.l.b16 %v504
        %v641 = vunpack.c.h.b16 %v504
        %v642 = vunpack.c.l.b16 %v505
        %v643 = vunpack.c.h.b16 %v505
        %v644 = vpack.c.b16 %v564, %v560
        %v645 = vpack.c.b16 %v565, %v561
        %v646 = vpack.c.b16 %v566, %v562
        %v647 = vpack.c.b16 %v567, %v563
        %v648 = vpack.c.b16 %v572, %v568
        %v649 = vpack.c.b16 %v573, %v569
        %v650 = vpack.c.b16 %v574, %v570
        %v651 = vpack.c.b16 %v575, %v571
        %v652 = vpack.c.b16 %v580, %v576
        %v653 = vpack.c.b16 %v581, %v577
        %v654 = vpack.c.b16 %v582, %v578
        %v655 = vpack.c.b16 %v583, %v579
        %v656 = vpack.c.b16 %v588, %v584
        %v657 = vpack.c.b16 %v589, %v585
        %v658 = vpack.c.b16 %v590, %v586
        %v659 = vpack.c.b16 %v591, %v587
        %v660 = vpack.c.b16 %v596, %v592
        %v661 = vpack.c.b16 %v597, %v593
        %v662 = vpack.c.b16 %v598, %v594
        %v663 = vpack.c.b16 %v599, %v595
        %v664 = vpack.c.b16 %v604, %v600
        %v665 = vpack.c.b16 %v605, %v601
        %v666 = vpack.c.b16 %v606, %v602
        %v667 = vpack.c.b16 %v607, %v603
        %v668 = vpack.c.b16 %v612, %v608
        %v669 = vpack.c.b16 %v613, %v609
        %v670 = vpack.c.b16 %v614, %v610
        %v671 = vpack.c.b16 %v615, %v611
        %v672 = vpack.c.b16 %v620, %v616
        %v673 = vpack.c.b16 %v621, %v617
        %v674 = vpack.c.b16 %v622, %v618
        %v675 = vpack.c.b16 %v623, %v619
        %v676 = vpack.c.b16 %v628, %v624
        %v677 = vpack.c.b16 %v629, %v625
        %v678 = vpack.c.b16 %v630, %v626
        %v679 = vpack.c.b16 %v631, %v627
        %v680 = vpack.c.b16 %v636, %v632
        %v681 = vpack.c.b16 %v637, %v633
        %v682 = vpack.c.b16 %v638, %v634
        %v683 = vpack.c.b16 %v639, %v635
        %v684 = vpack.c.b16 %v640, %v640
        %v685 = vpack.c.b16 %v641, %v641
        %v686 = vpack.c.b16 %v642, %v642
        %v687 = vpack.c.b16 %v643, %v643
        %vm728 = vcmask 326656
        %v730 = vsel %vm728, %v516, 0
        %vm732 = vcmask 1043456
        %v734 = vsel %vm732, %v684, 0
        %v737 = vsel %vm732, %v685, 0
        %v740 = vsel %vm732, %v686, 0
        %v743 = vsel %vm732, %v687, 0
        %745 = vmatprep.subr.bf16.mxu0 %v645
        %746 = vmatpush1.bf16.msra.mxu0 %v644
        %747 = vmatprep.subr.bf16.mxu0 %v649
        %748 = vmatpush1.bf16.msra.mxu0 %v648
        %749 = vmatprep.subr.bf16.mxu0 %v653
        %750 = vmatpush1.bf16.msra.mxu0 %v652
        %751 = vmatprep.subr.bf16.mxu0 %v657
        %752 = vmatpush1.bf16.msra.mxu0 %v656
        %753 = vmatprep.subr.bf16.mxu0 %v661
        %754 = vmatpush1.bf16.msra.mxu0 %v660
        %755 = vmatprep.subr.bf16.mxu0 %v665
        %756 = vmatpush1.bf16.msra.mxu0 %v664
        %757 = vmatprep.subr.bf16.mxu0 %v669
        %758 = vmatpush1.bf16.msra.mxu0 %v668
        %759 = vmatprep.subr.bf16.mxu0 %v673
        %760 = vmatpush1.bf16.msra.mxu0 %v672
        %761 = vmatprep.subr.bf16.mxu0 %v677
        %762 = vmatpush1.bf16.msra.mxu0 %v676
        %763 = vmatprep.subr.bf16.mxu0 %v681
        %764 = vmatpush1.bf16.msra.mxu0 %v680
        %765 = vmatprep.subr.bf16.mxu0 %v737
        %766 = vmatpush1.bf16.msra.mxu0 %v734
        %767 = vmatprep.subr.bf16.mxu0 0
        %768 = vmatpush1.bf16.msra.mxu0 0
        %769 = vmatprep.subr.bf16.mxu0 0
        %770 = vmatpush1.bf16.msra.mxu0 0
        %771 = vmatprep.subr.bf16.mxu0 0
        %772 = vmatpush1.bf16.msra.mxu0 0
        %773 = vmatprep.subr.bf16.mxu0 0
        %774 = vmatpush1.bf16.msra.mxu0 0
        %775 = vmatprep.subr.bf16.mxu0 0
        %776 = vmatpush1.bf16.msra.mxu0 0
        %777 = vmatprep.mubr.bf16.mxu0 %v730
        %778 = vmatmul.mubr.bf16.gmra.mrb[0].mxu0 %v515
        %v779 = vpop.f32.mrb[0].mxu0
        %v780 = vadd.f32 0.0, %v779
        %v781 = vpop.f32.mrb[0].mxu0
        %v782 = vadd.f32 0.0, %v781
        %v783 = vpop.f32.mrb[0].mxu0
        %v784 = vadd.f32 0.0, %v783
        %v785 = vpop.f32.mrb[0].mxu0
        %v786 = vadd.f32 0.0, %v785
        %787 = vdwg.mxu0
        %788 = vmatprep.subr.bf16.mxu0 %v647
        %789 = vmatpush1.bf16.msra.mxu0 %v646
        %790 = vmatprep.subr.bf16.mxu0 %v651
        %791 = vmatpush1.bf16.msra.mxu0 %v650
        %792 = vmatprep.subr.bf16.mxu0 %v655
        %793 = vmatpush1.bf16.msra.mxu0 %v654
        %794 = vmatprep.subr.bf16.mxu0 %v659
        %795 = vmatpush1.bf16.msra.mxu0 %v658
        %796 = vmatprep.subr.bf16.mxu0 %v663
        %797 = vmatpush1.bf16.msra.mxu0 %v662
        %798 = vmatprep.subr.bf16.mxu0 %v667
        %799 = vmatpush1.bf16.msra.mxu0 %v666
        %800 = vmatprep.subr.bf16.mxu0 %v671
        %801 = vmatpush1.bf16.msra.mxu0 %v670
        %802 = vmatprep.subr.bf16.mxu0 %v675
        %803 = vmatpush1.bf16.msra.mxu0 %v674
        %804 = vmatprep.subr.bf16.mxu0 %v679
        %805 = vmatpush1.bf16.msra.mxu0 %v678
        %806 = vmatprep.subr.bf16.mxu0 %v683
        %807 = vmatpush1.bf16.msra.mxu0 %v682
        %808 = vmatprep.subr.bf16.mxu0 %v743
        %809 = vmatpush1.bf16.msra.mxu0 %v740
        %810 = vmatprep.subr.bf16.mxu0 0
        %811 = vmatpush1.bf16.msra.mxu0 0
        %812 = vmatprep.subr.bf16.mxu0 0
        %813 = vmatpush1.bf16.msra.mxu0 0
        %814 = vmatprep.subr.bf16.mxu0 0
        %815 = vmatpush1.bf16.msra.mxu0 0
        %816 = vmatprep.subr.bf16.mxu0 0
        %817 = vmatpush1.bf16.msra.mxu0 0
        %818 = vmatprep.subr.bf16.mxu0 0
        %819 = vmatpush1.bf16.msra.mxu0 0
        %820 = vmatprep.mubr.bf16.mxu0 %v730
        %821 = vmatmul.mubr.bf16.gmra.mrb[0].mxu0 %v515
        %v822 = vpop.f32.mrb[0].mxu0
        %v823 = vadd.f32 0.0, %v822
        %v824 = vpop.f32.mrb[0].mxu0
        %v825 = vadd.f32 0.0, %v824
        %v826 = vpop.f32.mrb[0].mxu0
        %v827 = vadd.f32 0.0, %v826
        %v828 = vpop.f32.mrb[0].mxu0
        %v829 = vadd.f32 0.0, %v828
        %830 = vdwg.mxu0
        %v831 = vmax.f32 %v780, %v782
        %v832 = vmax.f32 %v784, %v786
        %v833 = vmax.f32 %v823, %v825
        %v834 = vmax.f32 %v827, %v829
        %v835 = vmax.f32 %v831, %v833
        %v836 = vmax.f32 %v832, %v834
        %v838 = vlaneseq
        %v839 = vshrl.u32 %v838, 7
        %v840 = vsub.s32 0, %v839
        %v841 = vrot.slane %v506, %v840
        %v843 = vadd.f32 %v835, %v841
        %v844 = vadd.f32 %v836, %v841
        %v845 = vmax.f32 %v843, 0.0
        %v846 = vmax.f32 %v844, 0.0
        %s847 = scalar_lea.vmem %s423, 16 [#allocation2]
        %v848 = vld [vmem:[%s847] sm:$0xff]
        %v849 = vld [vmem:[%s847 + $0x8] sm:$0xff]
        %v852 = vunpack.c.l.b16 %v848
        %v853 = vunpack.c.h.b16 %v848
        %v854 = vunpack.c.l.b16 %v849
        %v855 = vunpack.c.h.b16 %v849
        %v856 = vpack.c.b16 %v854, %v852
        %v857 = vpack.c.b16 %v855, %v853
        %v860 = vsel %vm728, %v857, 0
        %862 = vmatprep.subr.bf16.mxu0 %v645
        %863 = vmatpush1.bf16.msra.mxu0 %v644
        %864 = vmatprep.subr.bf16.mxu0 %v649
        %865 = vmatpush1.bf16.msra.mxu0 %v648
        %866 = vmatprep.subr.bf16.mxu0 %v653
        %867 = vmatpush1.bf16.msra.mxu0 %v652
        %868 = vmatprep.subr.bf16.mxu0 %v657
        %869 = vmatpush1.bf16.msra.mxu0 %v656
        %870 = vmatprep.subr.bf16.mxu0 %v661
        %871 = vmatpush1.bf16.msra.mxu0 %v660
        %872 = vmatprep.subr.bf16.mxu0 %v665
        %873 = vmatpush1.bf16.msra.mxu0 %v664
        %874 = vmatprep.subr.bf16.mxu0 %v669
        %875 = vmatpush1.bf16.msra.mxu0 %v668
        %876 = vmatprep.subr.bf16.mxu0 %v673
        %877 = vmatpush1.bf16.msra.mxu0 %v672
        %878 = vmatprep.subr.bf16.mxu0 %v677
        %879 = vmatpush1.bf16.msra.mxu0 %v676
        %880 = vmatprep.subr.bf16.mxu0 %v681
        %881 = vmatpush1.bf16.msra.mxu0 %v680
        %882 = vmatprep.subr.bf16.mxu0 %v737
        %883 = vmatpush1.bf16.msra.mxu0 %v734
        %884 = vmatprep.subr.bf16.mxu0 0
        %885 = vmatpush1.bf16.msra.mxu0 0
        %886 = vmatprep.subr.bf16.mxu0 0
        %887 = vmatpush1.bf16.msra.mxu0 0
        %888 = vmatprep.subr.bf16.mxu0 0
        %889 = vmatpush1.bf16.msra.mxu0 0
        %890 = vmatprep.subr.bf16.mxu0 0
        %891 = vmatpush1.bf16.msra.mxu0 0
        %892 = vmatprep.subr.bf16.mxu0 0
        %893 = vmatpush1.bf16.msra.mxu0 0
        %894 = vmatprep.mubr.bf16.mxu0 %v860
        %895 = vmatmul.mubr.bf16.gmra.mrb[0].mxu0 %v856
        %v896 = vpop.f32.mrb[0].mxu0
        %v897 = vadd.f32 0.0, %v896
        %v898 = vpop.f32.mrb[0].mxu0
        %v899 = vadd.f32 0.0, %v898
        %v900 = vpop.f32.mrb[0].mxu0
        %v901 = vadd.f32 0.0, %v900
        %v902 = vpop.f32.mrb[0].mxu0
        %v903 = vadd.f32 0.0, %v902
        %904 = vdwg.mxu0
        %905 = vmatprep.subr.bf16.mxu0 %v647
        %906 = vmatpush1.bf16.msra.mxu0 %v646
        %907 = vmatprep.subr.bf16.mxu0 %v651
        %908 = vmatpush1.bf16.msra.mxu0 %v650
        %909 = vmatprep.subr.bf16.mxu0 %v655
        %910 = vmatpush1.bf16.msra.mxu0 %v654
        %911 = vmatprep.subr.bf16.mxu0 %v659
        %912 = vmatpush1.bf16.msra.mxu0 %v658
        %913 = vmatprep.subr.bf16.mxu0 %v663
        %914 = vmatpush1.bf16.msra.mxu0 %v662
        %915 = vmatprep.subr.bf16.mxu0 %v667
        %916 = vmatpush1.bf16.msra.mxu0 %v666
        %917 = vmatprep.subr.bf16.mxu0 %v671
        %918 = vmatpush1.bf16.msra.mxu0 %v670
        %919 = vmatprep.subr.bf16.mxu0 %v675
        %920 = vmatpush1.bf16.msra.mxu0 %v674
        %921 = vmatprep.subr.bf16.mxu0 %v679
        %922 = vmatpush1.bf16.msra.mxu0 %v678
        %923 = vmatprep.subr.bf16.mxu0 %v683
        %924 = vmatpush1.bf16.msra.mxu0 %v682
        %925 = vmatprep.subr.bf16.mxu0 %v743
        %926 = vmatpush1.bf16.msra.mxu0 %v740
        %927 = vmatprep.subr.bf16.mxu0 0
        %928 = vmatpush1.bf16.msra.mxu0 0
        %929 = vmatprep.subr.bf16.mxu0 0
        %930 = vmatpush1.bf16.msra.mxu0 0
        %931 = vmatprep.subr.bf16.mxu0 0
        %932 = vmatpush1.bf16.msra.mxu0 0
        %933 = vmatprep.subr.bf16.mxu0 0
        %934 = vmatpush1.bf16.msra.mxu0 0
        %935 = vmatprep.subr.bf16.mxu0 0
        %936 = vmatpush1.bf16.msra.mxu0 0
        %937 = vmatprep.mubr.bf16.mxu0 %v860
        %938 = vmatmul.mubr.bf16.gmra.mrb[0].mxu0 %v856
        %v939 = vpop.f32.mrb[0].mxu0
        %v940 = vadd.f32 0.0, %v939
        %v941 = vpop.f32.mrb[0].mxu0
        %v942 = vadd.f32 0.0, %v941
        %v943 = vpop.f32.mrb[0].mxu0
        %v944 = vadd.f32 0.0, %v943
        %v945 = vpop.f32.mrb[0].mxu0
        %v946 = vadd.f32 0.0, %v945
        %947 = vdwg.mxu0
        %v948 = vmax.f32 %v897, %v899
        %v949 = vmax.f32 %v901, %v903
        %v950 = vmax.f32 %v940, %v942
        %v951 = vmax.f32 %v944, %v946
        %v952 = vmax.f32 %v948, %v950
        %v953 = vmax.f32 %v949, %v951
        %v954 = vadd.f32 %v952, %v841
        %v955 = vadd.f32 %v953, %v841
        %v956 = vmax.f32 %v954, 0.0
        %v957 = vmax.f32 %v955, 0.0
        %s958 = scalar_lea.vmem %s423, 32 [#allocation2]
        %v959 = vld [vmem:[%s958] sm:$0xff]
        %v960 = vld [vmem:[%s958 + $0x8] sm:$0xff]
        %v963 = vunpack.c.l.b16 %v959
        %v964 = vunpack.c.h.b16 %v959
        %v965 = vunpack.c.l.b16 %v960
        %v966 = vunpack.c.h.b16 %v960
        %v967 = vpack.c.b16 %v965, %v963
        %v968 = vpack.c.b16 %v966, %v964
        %v971 = vsel %vm728, %v968, 0
        %973 = vmatprep.subr.bf16.mxu0 %v645
        %974 = vmatpush1.bf16.msra.mxu0 %v644
        %975 = vmatprep.subr.bf16.mxu0 %v649
        %976 = vmatpush1.bf16.msra.mxu0 %v648
        %977 = vmatprep.subr.bf16.mxu0 %v653
        %978 = vmatpush1.bf16.msra.mxu0 %v652
        %979 = vmatprep.subr.bf16.mxu0 %v657
        %980 = vmatpush1.bf16.msra.mxu0 %v656
        %981 = vmatprep.subr.bf16.mxu0 %v661
        %982 = vmatpush1.bf16.msra.mxu0 %v660
        %983 = vmatprep.subr.bf16.mxu0 %v665
        %984 = vmatpush1.bf16.msra.mxu0 %v664
        %985 = vmatprep.subr.bf16.mxu0 %v669
        %986 = vmatpush1.bf16.msra.mxu0 %v668
        %987 = vmatprep.subr.bf16.mxu0 %v673
        %988 = vmatpush1.bf16.msra.mxu0 %v672
        %989 = vmatprep.subr.bf16.mxu0 %v677
        %990 = vmatpush1.bf16.msra.mxu0 %v676
        %991 = vmatprep.subr.bf16.mxu0 %v681
        %992 = vmatpush1.bf16.msra.mxu0 %v680
        %993 = vmatprep.subr.bf16.mxu0 %v737
        %994 = vmatpush1.bf16.msra.mxu0 %v734
        %995 = vmatprep.subr.bf16.mxu0 0
        %996 = vmatpush1.bf16.msra.mxu0 0
        %997 = vmatprep.subr.bf16.mxu0 0
        %998 = vmatpush1.bf16.msra.mxu0 0
        %999 = vmatprep.subr.bf16.mxu0 0
        %1000 = vmatpush1.bf16.msra.mxu0 0
        %1001 = vmatprep.subr.bf16.mxu0 0
        %1002 = vmatpush1.bf16.msra.mxu0 0
        %1003 = vmatprep.subr.bf16.mxu0 0
        %1004 = vmatpush1.bf16.msra.mxu0 0
        %1005 = vmatprep.mubr.bf16.mxu0 %v971
        %1006 = vmatmul.mubr.bf16.gmra.mrb[0].mxu0 %v967
        %v1007 = vpop.f32.mrb[0].mxu0
        %v1008 = vadd.f32 0.0, %v1007
        %v1009 = vpop.f32.mrb[0].mxu0
        %v1010 = vadd.f32 0.0, %v1009
        %v1011 = vpop.f32.mrb[0].mxu0
        %v1012 = vadd.f32 0.0, %v1011
        %v1013 = vpop.f32.mrb[0].mxu0
        %v1014 = vadd.f32 0.0, %v1013
        %1015 = vdwg.mxu0
        %1016 = vmatprep.subr.bf16.mxu0 %v647
        %1017 = vmatpush1.bf16.msra.mxu0 %v646
        %1018 = vmatprep.subr.bf16.mxu0 %v651
        %1019 = vmatpush1.bf16.msra.mxu0 %v650
        %1020 = vmatprep.subr.bf16.mxu0 %v655
        %1021 = vmatpush1.bf16.msra.mxu0 %v654
        %1022 = vmatprep.subr.bf16.mxu0 %v659
        %1023 = vmatpush1.bf16.msra.mxu0 %v658
        %1024 = vmatprep.subr.bf16.mxu0 %v663
        %1025 = vmatpush1.bf16.msra.mxu0 %v662
        %1026 = vmatprep.subr.bf16.mxu0 %v667
        %1027 = vmatpush1.bf16.msra.mxu0 %v666
        %1028 = vmatprep.subr.bf16.mxu0 %v671
        %1029 = vmatpush1.bf16.msra.mxu0 %v670
        %1030 = vmatprep.subr.bf16.mxu0 %v675
        %1031 = vmatpush1.bf16.msra.mxu0 %v674
        %1032 = vmatprep.subr.bf16.mxu0 %v679
        %1033 = vmatpush1.bf16.msra.mxu0 %v678
        %1034 = vmatprep.subr.bf16.mxu0 %v683
        %1035 = vmatpush1.bf16.msra.mxu0 %v682
        %1036 = vmatprep.subr.bf16.mxu0 %v743
        %1037 = vmatpush1.bf16.msra.mxu0 %v740
        %1038 = vmatprep.subr.bf16.mxu0 0
        %1039 = vmatpush1.bf16.msra.mxu0 0
        %1040 = vmatprep.subr.bf16.mxu0 0
        %1041 = vmatpush1.bf16.msra.mxu0 0
        %1042 = vmatprep.subr.bf16.mxu0 0
        %1043 = vmatpush1.bf16.msra.mxu0 0
        %1044 = vmatprep.subr.bf16.mxu0 0
        %1045 = vmatpush1.bf16.msra.mxu0 0
        %1046 = vmatprep.subr.bf16.mxu0 0
        %1047 = vmatpush1.bf16.msra.mxu0 0
        %1048 = vmatprep.mubr.bf16.mxu0 %v971
        %1049 = vmatmul.mubr.bf16.gmra.mrb[0].mxu0 %v967
        %v1050 = vpop.f32.mrb[0].mxu0
        %v1051 = vadd.f32 0.0, %v1050
        %v1052 = vpop.f32.mrb[0].mxu0
        %v1053 = vadd.f32 0.0, %v1052
        %v1054 = vpop.f32.mrb[0].mxu0
        %v1055 = vadd.f32 0.0, %v1054
        %v1056 = vpop.f32.mrb[0].mxu0
        %v1057 = vadd.f32 0.0, %v1056
        %1058 = vdwg.mxu0
        %v1059 = vmax.f32 %v1008, %v1010
        %v1060 = vmax.f32 %v1012, %v1014
        %v1061 = vmax.f32 %v1051, %v1053
        %v1062 = vmax.f32 %v1055, %v1057
        %v1063 = vmax.f32 %v1059, %v1061
        %v1064 = vmax.f32 %v1060, %v1062
        %v1065 = vadd.f32 %v1063, %v841
        %v1066 = vadd.f32 %v1064, %v841
        %v1067 = vmax.f32 %v1065, 0.0
        %v1068 = vmax.f32 %v1066, 0.0
        %s1069 = scalar_lea.vmem %s423, 48 [#allocation2]
        %v1070 = vld [vmem:[%s1069] sm:$0xff]
        %v1071 = vld [vmem:[%s1069 + $0x8] sm:$0xff]
        %v1074 = vunpack.c.l.b16 %v1070
        %v1075 = vunpack.c.h.b16 %v1070
        %v1076 = vunpack.c.l.b16 %v1071
        %v1077 = vunpack.c.h.b16 %v1071
        %v1078 = vpack.c.b16 %v1076, %v1074
        %v1079 = vpack.c.b16 %v1077, %v1075
        %v1082 = vsel %vm728, %v1079, 0
        %1084 = vmatprep.subr.bf16.mxu0 %v645
        %1085 = vmatpush1.bf16.msra.mxu0 %v644
        %1086 = vmatprep.subr.bf16.mxu0 %v649
        %1087 = vmatpush1.bf16.msra.mxu0 %v648
        %1088 = vmatprep.subr.bf16.mxu0 %v653
        %1089 = vmatpush1.bf16.msra.mxu0 %v652
        %1090 = vmatprep.subr.bf16.mxu0 %v657
        %1091 = vmatpush1.bf16.msra.mxu0 %v656
        %1092 = vmatprep.subr.bf16.mxu0 %v661
        %1093 = vmatpush1.bf16.msra.mxu0 %v660
        %1094 = vmatprep.subr.bf16.mxu0 %v665
        %1095 = vmatpush1.bf16.msra.mxu0 %v664
        %1096 = vmatprep.subr.bf16.mxu0 %v669
        %1097 = vmatpush1.bf16.msra.mxu0 %v668
        %1098 = vmatprep.subr.bf16.mxu0 %v673
        %1099 = vmatpush1.bf16.msra.mxu0 %v672
        %1100 = vmatprep.subr.bf16.mxu0 %v677
        %1101 = vmatpush1.bf16.msra.mxu0 %v676
        %1102 = vmatprep.subr.bf16.mxu0 %v681
        %1103 = vmatpush1.bf16.msra.mxu0 %v680
        %1104 = vmatprep.subr.bf16.mxu0 %v737
        %1105 = vmatpush1.bf16.msra.mxu0 %v734
        %1106 = vmatprep.subr.bf16.mxu0 0
        %1107 = vmatpush1.bf16.msra.mxu0 0
        %1108 = vmatprep.subr.bf16.mxu0 0
        %1109 = vmatpush1.bf16.msra.mxu0 0
        %1110 = vmatprep.subr.bf16.mxu0 0
        %1111 = vmatpush1.bf16.msra.mxu0 0
        %1112 = vmatprep.subr.bf16.mxu0 0
        %1113 = vmatpush1.bf16.msra.mxu0 0
        %1114 = vmatprep.subr.bf16.mxu0 0
        %1115 = vmatpush1.bf16.msra.mxu0 0
        %1116 = vmatprep.mubr.bf16.mxu0 %v1082
        %1117 = vmatmul.mubr.bf16.gmra.mrb[0].mxu0 %v1078
        %v1118 = vpop.f32.mrb[0].mxu0
        %v1119 = vadd.f32 0.0, %v1118
        %v1120 = vpop.f32.mrb[0].mxu0
        %v1121 = vadd.f32 0.0, %v1120
        %v1122 = vpop.f32.mrb[0].mxu0
        %v1123 = vadd.f32 0.0, %v1122
        %v1124 = vpop.f32.mrb[0].mxu0
        %v1125 = vadd.f32 0.0, %v1124
        %1126 = vdwg.mxu0
        %1127 = vmatprep.subr.bf16.mxu0 %v647
        %1128 = vmatpush1.bf16.msra.mxu0 %v646
        %1129 = vmatprep.subr.bf16.mxu0 %v651
        %1130 = vmatpush1.bf16.msra.mxu0 %v650
        %1131 = vmatprep.subr.bf16.mxu0 %v655
        %1132 = vmatpush1.bf16.msra.mxu0 %v654
        %1133 = vmatprep.subr.bf16.mxu0 %v659
        %1134 = vmatpush1.bf16.msra.mxu0 %v658
        %1135 = vmatprep.subr.bf16.mxu0 %v663
        %1136 = vmatpush1.bf16.msra.mxu0 %v662
        %1137 = vmatprep.subr.bf16.mxu0 %v667
        %1138 = vmatpush1.bf16.msra.mxu0 %v666
        %1139 = vmatprep.subr.bf16.mxu0 %v671
        %1140 = vmatpush1.bf16.msra.mxu0 %v670
        %1141 = vmatprep.subr.bf16.mxu0 %v675
        %1142 = vmatpush1.bf16.msra.mxu0 %v674
        %1143 = vmatprep.subr.bf16.mxu0 %v679
        %1144 = vmatpush1.bf16.msra.mxu0 %v678
        %1145 = vmatprep.subr.bf16.mxu0 %v683
        %1146 = vmatpush1.bf16.msra.mxu0 %v682
        %1147 = vmatprep.subr.bf16.mxu0 %v743
        %1148 = vmatpush1.bf16.msra.mxu0 %v740
        %1149 = vmatprep.subr.bf16.mxu0 0
        %1150 = vmatpush1.bf16.msra.mxu0 0
        %1151 = vmatprep.subr.bf16.mxu0 0
        %1152 = vmatpush1.bf16.msra.mxu0 0
        %1153 = vmatprep.subr.bf16.mxu0 0
        %1154 = vmatpush1.bf16.msra.mxu0 0
        %1155 = vmatprep.subr.bf16.mxu0 0
        %1156 = vmatpush1.bf16.msra.mxu0 0
        %1157 = vmatprep.subr.bf16.mxu0 0
        %1158 = vmatpush1.bf16.msra.mxu0 0
        %1159 = vmatprep.mubr.bf16.mxu0 %v1082
        %1160 = vmatmul.mubr.bf16.gmra.mrb[0].mxu0 %v1078
        %v1161 = vpop.f32.mrb[0].mxu0
        %v1162 = vadd.f32 0.0, %v1161
        %v1163 = vpop.f32.mrb[0].mxu0
        %v1164 = vadd.f32 0.0, %v1163
        %v1165 = vpop.f32.mrb[0].mxu0
        %v1166 = vadd.f32 0.0, %v1165
        %v1167 = vpop.f32.mrb[0].mxu0
        %v1168 = vadd.f32 0.0, %v1167
        %1169 = vdwg.mxu0
        %v1170 = vmax.f32 %v1119, %v1121
        %v1171 = vmax.f32 %v1123, %v1125
        %v1172 = vmax.f32 %v1162, %v1164
        %v1173 = vmax.f32 %v1166, %v1168
        %v1174 = vmax.f32 %v1170, %v1172
        %v1175 = vmax.f32 %v1171, %v1173
        %v1176 = vadd.f32 %v1174, %v841
        %v1177 = vadd.f32 %v1175, %v841
        %v1178 = vmax.f32 %v1176, 0.0
        %v1179 = vmax.f32 %v1177, 0.0
        %s1180 = scalar_lea.vmem %s423, 64 [#allocation2]
        %v1181 = vld [vmem:[%s1180] sm:$0xff]
        %v1182 = vld [vmem:[%s1180 + $0x8] sm:$0xff]
        %v1185 = vunpack.c.l.b16 %v1181
        %v1186 = vunpack.c.h.b16 %v1181
        %v1187 = vunpack.c.l.b16 %v1182
        %v1188 = vunpack.c.h.b16 %v1182
        %v1189 = vpack.c.b16 %v1187, %v1185
        %v1190 = vpack.c.b16 %v1188, %v1186
        %v1193 = vsel %vm728, %v1190, 0
        %1195 = vmatprep.subr.bf16.mxu0 %v645
        %1196 = vmatpush1.bf16.msra.mxu0 %v644
        %1197 = vmatprep.subr.bf16.mxu0 %v649
        %1198 = vmatpush1.bf16.msra.mxu0 %v648
        %1199 = vmatprep.subr.bf16.mxu0 %v653
        %1200 = vmatpush1.bf16.msra.mxu0 %v652
        %1201 = vmatprep.subr.bf16.mxu0 %v657
        %1202 = vmatpush1.bf16.msra.mxu0 %v656
        %1203 = vmatprep.subr.bf16.mxu0 %v661
        %1204 = vmatpush1.bf16.msra.mxu0 %v660
        %1205 = vmatprep.subr.bf16.mxu0 %v665
        %1206 = vmatpush1.bf16.msra.mxu0 %v664
        %1207 = vmatprep.subr.bf16.mxu0 %v669
        %1208 = vmatpush1.bf16.msra.mxu0 %v668
        %1209 = vmatprep.subr.bf16.mxu0 %v673
        %1210 = vmatpush1.bf16.msra.mxu0 %v672
        %1211 = vmatprep.subr.bf16.mxu0 %v677
        %1212 = vmatpush1.bf16.msra.mxu0 %v676
        %1213 = vmatprep.subr.bf16.mxu0 %v681
        %1214 = vmatpush1.bf16.msra.mxu0 %v680
        %1215 = vmatprep.subr.bf16.mxu0 %v737
        %1216 = vmatpush1.bf16.msra.mxu0 %v734
        %1217 = vmatprep.subr.bf16.mxu0 0
        %1218 = vmatpush1.bf16.msra.mxu0 0
        %1219 = vmatprep.subr.bf16.mxu0 0
        %1220 = vmatpush1.bf16.msra.mxu0 0
        %1221 = vmatprep.subr.bf16.mxu0 0
        %1222 = vmatpush1.bf16.msra.mxu0 0
        %1223 = vmatprep.subr.bf16.mxu0 0
        %1224 = vmatpush1.bf16.msra.mxu0 0
        %1225 = vmatprep.subr.bf16.mxu0 0
        %1226 = vmatpush1.bf16.msra.mxu0 0
        %1227 = vmatprep.mubr.bf16.mxu0 %v1193
        %1228 = vmatmul.mubr.bf16.gmra.mrb[0].mxu0 %v1189
        %v1229 = vpop.f32.mrb[0].mxu0
        %v1230 = vadd.f32 0.0, %v1229
        %v1231 = vpop.f32.mrb[0].mxu0
        %v1232 = vadd.f32 0.0, %v1231
        %v1233 = vpop.f32.mrb[0].mxu0
        %v1234 = vadd.f32 0.0, %v1233
        %v1235 = vpop.f32.mrb[0].mxu0
        %v1236 = vadd.f32 0.0, %v1235
        %1237 = vdwg.mxu0
        %1238 = vmatprep.subr.bf16.mxu0 %v647
        %1239 = vmatpush1.bf16.msra.mxu0 %v646
        %1240 = vmatprep.subr.bf16.mxu0 %v651
        %1241 = vmatpush1.bf16.msra.mxu0 %v650
        %1242 = vmatprep.subr.bf16.mxu0 %v655
        %1243 = vmatpush1.bf16.msra.mxu0 %v654
        %1244 = vmatprep.subr.bf16.mxu0 %v659
        %1245 = vmatpush1.bf16.msra.mxu0 %v658
        %1246 = vmatprep.subr.bf16.mxu0 %v663
        %1247 = vmatpush1.bf16.msra.mxu0 %v662
        %1248 = vmatprep.subr.bf16.mxu0 %v667
        %1249 = vmatpush1.bf16.msra.mxu0 %v666
        %1250 = vmatprep.subr.bf16.mxu0 %v671
        %1251 = vmatpush1.bf16.msra.mxu0 %v670
        %1252 = vmatprep.subr.bf16.mxu0 %v675
        %1253 = vmatpush1.bf16.msra.mxu0 %v674
        %1254 = vmatprep.subr.bf16.mxu0 %v679
        %1255 = vmatpush1.bf16.msra.mxu0 %v678
        %1256 = vmatprep.subr.bf16.mxu0 %v683
        %1257 = vmatpush1.bf16.msra.mxu0 %v682
        %1258 = vmatprep.subr.bf16.mxu0 %v743
        %1259 = vmatpush1.bf16.msra.mxu0 %v740
        %1260 = vmatprep.subr.bf16.mxu0 0
        %1261 = vmatpush1.bf16.msra.mxu0 0
        %1262 = vmatprep.subr.bf16.mxu0 0
        %1263 = vmatpush1.bf16.msra.mxu0 0
        %1264 = vmatprep.subr.bf16.mxu0 0
        %1265 = vmatpush1.bf16.msra.mxu0 0
        %1266 = vmatprep.subr.bf16.mxu0 0
        %1267 = vmatpush1.bf16.msra.mxu0 0
        %1268 = vmatprep.subr.bf16.mxu0 0
        %1269 = vmatpush1.bf16.msra.mxu0 0
        %1270 = vmatprep.mubr.bf16.mxu0 %v1193
        %1271 = vmatmul.mubr.bf16.gmra.mrb[0].mxu0 %v1189
        %v1272 = vpop.f32.mrb[0].mxu0
        %v1273 = vadd.f32 0.0, %v1272
        %v1274 = vpop.f32.mrb[0].mxu0
        %v1275 = vadd.f32 0.0, %v1274
        %v1276 = vpop.f32.mrb[0].mxu0
        %v1277 = vadd.f32 0.0, %v1276
        %v1278 = vpop.f32.mrb[0].mxu0
        %v1279 = vadd.f32 0.0, %v1278
        %1280 = vdwg.mxu0
        %v1281 = vmax.f32 %v1230, %v1232
        %v1282 = vmax.f32 %v1234, %v1236
        %v1283 = vmax.f32 %v1273, %v1275
        %v1284 = vmax.f32 %v1277, %v1279
        %v1285 = vmax.f32 %v1281, %v1283
        %v1286 = vmax.f32 %v1282, %v1284
        %v1287 = vadd.f32 %v1285, %v841
        %v1288 = vadd.f32 %v1286, %v841
        %v1289 = vmax.f32 %v1287, 0.0
        %v1290 = vmax.f32 %v1288, 0.0
        %s1291 = scalar_lea.vmem %s423, 80 [#allocation2]
        %v1292 = vld [vmem:[%s1291] sm:$0xff]
        %v1293 = vld [vmem:[%s1291 + $0x8] sm:$0xff]
        %v1296 = vunpack.c.l.b16 %v1292
        %v1297 = vunpack.c.h.b16 %v1292
        %v1298 = vunpack.c.l.b16 %v1293
        %v1299 = vunpack.c.h.b16 %v1293
        %v1300 = vpack.c.b16 %v1298, %v1296
        %v1301 = vpack.c.b16 %v1299, %v1297
        %v1304 = vsel %vm728, %v1301, 0
        %1306 = vmatprep.subr.bf16.mxu0 %v645
        %1307 = vmatpush1.bf16.msra.mxu0 %v644
        %1308 = vmatprep.subr.bf16.mxu0 %v649
        %1309 = vmatpush1.bf16.msra.mxu0 %v648
        %1310 = vmatprep.subr.bf16.mxu0 %v653
        %1311 = vmatpush1.bf16.msra.mxu0 %v652
        %1312 = vmatprep.subr.bf16.mxu0 %v657
        %1313 = vmatpush1.bf16.msra.mxu0 %v656
        %1314 = vmatprep.subr.bf16.mxu0 %v661
        %1315 = vmatpush1.bf16.msra.mxu0 %v660
        %1316 = vmatprep.subr.bf16.mxu0 %v665
        %1317 = vmatpush1.bf16.msra.mxu0 %v664
        %1318 = vmatprep.subr.bf16.mxu0 %v669
        %1319 = vmatpush1.bf16.msra.mxu0 %v668
        %1320 = vmatprep.subr.bf16.mxu0 %v673
        %1321 = vmatpush1.bf16.msra.mxu0 %v672
        %1322 = vmatprep.subr.bf16.mxu0 %v677
        %1323 = vmatpush1.bf16.msra.mxu0 %v676
        %1324 = vmatprep.subr.bf16.mxu0 %v681
        %1325 = vmatpush1.bf16.msra.mxu0 %v680
        %1326 = vmatprep.subr.bf16.mxu0 %v737
        %1327 = vmatpush1.bf16.msra.mxu0 %v734
        %1328 = vmatprep.subr.bf16.mxu0 0
        %1329 = vmatpush1.bf16.msra.mxu0 0
        %1330 = vmatprep.subr.bf16.mxu0 0
        %1331 = vmatpush1.bf16.msra.mxu0 0
        %1332 = vmatprep.subr.bf16.mxu0 0
        %1333 = vmatpush1.bf16.msra.mxu0 0
        %1334 = vmatprep.subr.bf16.mxu0 0
        %1335 = vmatpush1.bf16.msra.mxu0 0
        %1336 = vmatprep.subr.bf16.mxu0 0
        %1337 = vmatpush1.bf16.msra.mxu0 0
        %1338 = vmatprep.mubr.bf16.mxu0 %v1304
        %1339 = vmatmul.mubr.bf16.gmra.mrb[0].mxu0 %v1300
        %v1340 = vpop.f32.mrb[0].mxu0
        %v1341 = vadd.f32 0.0, %v1340
        %v1342 = vpop.f32.mrb[0].mxu0
        %v1343 = vadd.f32 0.0, %v1342
        %v1344 = vpop.f32.mrb[0].mxu0
        %v1345 = vadd.f32 0.0, %v1344
        %v1346 = vpop.f32.mrb[0].mxu0
        %v1347 = vadd.f32 0.0, %v1346
        %1348 = vdwg.mxu0
        %1349 = vmatprep.subr.bf16.mxu0 %v647
        %1350 = vmatpush1.bf16.msra.mxu0 %v646
        %1351 = vmatprep.subr.bf16.mxu0 %v651
        %1352 = vmatpush1.bf16.msra.mxu0 %v650
        %1353 = vmatprep.subr.bf16.mxu0 %v655
        %1354 = vmatpush1.bf16.msra.mxu0 %v654
        %1355 = vmatprep.subr.bf16.mxu0 %v659
        %1356 = vmatpush1.bf16.msra.mxu0 %v658
        %1357 = vmatprep.subr.bf16.mxu0 %v663
        %1358 = vmatpush1.bf16.msra.mxu0 %v662
        %1359 = vmatprep.subr.bf16.mxu0 %v667
        %1360 = vmatpush1.bf16.msra.mxu0 %v666
        %1361 = vmatprep.subr.bf16.mxu0 %v671
        %1362 = vmatpush1.bf16.msra.mxu0 %v670
        %1363 = vmatprep.subr.bf16.mxu0 %v675
        %1364 = vmatpush1.bf16.msra.mxu0 %v674
        %1365 = vmatprep.subr.bf16.mxu0 %v679
        %1366 = vmatpush1.bf16.msra.mxu0 %v678
        %1367 = vmatprep.subr.bf16.mxu0 %v683
        %1368 = vmatpush1.bf16.msra.mxu0 %v682
        %1369 = vmatprep.subr.bf16.mxu0 %v743
        %1370 = vmatpush1.bf16.msra.mxu0 %v740
        %1371 = vmatprep.subr.bf16.mxu0 0
        %1372 = vmatpush1.bf16.msra.mxu0 0
        %1373 = vmatprep.subr.bf16.mxu0 0
        %1374 = vmatpush1.bf16.msra.mxu0 0
        %1375 = vmatprep.subr.bf16.mxu0 0
        %1376 = vmatpush1.bf16.msra.mxu0 0
        %1377 = vmatprep.subr.bf16.mxu0 0
        %1378 = vmatpush1.bf16.msra.mxu0 0
        %1379 = vmatprep.subr.bf16.mxu0 0
        %1380 = vmatpush1.bf16.msra.mxu0 0
        %1381 = vmatprep.mubr.bf16.mxu0 %v1304
        %1382 = vmatmul.mubr.bf16.gmra.mrb[0].mxu0 %v1300
        %v1383 = vpop.f32.mrb[0].mxu0
        %v1384 = vadd.f32 0.0, %v1383
        %v1385 = vpop.f32.mrb[0].mxu0
        %v1386 = vadd.f32 0.0, %v1385
        %v1387 = vpop.f32.mrb[0].mxu0
        %v1388 = vadd.f32 0.0, %v1387
        %v1389 = vpop.f32.mrb[0].mxu0
        %v1390 = vadd.f32 0.0, %v1389
        %1391 = vdwg.mxu0
        %v1392 = vmax.f32 %v1341, %v1343
        %v1393 = vmax.f32 %v1345, %v1347
        %v1394 = vmax.f32 %v1384, %v1386
        %v1395 = vmax.f32 %v1388, %v1390
        %v1396 = vmax.f32 %v1392, %v1394
        %v1397 = vmax.f32 %v1393, %v1395
        %v1398 = vadd.f32 %v1396, %v841
        %v1399 = vadd.f32 %v1397, %v841
        %v1400 = vmax.f32 %v1398, 0.0
        %v1401 = vmax.f32 %v1399, 0.0
        %s1402 = scalar_lea.vmem %s423, 96 [#allocation2]
        %v1403 = vld [vmem:[%s1402] sm:$0xff]
        %v1404 = vld [vmem:[%s1402 + $0x8] sm:$0xff]
        %v1407 = vunpack.c.l.b16 %v1403
        %v1408 = vunpack.c.h.b16 %v1403
        %v1409 = vunpack.c.l.b16 %v1404
        %v1410 = vunpack.c.h.b16 %v1404
        %v1411 = vpack.c.b16 %v1409, %v1407
        %v1412 = vpack.c.b16 %v1410, %v1408
        %v1415 = vsel %vm728, %v1412, 0
        %1417 = vmatprep.subr.bf16.mxu0 %v645
        %1418 = vmatpush1.bf16.msra.mxu0 %v644
        %1419 = vmatprep.subr.bf16.mxu0 %v649
        %1420 = vmatpush1.bf16.msra.mxu0 %v648
        %1421 = vmatprep.subr.bf16.mxu0 %v653
        %1422 = vmatpush1.bf16.msra.mxu0 %v652
        %1423 = vmatprep.subr.bf16.mxu0 %v657
        %1424 = vmatpush1.bf16.msra.mxu0 %v656
        %1425 = vmatprep.subr.bf16.mxu0 %v661
        %1426 = vmatpush1.bf16.msra.mxu0 %v660
        %1427 = vmatprep.subr.bf16.mxu0 %v665
        %1428 = vmatpush1.bf16.msra.mxu0 %v664
        %1429 = vmatprep.subr.bf16.mxu0 %v669
        %1430 = vmatpush1.bf16.msra.mxu0 %v668
        %1431 = vmatprep.subr.bf16.mxu0 %v673
        %1432 = vmatpush1.bf16.msra.mxu0 %v672
        %1433 = vmatprep.subr.bf16.mxu0 %v677
        %1434 = vmatpush1.bf16.msra.mxu0 %v676
        %1435 = vmatprep.subr.bf16.mxu0 %v681
        %1436 = vmatpush1.bf16.msra.mxu0 %v680
        %1437 = vmatprep.subr.bf16.mxu0 %v737
        %1438 = vmatpush1.bf16.msra.mxu0 %v734
        %1439 = vmatprep.subr.bf16.mxu0 0
        %1440 = vmatpush1.bf16.msra.mxu0 0
        %1441 = vmatprep.subr.bf16.mxu0 0
        %1442 = vmatpush1.bf16.msra.mxu0 0
        %1443 = vmatprep.subr.bf16.mxu0 0
        %1444 = vmatpush1.bf16.msra.mxu0 0
        %1445 = vmatprep.subr.bf16.mxu0 0
        %1446 = vmatpush1.bf16.msra.mxu0 0
        %1447 = vmatprep.subr.bf16.mxu0 0
        %1448 = vmatpush1.bf16.msra.mxu0 0
        %1449 = vmatprep.mubr.bf16.mxu0 %v1415
        %1450 = vmatmul.mubr.bf16.gmra.mrb[0].mxu0 %v1411
        %v1451 = vpop.f32.mrb[0].mxu0
        %v1452 = vadd.f32 0.0, %v1451
        %v1453 = vpop.f32.mrb[0].mxu0
        %v1454 = vadd.f32 0.0, %v1453
        %v1455 = vpop.f32.mrb[0].mxu0
        %v1456 = vadd.f32 0.0, %v1455
        %v1457 = vpop.f32.mrb[0].mxu0
        %v1458 = vadd.f32 0.0, %v1457
        %1459 = vdwg.mxu0
        %1460 = vmatprep.subr.bf16.mxu0 %v647
        %1461 = vmatpush1.bf16.msra.mxu0 %v646
        %1462 = vmatprep.subr.bf16.mxu0 %v651
        %1463 = vmatpush1.bf16.msra.mxu0 %v650
        %1464 = vmatprep.subr.bf16.mxu0 %v655
        %1465 = vmatpush1.bf16.msra.mxu0 %v654
        %1466 = vmatprep.subr.bf16.mxu0 %v659
        %1467 = vmatpush1.bf16.msra.mxu0 %v658
        %1468 = vmatprep.subr.bf16.mxu0 %v663
        %1469 = vmatpush1.bf16.msra.mxu0 %v662
        %1470 = vmatprep.subr.bf16.mxu0 %v667
        %1471 = vmatpush1.bf16.msra.mxu0 %v666
        %1472 = vmatprep.subr.bf16.mxu0 %v671
        %1473 = vmatpush1.bf16.msra.mxu0 %v670
        %1474 = vmatprep.subr.bf16.mxu0 %v675
        %1475 = vmatpush1.bf16.msra.mxu0 %v674
        %1476 = vmatprep.subr.bf16.mxu0 %v679
        %1477 = vmatpush1.bf16.msra.mxu0 %v678
        %1478 = vmatprep.subr.bf16.mxu0 %v683
        %1479 = vmatpush1.bf16.msra.mxu0 %v682
        %1480 = vmatprep.subr.bf16.mxu0 %v743
        %1481 = vmatpush1.bf16.msra.mxu0 %v740
        %1482 = vmatprep.subr.bf16.mxu0 0
        %1483 = vmatpush1.bf16.msra.mxu0 0
        %1484 = vmatprep.subr.bf16.mxu0 0
        %1485 = vmatpush1.bf16.msra.mxu0 0
        %1486 = vmatprep.subr.bf16.mxu0 0
        %1487 = vmatpush1.bf16.msra.mxu0 0
        %1488 = vmatprep.subr.bf16.mxu0 0
        %1489 = vmatpush1.bf16.msra.mxu0 0
        %1490 = vmatprep.subr.bf16.mxu0 0
        %1491 = vmatpush1.bf16.msra.mxu0 0
        %1492 = vmatprep.mubr.bf16.mxu0 %v1415
        %1493 = vmatmul.mubr.bf16.gmra.mrb[0].mxu0 %v1411
        %v1494 = vpop.f32.mrb[0].mxu0
        %v1495 = vadd.f32 0.0, %v1494
        %v1496 = vpop.f32.mrb[0].mxu0
        %v1497 = vadd.f32 0.0, %v1496
        %v1498 = vpop.f32.mrb[0].mxu0
        %v1499 = vadd.f32 0.0, %v1498
        %v1500 = vpop.f32.mrb[0].mxu0
        %v1501 = vadd.f32 0.0, %v1500
        %1502 = vdwg.mxu0
        %v1503 = vmax.f32 %v1452, %v1454
        %v1504 = vmax.f32 %v1456, %v1458
        %v1505 = vmax.f32 %v1495, %v1497
        %v1506 = vmax.f32 %v1499, %v1501
        %v1507 = vmax.f32 %v1503, %v1505
        %v1508 = vmax.f32 %v1504, %v1506
        %v1509 = vadd.f32 %v1507, %v841
        %v1510 = vadd.f32 %v1508, %v841
        %v1511 = vmax.f32 %v1509, 0.0
        %v1512 = vmax.f32 %v1510, 0.0
        %s1513 = scalar_lea.vmem %s423, 112 [#allocation2]
        %v1514 = vld [vmem:[%s1513] sm:$0xff]
        %v1515 = vld [vmem:[%s1513 + $0x8] sm:$0xff]
        %v1518 = vunpack.c.l.b16 %v1514
        %v1519 = vunpack.c.h.b16 %v1514
        %v1520 = vunpack.c.l.b16 %v1515
        %v1521 = vunpack.c.h.b16 %v1515
        %v1522 = vpack.c.b16 %v1520, %v1518
        %v1523 = vpack.c.b16 %v1521, %v1519
        %v1526 = vsel %vm728, %v1523, 0
        %1528 = vmatprep.subr.bf16.mxu0 %v645
        %1529 = vmatpush1.bf16.msra.mxu0 %v644
        %1530 = vmatprep.subr.bf16.mxu0 %v649
        %1531 = vmatpush1.bf16.msra.mxu0 %v648
        %1532 = vmatprep.subr.bf16.mxu0 %v653
        %1533 = vmatpush1.bf16.msra.mxu0 %v652
        %1534 = vmatprep.subr.bf16.mxu0 %v657
        %1535 = vmatpush1.bf16.msra.mxu0 %v656
        %1536 = vmatprep.subr.bf16.mxu0 %v661
        %1537 = vmatpush1.bf16.msra.mxu0 %v660
        %1538 = vmatprep.subr.bf16.mxu0 %v665
        %1539 = vmatpush1.bf16.msra.mxu0 %v664
        %1540 = vmatprep.subr.bf16.mxu0 %v669
        %1541 = vmatpush1.bf16.msra.mxu0 %v668
        %1542 = vmatprep.subr.bf16.mxu0 %v673
        %1543 = vmatpush1.bf16.msra.mxu0 %v672
        %1544 = vmatprep.subr.bf16.mxu0 %v677
        %1545 = vmatpush1.bf16.msra.mxu0 %v676
        %1546 = vmatprep.subr.bf16.mxu0 %v681
        %1547 = vmatpush1.bf16.msra.mxu0 %v680
        %1548 = vmatprep.subr.bf16.mxu0 %v737
        %1549 = vmatpush1.bf16.msra.mxu0 %v734
        %1550 = vmatprep.subr.bf16.mxu0 0
        %1551 = vmatpush1.bf16.msra.mxu0 0
        %1552 = vmatprep.subr.bf16.mxu0 0
        %1553 = vmatpush1.bf16.msra.mxu0 0
        %1554 = vmatprep.subr.bf16.mxu0 0
        %1555 = vmatpush1.bf16.msra.mxu0 0
        %1556 = vmatprep.subr.bf16.mxu0 0
        %1557 = vmatpush1.bf16.msra.mxu0 0
        %1558 = vmatprep.subr.bf16.mxu0 0
        %1559 = vmatpush1.bf16.msra.mxu0 0
        %1560 = vmatprep.mubr.bf16.mxu0 %v1526
        %1561 = vmatmul.mubr.bf16.gmra.mrb[0].mxu0 %v1522
        %v1562 = vpop.f32.mrb[0].mxu0
        %v1563 = vadd.f32 0.0, %v1562
        %v1564 = vpop.f32.mrb[0].mxu0
        %v1565 = vadd.f32 0.0, %v1564
        %v1566 = vpop.f32.mrb[0].mxu0
        %v1567 = vadd.f32 0.0, %v1566
        %v1568 = vpop.f32.mrb[0].mxu0
        %v1569 = vadd.f32 0.0, %v1568
        %1570 = vdwg.mxu0
        %1571 = vmatprep.subr.bf16.mxu0 %v647
        %1572 = vmatpush1.bf16.msra.mxu0 %v646
        %1573 = vmatprep.subr.bf16.mxu0 %v651
        %1574 = vmatpush1.bf16.msra.mxu0 %v650
        %1575 = vmatprep.subr.bf16.mxu0 %v655
        %1576 = vmatpush1.bf16.msra.mxu0 %v654
        %1577 = vmatprep.subr.bf16.mxu0 %v659
        %1578 = vmatpush1.bf16.msra.mxu0 %v658
        %1579 = vmatprep.subr.bf16.mxu0 %v663
        %1580 = vmatpush1.bf16.msra.mxu0 %v662
        %1581 = vmatprep.subr.bf16.mxu0 %v667
        %1582 = vmatpush1.bf16.msra.mxu0 %v666
        %1583 = vmatprep.subr.bf16.mxu0 %v671
        %1584 = vmatpush1.bf16.msra.mxu0 %v670
        %1585 = vmatprep.subr.bf16.mxu0 %v675
        %1586 = vmatpush1.bf16.msra.mxu0 %v674
        %1587 = vmatprep.subr.bf16.mxu0 %v679
        %1588 = vmatpush1.bf16.msra.mxu0 %v678
        %1589 = vmatprep.subr.bf16.mxu0 %v683
        %1590 = vmatpush1.bf16.msra.mxu0 %v682
        %1591 = vmatprep.subr.bf16.mxu0 %v743
        %1592 = vmatpush1.bf16.msra.mxu0 %v740
        %1593 = vmatprep.subr.bf16.mxu0 0
        %1594 = vmatpush1.bf16.msra.mxu0 0
        %1595 = vmatprep.subr.bf16.mxu0 0
        %1596 = vmatpush1.bf16.msra.mxu0 0
        %1597 = vmatprep.subr.bf16.mxu0 0
        %1598 = vmatpush1.bf16.msra.mxu0 0
        %1599 = vmatprep.subr.bf16.mxu0 0
        %1600 = vmatpush1.bf16.msra.mxu0 0
        %1601 = vmatprep.subr.bf16.mxu0 0
        %1602 = vmatpush1.bf16.msra.mxu0 0
        %1603 = vmatprep.mubr.bf16.mxu0 %v1526
        %1604 = vmatmul.mubr.bf16.gmra.mrb[0].mxu0 %v1522
        %v1605 = vpop.f32.mrb[0].mxu0
        %v1606 = vadd.f32 0.0, %v1605
        %v1607 = vpop.f32.mrb[0].mxu0
        %v1608 = vadd.f32 0.0, %v1607
        %v1609 = vpop.f32.mrb[0].mxu0
        %v1610 = vadd.f32 0.0, %v1609
        %v1611 = vpop.f32.mrb[0].mxu0
        %v1612 = vadd.f32 0.0, %v1611
        %1613 = vdwg.mxu0
        %v1614 = vmax.f32 %v1563, %v1565
        %v1615 = vmax.f32 %v1567, %v1569
        %v1616 = vmax.f32 %v1606, %v1608
        %v1617 = vmax.f32 %v1610, %v1612
        %v1618 = vmax.f32 %v1614, %v1616
        %v1619 = vmax.f32 %v1615, %v1617
        %v1620 = vadd.f32 %v1618, %v841
        %v1621 = vadd.f32 %v1619, %v841
        %v1622 = vmax.f32 %v1620, 0.0
        %v1623 = vmax.f32 %v1621, 0.0
        %s1624 = scalar_lea.vmem %s423, 128 [#allocation2]
        %v1625 = vld [vmem:[%s1624] sm:$0xff]
        %v1626 = vld [vmem:[%s1624 + $0x8] sm:$0xff]
        %v1629 = vunpack.c.l.b16 %v1625
        %v1630 = vunpack.c.h.b16 %v1625
        %v1631 = vunpack.c.l.b16 %v1626
        %v1632 = vunpack.c.h.b16 %v1626
        %v1633 = vpack.c.b16 %v1631, %v1629
        %v1634 = vpack.c.b16 %v1632, %v1630
        %v1637 = vsel %vm728, %v1634, 0
        %1639 = vmatprep.subr.bf16.mxu0 %v645
        %1640 = vmatpush1.bf16.msra.mxu0 %v644
        %1641 = vmatprep.subr.bf16.mxu0 %v649
        %1642 = vmatpush1.bf16.msra.mxu0 %v648
        %1643 = vmatprep.subr.bf16.mxu0 %v653
        %1644 = vmatpush1.bf16.msra.mxu0 %v652
        %1645 = vmatprep.subr.bf16.mxu0 %v657
        %1646 = vmatpush1.bf16.msra.mxu0 %v656
        %1647 = vmatprep.subr.bf16.mxu0 %v661
        %1648 = vmatpush1.bf16.msra.mxu0 %v660
        %1649 = vmatprep.subr.bf16.mxu0 %v665
        %1650 = vmatpush1.bf16.msra.mxu0 %v664
        %1651 = vmatprep.subr.bf16.mxu0 %v669
        %1652 = vmatpush1.bf16.msra.mxu0 %v668
        %1653 = vmatprep.subr.bf16.mxu0 %v673
        %1654 = vmatpush1.bf16.msra.mxu0 %v672
        %1655 = vmatprep.subr.bf16.mxu0 %v677
        %1656 = vmatpush1.bf16.msra.mxu0 %v676
        %1657 = vmatprep.subr.bf16.mxu0 %v681
        %1658 = vmatpush1.bf16.msra.mxu0 %v680
        %1659 = vmatprep.subr.bf16.mxu0 %v737
        %1660 = vmatpush1.bf16.msra.mxu0 %v734
        %1661 = vmatprep.subr.bf16.mxu0 0
        %1662 = vmatpush1.bf16.msra.mxu0 0
        %1663 = vmatprep.subr.bf16.mxu0 0
        %1664 = vmatpush1.bf16.msra.mxu0 0
        %1665 = vmatprep.subr.bf16.mxu0 0
        %1666 = vmatpush1.bf16.msra.mxu0 0
        %1667 = vmatprep.subr.bf16.mxu0 0
        %1668 = vmatpush1.bf16.msra.mxu0 0
        %1669 = vmatprep.subr.bf16.mxu0 0
        %1670 = vmatpush1.bf16.msra.mxu0 0
        %1671 = vmatprep.mubr.bf16.mxu0 %v1637
        %1672 = vmatmul.mubr.bf16.gmra.mrb[0].mxu0 %v1633
        %v1673 = vpop.f32.mrb[0].mxu0
        %v1674 = vadd.f32 0.0, %v1673
        %v1675 = vpop.f32.mrb[0].mxu0
        %v1676 = vadd.f32 0.0, %v1675
        %v1677 = vpop.f32.mrb[0].mxu0
        %v1678 = vadd.f32 0.0, %v1677
        %v1679 = vpop.f32.mrb[0].mxu0
        %v1680 = vadd.f32 0.0, %v1679
        %1681 = vdwg.mxu0
        %1682 = vmatprep.subr.bf16.mxu0 %v647
        %1683 = vmatpush1.bf16.msra.mxu0 %v646
        %1684 = vmatprep.subr.bf16.mxu0 %v651
        %1685 = vmatpush1.bf16.msra.mxu0 %v650
        %1686 = vmatprep.subr.bf16.mxu0 %v655
        %1687 = vmatpush1.bf16.msra.mxu0 %v654
        %1688 = vmatprep.subr.bf16.mxu0 %v659
        %1689 = vmatpush1.bf16.msra.mxu0 %v658
        %1690 = vmatprep.subr.bf16.mxu0 %v663
        %1691 = vmatpush1.bf16.msra.mxu0 %v662
        %1692 = vmatprep.subr.bf16.mxu0 %v667
        %1693 = vmatpush1.bf16.msra.mxu0 %v666
        %1694 = vmatprep.subr.bf16.mxu0 %v671
        %1695 = vmatpush1.bf16.msra.mxu0 %v670
        %1696 = vmatprep.subr.bf16.mxu0 %v675
        %1697 = vmatpush1.bf16.msra.mxu0 %v674
        %1698 = vmatprep.subr.bf16.mxu0 %v679
        %1699 = vmatpush1.bf16.msra.mxu0 %v678
        %1700 = vmatprep.subr.bf16.mxu0 %v683
        %1701 = vmatpush1.bf16.msra.mxu0 %v682
        %1702 = vmatprep.subr.bf16.mxu0 %v743
        %1703 = vmatpush1.bf16.msra.mxu0 %v740
        %1704 = vmatprep.subr.bf16.mxu0 0
        %1705 = vmatpush1.bf16.msra.mxu0 0
        %1706 = vmatprep.subr.bf16.mxu0 0
        %1707 = vmatpush1.bf16.msra.mxu0 0
        %1708 = vmatprep.subr.bf16.mxu0 0
        %1709 = vmatpush1.bf16.msra.mxu0 0
        %1710 = vmatprep.subr.bf16.mxu0 0
        %1711 = vmatpush1.bf16.msra.mxu0 0
        %1712 = vmatprep.subr.bf16.mxu0 0
        %1713 = vmatpush1.bf16.msra.mxu0 0
        %1714 = vmatprep.mubr.bf16.mxu0 %v1637
        %1715 = vmatmul.mubr.bf16.gmra.mrb[0].mxu0 %v1633
        %v1716 = vpop.f32.mrb[0].mxu0
        %v1717 = vadd.f32 0.0, %v1716
        %v1718 = vpop.f32.mrb[0].mxu0
        %v1719 = vadd.f32 0.0, %v1718
        %v1720 = vpop.f32.mrb[0].mxu0
        %v1721 = vadd.f32 0.0, %v1720
        %v1722 = vpop.f32.mrb[0].mxu0
        %v1723 = vadd.f32 0.0, %v1722
        %1724 = vdwg.mxu0
        %v1725 = vmax.f32 %v1674, %v1676
        %v1726 = vmax.f32 %v1678, %v1680
        %v1727 = vmax.f32 %v1717, %v1719
        %v1728 = vmax.f32 %v1721, %v1723
        %v1729 = vmax.f32 %v1725, %v1727
        %v1730 = vmax.f32 %v1726, %v1728
        %v1731 = vadd.f32 %v1729, %v841
        %v1732 = vadd.f32 %v1730, %v841
        %v1733 = vmax.f32 %v1731, 0.0
        %v1734 = vmax.f32 %v1732, 0.0
        %s1735 = scalar_lea.vmem %s423, 144 [#allocation2]
        %v1736 = vld [vmem:[%s1735] sm:$0xff]
        %v1737 = vld [vmem:[%s1735 + $0x8] sm:$0xff]
        %v1740 = vunpack.c.l.b16 %v1736
        %v1741 = vunpack.c.h.b16 %v1736
        %v1742 = vunpack.c.l.b16 %v1737
        %v1743 = vunpack.c.h.b16 %v1737
        %v1744 = vpack.c.b16 %v1742, %v1740
        %v1745 = vpack.c.b16 %v1743, %v1741
        %v1748 = vsel %vm728, %v1745, 0
        %1750 = vmatprep.subr.bf16.mxu0 %v645
        %1751 = vmatpush1.bf16.msra.mxu0 %v644
        %1752 = vmatprep.subr.bf16.mxu0 %v649
        %1753 = vmatpush1.bf16.msra.mxu0 %v648
        %1754 = vmatprep.subr.bf16.mxu0 %v653
        %1755 = vmatpush1.bf16.msra.mxu0 %v652
        %1756 = vmatprep.subr.bf16.mxu0 %v657
        %1757 = vmatpush1.bf16.msra.mxu0 %v656
        %1758 = vmatprep.subr.bf16.mxu0 %v661
        %1759 = vmatpush1.bf16.msra.mxu0 %v660
        %1760 = vmatprep.subr.bf16.mxu0 %v665
        %1761 = vmatpush1.bf16.msra.mxu0 %v664
        %1762 = vmatprep.subr.bf16.mxu0 %v669
        %1763 = vmatpush1.bf16.msra.mxu0 %v668
        %1764 = vmatprep.subr.bf16.mxu0 %v673
        %1765 = vmatpush1.bf16.msra.mxu0 %v672
        %1766 = vmatprep.subr.bf16.mxu0 %v677
        %1767 = vmatpush1.bf16.msra.mxu0 %v676
        %1768 = vmatprep.subr.bf16.mxu0 %v681
        %1769 = vmatpush1.bf16.msra.mxu0 %v680
        %1770 = vmatprep.subr.bf16.mxu0 %v737
        %1771 = vmatpush1.bf16.msra.mxu0 %v734
        %1772 = vmatprep.subr.bf16.mxu0 0
        %1773 = vmatpush1.bf16.msra.mxu0 0
        %1774 = vmatprep.subr.bf16.mxu0 0
        %1775 = vmatpush1.bf16.msra.mxu0 0
        %1776 = vmatprep.subr.bf16.mxu0 0
        %1777 = vmatpush1.bf16.msra.mxu0 0
        %1778 = vmatprep.subr.bf16.mxu0 0
        %1779 = vmatpush1.bf16.msra.mxu0 0
        %1780 = vmatprep.subr.bf16.mxu0 0
        %1781 = vmatpush1.bf16.msra.mxu0 0
        %1782 = vmatprep.mubr.bf16.mxu0 %v1748
        %1783 = vmatmul.mubr.bf16.gmra.mrb[0].mxu0 %v1744
        %v1784 = vpop.f32.mrb[0].mxu0
        %v1785 = vadd.f32 0.0, %v1784
        %v1786 = vpop.f32.mrb[0].mxu0
        %v1787 = vadd.f32 0.0, %v1786
        %v1788 = vpop.f32.mrb[0].mxu0
        %v1789 = vadd.f32 0.0, %v1788
        %v1790 = vpop.f32.mrb[0].mxu0
        %v1791 = vadd.f32 0.0, %v1790
        %1792 = vdwg.mxu0
        %1793 = vmatprep.subr.bf16.mxu0 %v647
        %1794 = vmatpush1.bf16.msra.mxu0 %v646
        %1795 = vmatprep.subr.bf16.mxu0 %v651
        %1796 = vmatpush1.bf16.msra.mxu0 %v650
        %1797 = vmatprep.subr.bf16.mxu0 %v655
        %1798 = vmatpush1.bf16.msra.mxu0 %v654
        %1799 = vmatprep.subr.bf16.mxu0 %v659
        %1800 = vmatpush1.bf16.msra.mxu0 %v658
        %1801 = vmatprep.subr.bf16.mxu0 %v663
        %1802 = vmatpush1.bf16.msra.mxu0 %v662
        %1803 = vmatprep.subr.bf16.mxu0 %v667
        %1804 = vmatpush1.bf16.msra.mxu0 %v666
        %1805 = vmatprep.subr.bf16.mxu0 %v671
        %1806 = vmatpush1.bf16.msra.mxu0 %v670
        %1807 = vmatprep.subr.bf16.mxu0 %v675
        %1808 = vmatpush1.bf16.msra.mxu0 %v674
        %1809 = vmatprep.subr.bf16.mxu0 %v679
        %1810 = vmatpush1.bf16.msra.mxu0 %v678
        %1811 = vmatprep.subr.bf16.mxu0 %v683
        %1812 = vmatpush1.bf16.msra.mxu0 %v682
        %1813 = vmatprep.subr.bf16.mxu0 %v743
        %1814 = vmatpush1.bf16.msra.mxu0 %v740
        %1815 = vmatprep.subr.bf16.mxu0 0
        %1816 = vmatpush1.bf16.msra.mxu0 0
        %1817 = vmatprep.subr.bf16.mxu0 0
        %1818 = vmatpush1.bf16.msra.mxu0 0
        %1819 = vmatprep.subr.bf16.mxu0 0
        %1820 = vmatpush1.bf16.msra.mxu0 0
        %1821 = vmatprep.subr.bf16.mxu0 0
        %1822 = vmatpush1.bf16.msra.mxu0 0
        %1823 = vmatprep.subr.bf16.mxu0 0
        %1824 = vmatpush1.bf16.msra.mxu0 0
        %1825 = vmatprep.mubr.bf16.mxu0 %v1748
        %1826 = vmatmul.mubr.bf16.gmra.mrb[0].mxu0 %v1744
        %v1827 = vpop.f32.mrb[0].mxu0
        %v1828 = vadd.f32 0.0, %v1827
        %v1829 = vpop.f32.mrb[0].mxu0
        %v1830 = vadd.f32 0.0, %v1829
        %v1831 = vpop.f32.mrb[0].mxu0
        %v1832 = vadd.f32 0.0, %v1831
        %v1833 = vpop.f32.mrb[0].mxu0
        %v1834 = vadd.f32 0.0, %v1833
        %1835 = vdwg.mxu0
        %v1836 = vmax.f32 %v1785, %v1787
        %v1837 = vmax.f32 %v1789, %v1791
        %v1838 = vmax.f32 %v1828, %v1830
        %v1839 = vmax.f32 %v1832, %v1834
        %v1840 = vmax.f32 %v1836, %v1838
        %v1841 = vmax.f32 %v1837, %v1839
        %v1842 = vadd.f32 %v1840, %v841
        %v1843 = vadd.f32 %v1841, %v841
        %v1844 = vmax.f32 %v1842, 0.0
        %v1845 = vmax.f32 %v1843, 0.0
        %s1846 = scalar_lea.vmem %s423, 160 [#allocation2]
        %v1847 = vld [vmem:[%s1846] sm:$0xff]
        %v1848 = vld [vmem:[%s1846 + $0x8] sm:$0xff]
        %v1851 = vunpack.c.l.b16 %v1847
        %v1852 = vunpack.c.h.b16 %v1847
        %v1853 = vunpack.c.l.b16 %v1848
        %v1854 = vunpack.c.h.b16 %v1848
        %v1855 = vpack.c.b16 %v1853, %v1851
        %v1856 = vpack.c.b16 %v1854, %v1852
        %v1859 = vsel %vm728, %v1856, 0
        %1861 = vmatprep.subr.bf16.mxu0 %v645
        %1862 = vmatpush1.bf16.msra.mxu0 %v644
        %1863 = vmatprep.subr.bf16.mxu0 %v649
        %1864 = vmatpush1.bf16.msra.mxu0 %v648
        %1865 = vmatprep.subr.bf16.mxu0 %v653
        %1866 = vmatpush1.bf16.msra.mxu0 %v652
        %1867 = vmatprep.subr.bf16.mxu0 %v657
        %1868 = vmatpush1.bf16.msra.mxu0 %v656
        %1869 = vmatprep.subr.bf16.mxu0 %v661
        %1870 = vmatpush1.bf16.msra.mxu0 %v660
        %1871 = vmatprep.subr.bf16.mxu0 %v665
        %1872 = vmatpush1.bf16.msra.mxu0 %v664
        %1873 = vmatprep.subr.bf16.mxu0 %v669
        %1874 = vmatpush1.bf16.msra.mxu0 %v668
        %1875 = vmatprep.subr.bf16.mxu0 %v673
        %1876 = vmatpush1.bf16.msra.mxu0 %v672
        %1877 = vmatprep.subr.bf16.mxu0 %v677
        %1878 = vmatpush1.bf16.msra.mxu0 %v676
        %1879 = vmatprep.subr.bf16.mxu0 %v681
        %1880 = vmatpush1.bf16.msra.mxu0 %v680
        %1881 = vmatprep.subr.bf16.mxu0 %v737
        %1882 = vmatpush1.bf16.msra.mxu0 %v734
        %1883 = vmatprep.subr.bf16.mxu0 0
        %1884 = vmatpush1.bf16.msra.mxu0 0
        %1885 = vmatprep.subr.bf16.mxu0 0
        %1886 = vmatpush1.bf16.msra.mxu0 0
        %1887 = vmatprep.subr.bf16.mxu0 0
        %1888 = vmatpush1.bf16.msra.mxu0 0
        %1889 = vmatprep.subr.bf16.mxu0 0
        %1890 = vmatpush1.bf16.msra.mxu0 0
        %1891 = vmatprep.subr.bf16.mxu0 0
        %1892 = vmatpush1.bf16.msra.mxu0 0
        %1893 = vmatprep.mubr.bf16.mxu0 %v1859
        %1894 = vmatmul.mubr.bf16.gmra.mrb[0].mxu0 %v1855
        %v1895 = vpop.f32.mrb[0].mxu0
        %v1896 = vadd.f32 0.0, %v1895
        %v1897 = vpop.f32.mrb[0].mxu0
        %v1898 = vadd.f32 0.0, %v1897
        %v1899 = vpop.f32.mrb[0].mxu0
        %v1900 = vadd.f32 0.0, %v1899
        %v1901 = vpop.f32.mrb[0].mxu0
        %v1902 = vadd.f32 0.0, %v1901
        %1903 = vdwg.mxu0
        %1904 = vmatprep.subr.bf16.mxu0 %v647
        %1905 = vmatpush1.bf16.msra.mxu0 %v646
        %1906 = vmatprep.subr.bf16.mxu0 %v651
        %1907 = vmatpush1.bf16.msra.mxu0 %v650
        %1908 = vmatprep.subr.bf16.mxu0 %v655
        %1909 = vmatpush1.bf16.msra.mxu0 %v654
        %1910 = vmatprep.subr.bf16.mxu0 %v659
        %1911 = vmatpush1.bf16.msra.mxu0 %v658
        %1912 = vmatprep.subr.bf16.mxu0 %v663
        %1913 = vmatpush1.bf16.msra.mxu0 %v662
        %1914 = vmatprep.subr.bf16.mxu0 %v667
        %1915 = vmatpush1.bf16.msra.mxu0 %v666
        %1916 = vmatprep.subr.bf16.mxu0 %v671
        %1917 = vmatpush1.bf16.msra.mxu0 %v670
        %1918 = vmatprep.subr.bf16.mxu0 %v675
        %1919 = vmatpush1.bf16.msra.mxu0 %v674
        %1920 = vmatprep.subr.bf16.mxu0 %v679
        %1921 = vmatpush1.bf16.msra.mxu0 %v678
        %1922 = vmatprep.subr.bf16.mxu0 %v683
        %1923 = vmatpush1.bf16.msra.mxu0 %v682
        %1924 = vmatprep.subr.bf16.mxu0 %v743
        %1925 = vmatpush1.bf16.msra.mxu0 %v740
        %1926 = vmatprep.subr.bf16.mxu0 0
        %1927 = vmatpush1.bf16.msra.mxu0 0
        %1928 = vmatprep.subr.bf16.mxu0 0
        %1929 = vmatpush1.bf16.msra.mxu0 0
        %1930 = vmatprep.subr.bf16.mxu0 0
        %1931 = vmatpush1.bf16.msra.mxu0 0
        %1932 = vmatprep.subr.bf16.mxu0 0
        %1933 = vmatpush1.bf16.msra.mxu0 0
        %1934 = vmatprep.subr.bf16.mxu0 0
        %1935 = vmatpush1.bf16.msra.mxu0 0
        %1936 = vmatprep.mubr.bf16.mxu0 %v1859
        %1937 = vmatmul.mubr.bf16.gmra.mrb[0].mxu0 %v1855
        %v1938 = vpop.f32.mrb[0].mxu0
        %v1939 = vadd.f32 0.0, %v1938
        %v1940 = vpop.f32.mrb[0].mxu0
        %v1941 = vadd.f32 0.0, %v1940
        %v1942 = vpop.f32.mrb[0].mxu0
        %v1943 = vadd.f32 0.0, %v1942
        %v1944 = vpop.f32.mrb[0].mxu0
        %v1945 = vadd.f32 0.0, %v1944
        %1946 = vdwg.mxu0
        %v1947 = vmax.f32 %v1896, %v1898
        %v1948 = vmax.f32 %v1900, %v1902
        %v1949 = vmax.f32 %v1939, %v1941
        %v1950 = vmax.f32 %v1943, %v1945
        %v1951 = vmax.f32 %v1947, %v1949
        %v1952 = vmax.f32 %v1948, %v1950
        %v1953 = vadd.f32 %v1951, %v841
        %v1954 = vadd.f32 %v1952, %v841
        %v1955 = vmax.f32 %v1953, 0.0
        %v1956 = vmax.f32 %v1954, 0.0
        %s1957 = scalar_lea.vmem %s423, 176 [#allocation2]
        %v1958 = vld [vmem:[%s1957] sm:$0xff]
        %v1959 = vld [vmem:[%s1957 + $0x8] sm:$0xff]
        %v1962 = vunpack.c.l.b16 %v1958
        %v1963 = vunpack.c.h.b16 %v1958
        %v1964 = vunpack.c.l.b16 %v1959
        %v1965 = vunpack.c.h.b16 %v1959
        %v1966 = vpack.c.b16 %v1964, %v1962
        %v1967 = vpack.c.b16 %v1965, %v1963
        %v1970 = vsel %vm728, %v1967, 0
        %1972 = vmatprep.subr.bf16.mxu0 %v645
        %1973 = vmatpush1.bf16.msra.mxu0 %v644
        %1974 = vmatprep.subr.bf16.mxu0 %v649
        %1975 = vmatpush1.bf16.msra.mxu0 %v648
        %1976 = vmatprep.subr.bf16.mxu0 %v653
        %1977 = vmatpush1.bf16.msra.mxu0 %v652
        %1978 = vmatprep.subr.bf16.mxu0 %v657
        %1979 = vmatpush1.bf16.msra.mxu0 %v656
        %1980 = vmatprep.subr.bf16.mxu0 %v661
        %1981 = vmatpush1.bf16.msra.mxu0 %v660
        %1982 = vmatprep.subr.bf16.mxu0 %v665
        %1983 = vmatpush1.bf16.msra.mxu0 %v664
        %1984 = vmatprep.subr.bf16.mxu0 %v669
        %1985 = vmatpush1.bf16.msra.mxu0 %v668
        %1986 = vmatprep.subr.bf16.mxu0 %v673
        %1987 = vmatpush1.bf16.msra.mxu0 %v672
        %1988 = vmatprep.subr.bf16.mxu0 %v677
        %1989 = vmatpush1.bf16.msra.mxu0 %v676
        %1990 = vmatprep.subr.bf16.mxu0 %v681
        %1991 = vmatpush1.bf16.msra.mxu0 %v680
        %1992 = vmatprep.subr.bf16.mxu0 %v737
        %1993 = vmatpush1.bf16.msra.mxu0 %v734
        %1994 = vmatprep.subr.bf16.mxu0 0
        %1995 = vmatpush1.bf16.msra.mxu0 0
        %1996 = vmatprep.subr.bf16.mxu0 0
        %1997 = vmatpush1.bf16.msra.mxu0 0
        %1998 = vmatprep.subr.bf16.mxu0 0
        %1999 = vmatpush1.bf16.msra.mxu0 0
        %2000 = vmatprep.subr.bf16.mxu0 0
        %2001 = vmatpush1.bf16.msra.mxu0 0
        %2002 = vmatprep.subr.bf16.mxu0 0
        %2003 = vmatpush1.bf16.msra.mxu0 0
        %2004 = vmatprep.mubr.bf16.mxu0 %v1970
        %2005 = vmatmul.mubr.bf16.gmra.mrb[0].mxu0 %v1966
        %v2006 = vpop.f32.mrb[0].mxu0
        %v2007 = vadd.f32 0.0, %v2006
        %v2008 = vpop.f32.mrb[0].mxu0
        %v2009 = vadd.f32 0.0, %v2008
        %v2010 = vpop.f32.mrb[0].mxu0
        %v2011 = vadd.f32 0.0, %v2010
        %v2012 = vpop.f32.mrb[0].mxu0
        %v2013 = vadd.f32 0.0, %v2012
        %2014 = vdwg.mxu0
        %2015 = vmatprep.subr.bf16.mxu0 %v647
        %2016 = vmatpush1.bf16.msra.mxu0 %v646
        %2017 = vmatprep.subr.bf16.mxu0 %v651
        %2018 = vmatpush1.bf16.msra.mxu0 %v650
        %2019 = vmatprep.subr.bf16.mxu0 %v655
        %2020 = vmatpush1.bf16.msra.mxu0 %v654
        %2021 = vmatprep.subr.bf16.mxu0 %v659
        %2022 = vmatpush1.bf16.msra.mxu0 %v658
        %2023 = vmatprep.subr.bf16.mxu0 %v663
        %2024 = vmatpush1.bf16.msra.mxu0 %v662
        %2025 = vmatprep.subr.bf16.mxu0 %v667
        %2026 = vmatpush1.bf16.msra.mxu0 %v666
        %2027 = vmatprep.subr.bf16.mxu0 %v671
        %2028 = vmatpush1.bf16.msra.mxu0 %v670
        %2029 = vmatprep.subr.bf16.mxu0 %v675
        %2030 = vmatpush1.bf16.msra.mxu0 %v674
        %2031 = vmatprep.subr.bf16.mxu0 %v679
        %2032 = vmatpush1.bf16.msra.mxu0 %v678
        %2033 = vmatprep.subr.bf16.mxu0 %v683
        %2034 = vmatpush1.bf16.msra.mxu0 %v682
        %2035 = vmatprep.subr.bf16.mxu0 %v743
        %2036 = vmatpush1.bf16.msra.mxu0 %v740
        %2037 = vmatprep.subr.bf16.mxu0 0
        %2038 = vmatpush1.bf16.msra.mxu0 0
        %2039 = vmatprep.subr.bf16.mxu0 0
        %2040 = vmatpush1.bf16.msra.mxu0 0
        %2041 = vmatprep.subr.bf16.mxu0 0
        %2042 = vmatpush1.bf16.msra.mxu0 0
        %2043 = vmatprep.subr.bf16.mxu0 0
        %2044 = vmatpush1.bf16.msra.mxu0 0
        %2045 = vmatprep.subr.bf16.mxu0 0
        %2046 = vmatpush1.bf16.msra.mxu0 0
        %2047 = vmatprep.mubr.bf16.mxu0 %v1970
        %2048 = vmatmul.mubr.bf16.gmra.mrb[0].mxu0 %v1966
        %v2049 = vpop.f32.mrb[0].mxu0
        %v2050 = vadd.f32 0.0, %v2049
        %v2051 = vpop.f32.mrb[0].mxu0
        %v2052 = vadd.f32 0.0, %v2051
        %v2053 = vpop.f32.mrb[0].mxu0
        %v2054 = vadd.f32 0.0, %v2053
        %v2055 = vpop.f32.mrb[0].mxu0
        %v2056 = vadd.f32 0.0, %v2055
        %2057 = vdwg.mxu0
        %v2058 = vmax.f32 %v2007, %v2009
        %v2059 = vmax.f32 %v2011, %v2013
        %v2060 = vmax.f32 %v2050, %v2052
        %v2061 = vmax.f32 %v2054, %v2056
        %v2062 = vmax.f32 %v2058, %v2060
        %v2063 = vmax.f32 %v2059, %v2061
        %v2064 = vadd.f32 %v2062, %v841
        %v2065 = vadd.f32 %v2063, %v841
        %v2066 = vmax.f32 %v2064, 0.0
        %v2067 = vmax.f32 %v2065, 0.0
        %v2068 = vpack.c.bf16 %v846, %v845
        %v2069 = vpack.c.bf16 %v957, %v956
        %v2070 = vpack.c.bf16 %v1068, %v1067
        %v2071 = vpack.c.bf16 %v1179, %v1178
        %v2072 = vpack.c.bf16 %v1290, %v1289
        %v2073 = vpack.c.bf16 %v1401, %v1400
        %v2074 = vpack.c.bf16 %v1512, %v1511
        %v2075 = vpack.c.bf16 %v1623, %v1622
        %v2076 = vpack.c.bf16 %v1734, %v1733
        %v2077 = vpack.c.bf16 %v1845, %v1844
        %v2078 = vpack.c.bf16 %v1956, %v1955
        %v2079 = vpack.c.bf16 %v2067, %v2066
        %v2080 = vld [vmem:[%s3] sm:$0xff]
        %v2081 = vld [vmem:[%s3 + $0x8] sm:$0xff]
        %v2082 = vld [vmem:[%s3 + $0x10] sm:$0xff]
        %v2083 = vld [vmem:[%s3 + $0x18] sm:$0xff]
        %v2084 = vld [vmem:[%s3 + $0x20] sm:$0xff]
        %v2085 = vld [vmem:[%s3 + $0x28] sm:$0xff]
        %v2086 = vld [vmem:[%s3 + $0x30] sm:$0xff]
        %v2087 = vld [vmem:[%s3 + $0x38] sm:$0xff]
        %v2088 = vld [vmem:[%s3 + $0x40] sm:$0xff]
        %v2089 = vld [vmem:[%s3 + $0x48] sm:$0xff]
        %v2090 = vld [vmem:[%s3 + $0x50] sm:$0xff]
        %v2091 = vld [vmem:[%s3 + $0x58] sm:$0xff]
        %v2092 = vld [vmem:[%s3 + $0x60] sm:$0xff]
        %v2093 = vld [vmem:[%s3 + $0x68] sm:$0xff]
        %v2094 = vld [vmem:[%s3 + $0x70] sm:$0xff]
        %v2095 = vld [vmem:[%s3 + $0x78] sm:$0xff]
        %v2096 = vld [vmem:[%s3 + $0x80] sm:$0xff]
        %v2097 = vld [vmem:[%s3 + $0x88] sm:$0xff]
        %v2098 = vld [vmem:[%s3 + $0x90] sm:$0xff]
        %v2099 = vld [vmem:[%s3 + $0x98] sm:$0xff]
        %v2100 = vld [vmem:[%s3 + $0xa0] sm:$0xff]
        %v2101 = vld [vmem:[%s3 + $0xa8] sm:$0xff]
        %v2102 = vld [vmem:[%s3 + $0xb0] sm:$0xff]
        %v2103 = vld [vmem:[%s3 + $0xb8] sm:$0xff]
        %v2104 = vld [vmem:[%s3 + $0xc0] sm:$0xff]
        %v2105 = vld [vmem:[%s3 + $0xc8] sm:$0xff]
        %v2106 = vld [vmem:[%s3 + $0xd0] sm:$0xff]
        %v2107 = vld [vmem:[%s3 + $0xd8] sm:$0xff]
        %v2108 = vld [vmem:[%s3 + $0xe0] sm:$0xff]
        %v2109 = vld [vmem:[%s3 + $0xe8] sm:$0xff]
        %v2110 = vld [vmem:[%s3 + $0xf0] sm:$0xff]
        %v2111 = vld [vmem:[%s3 + $0xf8] sm:$0xff]
        %v2112 = vld [vmem:[%s3 + $0x100] sm:$0xff]
        %v2113 = vld [vmem:[%s3 + $0x108] sm:$0xff]
        %v2114 = vld [vmem:[%s3 + $0x110] sm:$0xff]
        %v2115 = vld [vmem:[%s3 + $0x118] sm:$0xff]
        %v2116 = vld [vmem:[%s3 + $0x120] sm:$0xff]
        %v2117 = vld [vmem:[%s3 + $0x128] sm:$0xff]
        %v2118 = vld [vmem:[%s3 + $0x130] sm:$0xff]
        %v2119 = vld [vmem:[%s3 + $0x138] sm:$0xff]
        %v2120 = vld [vmem:[%s3 + $0x140] sm:$0xff]
        %v2121 = vld [vmem:[%s3 + $0x148] sm:$0xff]
        %v2122 = vld [vmem:[%s3 + $0x150] sm:$0xff]
        %v2123 = vld [vmem:[%s3 + $0x158] sm:$0xff]
        %v2124 = vld [vmem:[%s3 + $0x160] sm:$0xff]
        %v2125 = vld [vmem:[%s3 + $0x168] sm:$0xff]
        %v2126 = vld [vmem:[%s3 + $0x170] sm:$0xff]
        %v2127 = vld [vmem:[%s3 + $0x178] sm:$0xff]
        %v2128 = vld [vmem:[%s3 + $0x180] sm:$0xff]
        %v2129 = vld [vmem:[%s3 + $0x188] sm:$0xff]
        %v2130 = vld [vmem:[%s3 + $0x190] sm:$0xff]
        %v2131 = vld [vmem:[%s3 + $0x198] sm:$0xff]
        %v2132 = vld [vmem:[%s3 + $0x1a0] sm:$0xff]
        %v2133 = vld [vmem:[%s3 + $0x1a8] sm:$0xff]
        %v2134 = vld [vmem:[%s3 + $0x1b0] sm:$0xff]
        %v2135 = vld [vmem:[%s3 + $0x1b8] sm:$0xff]
        %v2136 = vld [vmem:[%s3 + $0x1c0] sm:$0xff]
        %v2137 = vld [vmem:[%s3 + $0x1c8] sm:$0xff]
        %v2138 = vld [vmem:[%s3 + $0x1d0] sm:$0xff]
        %v2139 = vld [vmem:[%s3 + $0x1d8] sm:$0xff]
        %v2140 = vld [vmem:[%s3 + $0x1e0] sm:$0xff]
        %v2141 = vld [vmem:[%s3 + $0x1e8] sm:$0xff]
        %v2142 = vld [vmem:[%s3 + $0x1f0] sm:$0xff]
        %v2143 = vld [vmem:[%s3 + $0x1f8] sm:$0xff]
        %v2144 = vld [vmem:[%s3 + $0x200] sm:$0xff]
        %v2145 = vld [vmem:[%s3 + $0x208] sm:$0xff]
        %v2146 = vld [vmem:[%s3 + $0x210] sm:$0xff]
        %v2147 = vld [vmem:[%s3 + $0x218] sm:$0xff]
        %v2148 = vld [vmem:[%s3 + $0x220] sm:$0xff]
        %v2149 = vld [vmem:[%s3 + $0x228] sm:$0xff]
        %v2150 = vld [vmem:[%s3 + $0x230] sm:$0xff]
        %v2151 = vld [vmem:[%s3 + $0x238] sm:$0xff]
        %v2152 = vld [vmem:[%s3 + $0x240] sm:$0xff]
        %v2153 = vld [vmem:[%s3 + $0x248] sm:$0xff]
        %v2154 = vld [vmem:[%s3 + $0x250] sm:$0xff]
        %v2155 = vld [vmem:[%s3 + $0x258] sm:$0xff]
        %v2156 = vld [vmem:[%s3 + $0x260] sm:$0xff]
        %v2157 = vld [vmem:[%s3 + $0x268] sm:$0xff]
        %v2158 = vld [vmem:[%s3 + $0x270] sm:$0xff]
        %v2159 = vld [vmem:[%s3 + $0x278] sm:$0xff]
        %v2160 = vld [vmem:[%s3 + $0x280] sm:$0xff]
        %v2161 = vld [vmem:[%s3 + $0x288] sm:$0xff]
        %v2162 = vld [vmem:[%s3 + $0x290] sm:$0xff]
        %v2163 = vld [vmem:[%s3 + $0x298] sm:$0xff]
        %v2164 = vld [vmem:[%s3 + $0x2a0] sm:$0xff]
        %v2165 = vld [vmem:[%s3 + $0x2a8] sm:$0xff]
        %v2166 = vld [vmem:[%s3 + $0x2b0] sm:$0xff]
        %v2167 = vld [vmem:[%s3 + $0x2b8] sm:$0xff]
        %v2168 = vld [vmem:[%s3 + $0x2c0] sm:$0xff]
        %v2169 = vld [vmem:[%s3 + $0x2c8] sm:$0xff]
        %v2170 = vld [vmem:[%s3 + $0x2d0] sm:$0xff]
        %v2171 = vld [vmem:[%s3 + $0x2d8] sm:$0xff]
        %v2172 = vld [vmem:[%s3 + $0x2e0] sm:$0xff]
        %v2173 = vld [vmem:[%s3 + $0x2e8] sm:$0xff]
        %v2174 = vld [vmem:[%s3 + $0x2f0] sm:$0xff]
        %v2175 = vld [vmem:[%s3 + $0x2f8] sm:$0xff]
        %v2176 = vld [vmem:[%s3 + $0x300] sm:$0xff]
        %v2177 = vld [vmem:[%s3 + $0x308] sm:$0xff]
        %v2178 = vld [vmem:[%s3 + $0x310] sm:$0xff]
        %v2179 = vld [vmem:[%s3 + $0x318] sm:$0xff]
        %v2180 = vld [vmem:[%s3 + $0x320] sm:$0xff]
        %v2181 = vld [vmem:[%s3 + $0x328] sm:$0xff]
        %v2182 = vld [vmem:[%s3 + $0x330] sm:$0xff]
        %v2183 = vld [vmem:[%s3 + $0x338] sm:$0xff]
        %v2184 = vld [vmem:[%s3 + $0x340] sm:$0xff]
        %v2185 = vld [vmem:[%s3 + $0x348] sm:$0xff]
        %v2186 = vld [vmem:[%s3 + $0x350] sm:$0xff]
        %v2187 = vld [vmem:[%s3 + $0x358] sm:$0xff]
        %v2188 = vld [vmem:[%s3 + $0x360] sm:$0xff]
        %v2189 = vld [vmem:[%s3 + $0x368] sm:$0xff]
        %v2190 = vld [vmem:[%s3 + $0x370] sm:$0xff]
        %v2191 = vld [vmem:[%s3 + $0x378] sm:$0xff]
        %v2192 = vld [vmem:[%s3 + $0x380] sm:$0xff]
        %v2193 = vld [vmem:[%s3 + $0x388] sm:$0xff]
        %v2194 = vld [vmem:[%s3 + $0x390] sm:$0xff]
        %v2195 = vld [vmem:[%s3 + $0x398] sm:$0xff]
        %v2196 = vld [vmem:[%s3 + $0x3a0] sm:$0xff]
        %v2197 = vld [vmem:[%s3 + $0x3a8] sm:$0xff]
        %v2198 = vld [vmem:[%s3 + $0x3b0] sm:$0xff]
        %v2199 = vld [vmem:[%s3 + $0x3b8] sm:$0xff]
        %v2200 = vld [vmem:[%s3 + $0x3c0] sm:$0xff]
        %v2201 = vld [vmem:[%s3 + $0x3c8] sm:$0xff]
        %v2202 = vld [vmem:[%s3 + $0x3d0] sm:$0xff]
        %v2203 = vld [vmem:[%s3 + $0x3d8] sm:$0xff]
        %v2204 = vld [vmem:[%s3 + $0x3e0] sm:$0xff]
        %v2205 = vld [vmem:[%s3 + $0x3e8] sm:$0xff]
        %v2206 = vld [vmem:[%s3 + $0x3f0] sm:$0xff]
        %v2207 = vld [vmem:[%s3 + $0x3f8] sm:$0xff]
        %v2208 = vld [vmem:[%s3 + $0x400] sm:$0xff]
        %v2209 = vld [vmem:[%s3 + $0x408] sm:$0xff]
        %v2210 = vld [vmem:[%s3 + $0x410] sm:$0xff]
        %v2211 = vld [vmem:[%s3 + $0x418] sm:$0xff]
        %v2212 = vld [vmem:[%s3 + $0x420] sm:$0xff]
        %v2213 = vld [vmem:[%s3 + $0x428] sm:$0xff]
        %v2214 = vld [vmem:[%s3 + $0x430] sm:$0xff]
        %v2215 = vld [vmem:[%s3 + $0x438] sm:$0xff]
        %v2216 = vld [vmem:[%s3 + $0x440] sm:$0xff]
        %v2217 = vld [vmem:[%s3 + $0x448] sm:$0xff]
        %v2218 = vld [vmem:[%s3 + $0x450] sm:$0xff]
        %v2219 = vld [vmem:[%s3 + $0x458] sm:$0xff]
        %v2220 = vld [vmem:[%s3 + $0x460] sm:$0xff]
        %v2221 = vld [vmem:[%s3 + $0x468] sm:$0xff]
        %v2222 = vld [vmem:[%s3 + $0x470] sm:$0xff]
        %v2223 = vld [vmem:[%s3 + $0x478] sm:$0xff]
        %v2224 = vld [vmem:[%s3 + $0x480] sm:$0xff]
        %v2225 = vld [vmem:[%s3 + $0x488] sm:$0xff]
        %v2226 = vld [vmem:[%s3 + $0x490] sm:$0xff]
        %v2227 = vld [vmem:[%s3 + $0x498] sm:$0xff]
        %v2228 = vld [vmem:[%s3 + $0x4a0] sm:$0xff]
        %v2229 = vld [vmem:[%s3 + $0x4a8] sm:$0xff]
        %v2230 = vld [vmem:[%s3 + $0x4b0] sm:$0xff]
        %v2231 = vld [vmem:[%s3 + $0x4b8] sm:$0xff]
        %v2232 = vld [vmem:[%s3 + $0x4c0] sm:$0xff]
        %v2233 = vld [vmem:[%s3 + $0x4c8] sm:$0xff]
        %v2234 = vld [vmem:[%s3 + $0x4d0] sm:$0xff]
        %v2235 = vld [vmem:[%s3 + $0x4d8] sm:$0xff]
        %v2236 = vld [vmem:[%s3 + $0x4e0] sm:$0xff]
        %v2237 = vld [vmem:[%s3 + $0x4e8] sm:$0xff]
        %v2238 = vld [vmem:[%s3 + $0x4f0] sm:$0xff]
        %v2239 = vld [vmem:[%s3 + $0x4f8] sm:$0xff]
        %v2240 = vld [vmem:[%s3 + $0x500] sm:$0xff]
        %v2241 = vld [vmem:[%s3 + $0x508] sm:$0xff]
        %v2242 = vld [vmem:[%s3 + $0x510] sm:$0xff]
        %v2243 = vld [vmem:[%s3 + $0x518] sm:$0xff]
        %v2244 = vld [vmem:[%s3 + $0x520] sm:$0xff]
        %v2245 = vld [vmem:[%s3 + $0x528] sm:$0xff]
        %v2246 = vld [vmem:[%s3 + $0x530] sm:$0xff]
        %v2247 = vld [vmem:[%s3 + $0x538] sm:$0xff]
        %v2248 = vld [vmem:[%s3 + $0x540] sm:$0xff]
        %v2249 = vld [vmem:[%s3 + $0x548] sm:$0xff]
        %v2250 = vld [vmem:[%s3 + $0x550] sm:$0xff]
        %v2251 = vld [vmem:[%s3 + $0x558] sm:$0xff]
        %v2252 = vld [vmem:[%s3 + $0x560] sm:$0xff]
        %v2253 = vld [vmem:[%s3 + $0x568] sm:$0xff]
        %v2254 = vld [vmem:[%s3 + $0x570] sm:$0xff]
        %v2255 = vld [vmem:[%s3 + $0x578] sm:$0xff]
        %v2256 = vld [vmem:[%s3 + $0x580] sm:$0xff]
        %v2257 = vld [vmem:[%s3 + $0x588] sm:$0xff]
        %v2258 = vld [vmem:[%s3 + $0x590] sm:$0xff]
        %v2259 = vld [vmem:[%s3 + $0x598] sm:$0xff]
        %v2260 = vld [vmem:[%s3 + $0x5a0] sm:$0xff]
        %v2261 = vld [vmem:[%s3 + $0x5a8] sm:$0xff]
        %v2262 = vld [vmem:[%s3 + $0x5b0] sm:$0xff]
        %v2263 = vld [vmem:[%s3 + $0x5b8] sm:$0xff]
        %v2264 = vld [vmem:[%s3 + $0x5c0] sm:$0xff]
        %v2265 = vld [vmem:[%s3 + $0x5c8] sm:$0xff]
        %v2266 = vld [vmem:[%s3 + $0x5d0] sm:$0xff]
        %v2267 = vld [vmem:[%s3 + $0x5d8] sm:$0xff]
        %v2268 = vld [vmem:[%s3 + $0x5e0] sm:$0xff]
        %v2269 = vld [vmem:[%s3 + $0x5e8] sm:$0xff]
        %v2270 = vld [vmem:[%s3 + $0x5f0] sm:$0xff]
        %v2271 = vld [vmem:[%s3 + $0x5f8] sm:$0xff]
        %v2272 = vld [vmem:[%s4] sm:$0x1]
        %v2465 = vunpack.c.l.b16 %v2080
        %v2466 = vunpack.c.h.b16 %v2080
        %v2467 = vunpack.c.l.b16 %v2081
        %v2468 = vunpack.c.h.b16 %v2081
        %v2469 = vunpack.c.l.b16 %v2082
        %v2470 = vunpack.c.h.b16 %v2082
        %v2471 = vunpack.c.l.b16 %v2083
        %v2472 = vunpack.c.h.b16 %v2083
        %v2473 = vunpack.c.l.b16 %v2084
        %v2474 = vunpack.c.h.b16 %v2084
        %v2475 = vunpack.c.l.b16 %v2085
        %v2476 = vunpack.c.h.b16 %v2085
        %v2477 = vunpack.c.l.b16 %v2086
        %v2478 = vunpack.c.h.b16 %v2086
        %v2479 = vunpack.c.l.b16 %v2087
        %v2480 = vunpack.c.h.b16 %v2087
        %v2481 = vunpack.c.l.b16 %v2088
        %v2482 = vunpack.c.h.b16 %v2088
        %v2483 = vunpack.c.l.b16 %v2089
        %v2484 = vunpack.c.h.b16 %v2089
        %v2485 = vunpack.c.l.b16 %v2090
        %v2486 = vunpack.c.h.b16 %v2090
        %v2487 = vunpack.c.l.b16 %v2091
        %v2488 = vunpack.c.h.b16 %v2091
        %v2489 = vunpack.c.l.b16 %v2092
        %v2490 = vunpack.c.h.b16 %v2092
        %v2491 = vunpack.c.l.b16 %v2093
        %v2492 = vunpack.c.h.b16 %v2093
        %v2493 = vunpack.c.l.b16 %v2094
        %v2494 = vunpack.c.h.b16 %v2094
        %v2495 = vunpack.c.l.b16 %v2095
        %v2496 = vunpack.c.h.b16 %v2095
        %v2497 = vunpack.c.l.b16 %v2096
        %v2498 = vunpack.c.h.b16 %v2096
        %v2499 = vunpack.c.l.b16 %v2097
        %v2500 = vunpack.c.h.b16 %v2097
        %v2501 = vunpack.c.l.b16 %v2098
        %v2502 = vunpack.c.h.b16 %v2098
        %v2503 = vunpack.c.l.b16 %v2099
        %v2504 = vunpack.c.h.b16 %v2099
        %v2505 = vunpack.c.l.b16 %v2100
        %v2506 = vunpack.c.h.b16 %v2100
        %v2507 = vunpack.c.l.b16 %v2101
        %v2508 = vunpack.c.h.b16 %v2101
        %v2509 = vunpack.c.l.b16 %v2102
        %v2510 = vunpack.c.h.b16 %v2102
        %v2511 = vunpack.c.l.b16 %v2103
        %v2512 = vunpack.c.h.b16 %v2103
        %v2513 = vunpack.c.l.b16 %v2104
        %v2514 = vunpack.c.h.b16 %v2104
        %v2515 = vunpack.c.l.b16 %v2105
        %v2516 = vunpack.c.h.b16 %v2105
        %v2517 = vunpack.c.l.b16 %v2106
        %v2518 = vunpack.c.h.b16 %v2106
        %v2519 = vunpack.c.l.b16 %v2107
        %v2520 = vunpack.c.h.b16 %v2107
        %v2521 = vunpack.c.l.b16 %v2108
        %v2522 = vunpack.c.h.b16 %v2108
        %v2523 = vunpack.c.l.b16 %v2109
        %v2524 = vunpack.c.h.b16 %v2109
        %v2525 = vunpack.c.l.b16 %v2110
        %v2526 = vunpack.c.h.b16 %v2110
        %v2527 = vunpack.c.l.b16 %v2111
        %v2528 = vunpack.c.h.b16 %v2111
        %v2529 = vunpack.c.l.b16 %v2112
        %v2530 = vunpack.c.h.b16 %v2112
        %v2531 = vunpack.c.l.b16 %v2113
        %v2532 = vunpack.c.h.b16 %v2113
        %v2533 = vunpack.c.l.b16 %v2114
        %v2534 = vunpack.c.h.b16 %v2114
        %v2535 = vunpack.c.l.b16 %v2115
        %v2536 = vunpack.c.h.b16 %v2115
        %v2537 = vunpack.c.l.b16 %v2116
        %v2538 = vunpack.c.h.b16 %v2116
        %v2539 = vunpack.c.l.b16 %v2117
        %v2540 = vunpack.c.h.b16 %v2117
        %v2541 = vunpack.c.l.b16 %v2118
        %v2542 = vunpack.c.h.b16 %v2118
        %v2543 = vunpack.c.l.b16 %v2119
        %v2544 = vunpack.c.h.b16 %v2119
        %v2545 = vunpack.c.l.b16 %v2120
        %v2546 = vunpack.c.h.b16 %v2120
        %v2547 = vunpack.c.l.b16 %v2121
        %v2548 = vunpack.c.h.b16 %v2121
        %v2549 = vunpack.c.l.b16 %v2122
        %v2550 = vunpack.c.h.b16 %v2122
        %v2551 = vunpack.c.l.b16 %v2123
        %v2552 = vunpack.c.h.b16 %v2123
        %v2553 = vunpack.c.l.b16 %v2124
        %v2554 = vunpack.c.h.b16 %v2124
        %v2555 = vunpack.c.l.b16 %v2125
        %v2556 = vunpack.c.h.b16 %v2125
        %v2557 = vunpack.c.l.b16 %v2126
        %v2558 = vunpack.c.h.b16 %v2126
        %v2559 = vunpack.c.l.b16 %v2127
        %v2560 = vunpack.c.h.b16 %v2127
        %v2561 = vunpack.c.l.b16 %v2128
        %v2562 = vunpack.c.h.b16 %v2128
        %v2563 = vunpack.c.l.b16 %v2129
        %v2564 = vunpack.c.h.b16 %v2129
        %v2565 = vunpack.c.l.b16 %v2130
        %v2566 = vunpack.c.h.b16 %v2130
        %v2567 = vunpack.c.l.b16 %v2131
        %v2568 = vunpack.c.h.b16 %v2131
        %v2569 = vunpack.c.l.b16 %v2132
        %v2570 = vunpack.c.h.b16 %v2132
        %v2571 = vunpack.c.l.b16 %v2133
        %v2572 = vunpack.c.h.b16 %v2133
        %v2573 = vunpack.c.l.b16 %v2134
        %v2574 = vunpack.c.h.b16 %v2134
        %v2575 = vunpack.c.l.b16 %v2135
        %v2576 = vunpack.c.h.b16 %v2135
        %v2577 = vunpack.c.l.b16 %v2136
        %v2578 = vunpack.c.h.b16 %v2136
        %v2579 = vunpack.c.l.b16 %v2137
        %v2580 = vunpack.c.h.b16 %v2137
        %v2581 = vunpack.c.l.b16 %v2138
        %v2582 = vunpack.c.h.b16 %v2138
        %v2583 = vunpack.c.l.b16 %v2139
        %v2584 = vunpack.c.h.b16 %v2139
        %v2585 = vunpack.c.l.b16 %v2140
        %v2586 = vunpack.c.h.b16 %v2140
        %v2587 = vunpack.c.l.b16 %v2141
        %v2588 = vunpack.c.h.b16 %v2141
        %v2589 = vunpack.c.l.b16 %v2142
        %v2590 = vunpack.c.h.b16 %v2142
        %v2591 = vunpack.c.l.b16 %v2143
        %v2592 = vunpack.c.h.b16 %v2143
        %v2593 = vunpack.c.l.b16 %v2144
        %v2594 = vunpack.c.h.b16 %v2144
        %v2595 = vunpack.c.l.b16 %v2145
        %v2596 = vunpack.c.h.b16 %v2145
        %v2597 = vunpack.c.l.b16 %v2146
        %v2598 = vunpack.c.h.b16 %v2146
        %v2599 = vunpack.c.l.b16 %v2147
        %v2600 = vunpack.c.h.b16 %v2147
        %v2601 = vunpack.c.l.b16 %v2148
        %v2602 = vunpack.c.h.b16 %v2148
        %v2603 = vunpack.c.l.b16 %v2149
        %v2604 = vunpack.c.h.b16 %v2149
        %v2605 = vunpack.c.l.b16 %v2150
        %v2606 = vunpack.c.h.b16 %v2150
        %v2607 = vunpack.c.l.b16 %v2151
        %v2608 = vunpack.c.h.b16 %v2151
        %v2609 = vunpack.c.l.b16 %v2152
        %v2610 = vunpack.c.h.b16 %v2152
        %v2611 = vunpack.c.l.b16 %v2153
        %v2612 = vunpack.c.h.b16 %v2153
        %v2613 = vunpack.c.l.b16 %v2154
        %v2614 = vunpack.c.h.b16 %v2154
        %v2615 = vunpack.c.l.b16 %v2155
        %v2616 = vunpack.c.h.b16 %v2155
        %v2617 = vunpack.c.l.b16 %v2156
        %v2618 = vunpack.c.h.b16 %v2156
        %v2619 = vunpack.c.l.b16 %v2157
        %v2620 = vunpack.c.h.b16 %v2157
        %v2621 = vunpack.c.l.b16 %v2158
        %v2622 = vunpack.c.h.b16 %v2158
        %v2623 = vunpack.c.l.b16 %v2159
        %v2624 = vunpack.c.h.b16 %v2159
        %v2625 = vunpack.c.l.b16 %v2160
        %v2626 = vunpack.c.h.b16 %v2160
        %v2627 = vunpack.c.l.b16 %v2161
        %v2628 = vunpack.c.h.b16 %v2161
        %v2629 = vunpack.c.l.b16 %v2162
        %v2630 = vunpack.c.h.b16 %v2162
        %v2631 = vunpack.c.l.b16 %v2163
        %v2632 = vunpack.c.h.b16 %v2163
        %v2633 = vunpack.c.l.b16 %v2164
        %v2634 = vunpack.c.h.b16 %v2164
        %v2635 = vunpack.c.l.b16 %v2165
        %v2636 = vunpack.c.h.b16 %v2165
        %v2637 = vunpack.c.l.b16 %v2166
        %v2638 = vunpack.c.h.b16 %v2166
        %v2639 = vunpack.c.l.b16 %v2167
        %v2640 = vunpack.c.h.b16 %v2167
        %v2641 = vunpack.c.l.b16 %v2168
        %v2642 = vunpack.c.h.b16 %v2168
        %v2643 = vunpack.c.l.b16 %v2169
        %v2644 = vunpack.c.h.b16 %v2169
        %v2645 = vunpack.c.l.b16 %v2170
        %v2646 = vunpack.c.h.b16 %v2170
        %v2647 = vunpack.c.l.b16 %v2171
        %v2648 = vunpack.c.h.b16 %v2171
        %v2649 = vunpack.c.l.b16 %v2172
        %v2650 = vunpack.c.h.b16 %v2172
        %v2651 = vunpack.c.l.b16 %v2173
        %v2652 = vunpack.c.h.b16 %v2173
        %v2653 = vunpack.c.l.b16 %v2174
        %v2654 = vunpack.c.h.b16 %v2174
        %v2655 = vunpack.c.l.b16 %v2175
        %v2656 = vunpack.c.h.b16 %v2175
        %v2657 = vunpack.c.l.b16 %v2176
        %v2658 = vunpack.c.h.b16 %v2176
        %v2659 = vunpack.c.l.b16 %v2177
        %v2660 = vunpack.c.h.b16 %v2177
        %v2661 = vunpack.c.l.b16 %v2178
        %v2662 = vunpack.c.h.b16 %v2178
        %v2663 = vunpack.c.l.b16 %v2179
        %v2664 = vunpack.c.h.b16 %v2179
        %v2665 = vunpack.c.l.b16 %v2180
        %v2666 = vunpack.c.h.b16 %v2180
        %v2667 = vunpack.c.l.b16 %v2181
        %v2668 = vunpack.c.h.b16 %v2181
        %v2669 = vunpack.c.l.b16 %v2182
        %v2670 = vunpack.c.h.b16 %v2182
        %v2671 = vunpack.c.l.b16 %v2183
        %v2672 = vunpack.c.h.b16 %v2183
        %v2673 = vunpack.c.l.b16 %v2184
        %v2674 = vunpack.c.h.b16 %v2184
        %v2675 = vunpack.c.l.b16 %v2185
        %v2676 = vunpack.c.h.b16 %v2185
        %v2677 = vunpack.c.l.b16 %v2186
        %v2678 = vunpack.c.h.b16 %v2186
        %v2679 = vunpack.c.l.b16 %v2187
        %v2680 = vunpack.c.h.b16 %v2187
        %v2681 = vunpack.c.l.b16 %v2188
        %v2682 = vunpack.c.h.b16 %v2188
        %v2683 = vunpack.c.l.b16 %v2189
        %v2684 = vunpack.c.h.b16 %v2189
        %v2685 = vunpack.c.l.b16 %v2190
        %v2686 = vunpack.c.h.b16 %v2190
        %v2687 = vunpack.c.l.b16 %v2191
        %v2688 = vunpack.c.h.b16 %v2191
        %v2689 = vunpack.c.l.b16 %v2192
        %v2690 = vunpack.c.h.b16 %v2192
        %v2691 = vunpack.c.l.b16 %v2193
        %v2692 = vunpack.c.h.b16 %v2193
        %v2693 = vunpack.c.l.b16 %v2194
        %v2694 = vunpack.c.h.b16 %v2194
        %v2695 = vunpack.c.l.b16 %v2195
        %v2696 = vunpack.c.h.b16 %v2195
        %v2697 = vunpack.c.l.b16 %v2196
        %v2698 = vunpack.c.h.b16 %v2196
        %v2699 = vunpack.c.l.b16 %v2197
        %v2700 = vunpack.c.h.b16 %v2197
        %v2701 = vunpack.c.l.b16 %v2198
        %v2702 = vunpack.c.h.b16 %v2198
        %v2703 = vunpack.c.l.b16 %v2199
        %v2704 = vunpack.c.h.b16 %v2199
        %v2705 = vunpack.c.l.b16 %v2200
        %v2706 = vunpack.c.h.b16 %v2200
        %v2707 = vunpack.c.l.b16 %v2201
        %v2708 = vunpack.c.h.b16 %v2201
        %v2709 = vunpack.c.l.b16 %v2202
        %v2710 = vunpack.c.h.b16 %v2202
        %v2711 = vunpack.c.l.b16 %v2203
        %v2712 = vunpack.c.h.b16 %v2203
        %v2713 = vunpack.c.l.b16 %v2204
        %v2714 = vunpack.c.h.b16 %v2204
        %v2715 = vunpack.c.l.b16 %v2205
        %v2716 = vunpack.c.h.b16 %v2205
        %v2717 = vunpack.c.l.b16 %v2206
        %v2718 = vunpack.c.h.b16 %v2206
        %v2719 = vunpack.c.l.b16 %v2207
        %v2720 = vunpack.c.h.b16 %v2207
        %v2721 = vunpack.c.l.b16 %v2208
        %v2722 = vunpack.c.h.b16 %v2208
        %v2723 = vunpack.c.l.b16 %v2209
        %v2724 = vunpack.c.h.b16 %v2209
        %v2725 = vunpack.c.l.b16 %v2210
        %v2726 = vunpack.c.h.b16 %v2210
        %v2727 = vunpack.c.l.b16 %v2211
        %v2728 = vunpack.c.h.b16 %v2211
        %v2729 = vunpack.c.l.b16 %v2212
        %v2730 = vunpack.c.h.b16 %v2212
        %v2731 = vunpack.c.l.b16 %v2213
        %v2732 = vunpack.c.h.b16 %v2213
        %v2733 = vunpack.c.l.b16 %v2214
        %v2734 = vunpack.c.h.b16 %v2214
        %v2735 = vunpack.c.l.b16 %v2215
        %v2736 = vunpack.c.h.b16 %v2215
        %v2737 = vunpack.c.l.b16 %v2216
        %v2738 = vunpack.c.h.b16 %v2216
        %v2739 = vunpack.c.l.b16 %v2217
        %v2740 = vunpack.c.h.b16 %v2217
        %v2741 = vunpack.c.l.b16 %v2218
        %v2742 = vunpack.c.h.b16 %v2218
        %v2743 = vunpack.c.l.b16 %v2219
        %v2744 = vunpack.c.h.b16 %v2219
        %v2745 = vunpack.c.l.b16 %v2220
        %v2746 = vunpack.c.h.b16 %v2220
        %v2747 = vunpack.c.l.b16 %v2221
        %v2748 = vunpack.c.h.b16 %v2221
        %v2749 = vunpack.c.l.b16 %v2222
        %v2750 = vunpack.c.h.b16 %v2222
        %v2751 = vunpack.c.l.b16 %v2223
        %v2752 = vunpack.c.h.b16 %v2223
        %v2753 = vunpack.c.l.b16 %v2224
        %v2754 = vunpack.c.h.b16 %v2224
        %v2755 = vunpack.c.l.b16 %v2225
        %v2756 = vunpack.c.h.b16 %v2225
        %v2757 = vunpack.c.l.b16 %v2226
        %v2758 = vunpack.c.h.b16 %v2226
        %v2759 = vunpack.c.l.b16 %v2227
        %v2760 = vunpack.c.h.b16 %v2227
        %v2761 = vunpack.c.l.b16 %v2228
        %v2762 = vunpack.c.h.b16 %v2228
        %v2763 = vunpack.c.l.b16 %v2229
        %v2764 = vunpack.c.h.b16 %v2229
        %v2765 = vunpack.c.l.b16 %v2230
        %v2766 = vunpack.c.h.b16 %v2230
        %v2767 = vunpack.c.l.b16 %v2231
        %v2768 = vunpack.c.h.b16 %v2231
        %v2769 = vunpack.c.l.b16 %v2232
        %v2770 = vunpack.c.h.b16 %v2232
        %v2771 = vunpack.c.l.b16 %v2233
        %v2772 = vunpack.c.h.b16 %v2233
        %v2773 = vunpack.c.l.b16 %v2234
        %v2774 = vunpack.c.h.b16 %v2234
        %v2775 = vunpack.c.l.b16 %v2235
        %v2776 = vunpack.c.h.b16 %v2235
        %v2777 = vunpack.c.l.b16 %v2236
        %v2778 = vunpack.c.h.b16 %v2236
        %v2779 = vunpack.c.l.b16 %v2237
        %v2780 = vunpack.c.h.b16 %v2237
        %v2781 = vunpack.c.l.b16 %v2238
        %v2782 = vunpack.c.h.b16 %v2238
        %v2783 = vunpack.c.l.b16 %v2239
        %v2784 = vunpack.c.h.b16 %v2239
        %v2785 = vunpack.c.l.b16 %v2240
        %v2786 = vunpack.c.h.b16 %v2240
        %v2787 = vunpack.c.l.b16 %v2241
        %v2788 = vunpack.c.h.b16 %v2241
        %v2789 = vunpack.c.l.b16 %v2242
        %v2790 = vunpack.c.h.b16 %v2242
        %v2791 = vunpack.c.l.b16 %v2243
        %v2792 = vunpack.c.h.b16 %v2243
        %v2793 = vunpack.c.l.b16 %v2244
        %v2794 = vunpack.c.h.b16 %v2244
        %v2795 = vunpack.c.l.b16 %v2245
        %v2796 = vunpack.c.h.b16 %v2245
        %v2797 = vunpack.c.l.b16 %v2246
        %v2798 = vunpack.c.h.b16 %v2246
        %v2799 = vunpack.c.l.b16 %v2247
        %v2800 = vunpack.c.h.b16 %v2247
        %v2801 = vunpack.c.l.b16 %v2248
        %v2802 = vunpack.c.h.b16 %v2248
        %v2803 = vunpack.c.l.b16 %v2249
        %v2804 = vunpack.c.h.b16 %v2249
        %v2805 = vunpack.c.l.b16 %v2250
        %v2806 = vunpack.c.h.b16 %v2250
        %v2807 = vunpack.c.l.b16 %v2251
        %v2808 = vunpack.c.h.b16 %v2251
        %v2809 = vunpack.c.l.b16 %v2252
        %v2810 = vunpack.c.h.b16 %v2252
        %v2811 = vunpack.c.l.b16 %v2253
        %v2812 = vunpack.c.h.b16 %v2253
        %v2813 = vunpack.c.l.b16 %v2254
        %v2814 = vunpack.c.h.b16 %v2254
        %v2815 = vunpack.c.l.b16 %v2255
        %v2816 = vunpack.c.h.b16 %v2255
        %v2817 = vunpack.c.l.b16 %v2256
        %v2818 = vunpack.c.h.b16 %v2256
        %v2819 = vunpack.c.l.b16 %v2257
        %v2820 = vunpack.c.h.b16 %v2257
        %v2821 = vunpack.c.l.b16 %v2258
        %v2822 = vunpack.c.h.b16 %v2258
        %v2823 = vunpack.c.l.b16 %v2259
        %v2824 = vunpack.c.h.b16 %v2259
        %v2825 = vunpack.c.l.b16 %v2260
        %v2826 = vunpack.c.h.b16 %v2260
        %v2827 = vunpack.c.l.b16 %v2261
        %v2828 = vunpack.c.h.b16 %v2261
        %v2829 = vunpack.c.l.b16 %v2262
        %v2830 = vunpack.c.h.b16 %v2262
        %v2831 = vunpack.c.l.b16 %v2263
        %v2832 = vunpack.c.h.b16 %v2263
        %v2833 = vunpack.c.l.b16 %v2264
        %v2834 = vunpack.c.h.b16 %v2264
        %v2835 = vunpack.c.l.b16 %v2265
        %v2836 = vunpack.c.h.b16 %v2265
        %v2837 = vunpack.c.l.b16 %v2266
        %v2838 = vunpack.c.h.b16 %v2266
        %v2839 = vunpack.c.l.b16 %v2267
        %v2840 = vunpack.c.h.b16 %v2267
        %v2841 = vunpack.c.l.b16 %v2268
        %v2842 = vunpack.c.h.b16 %v2268
        %v2843 = vunpack.c.l.b16 %v2269
        %v2844 = vunpack.c.h.b16 %v2269
        %v2845 = vunpack.c.l.b16 %v2270
        %v2846 = vunpack.c.h.b16 %v2270
        %v2847 = vunpack.c.l.b16 %v2271
        %v2848 = vunpack.c.h.b16 %v2271
        %v2849 = vpack.c.b16 %v2469, %v2465
        %v2850 = vpack.c.b16 %v2470, %v2466
        %v2851 = vpack.c.b16 %v2471, %v2467
        %v2852 = vpack.c.b16 %v2472, %v2468
        %v2853 = vpack.c.b16 %v2477, %v2473
        %v2854 = vpack.c.b16 %v2478, %v2474
        %v2855 = vpack.c.b16 %v2479, %v2475
        %v2856 = vpack.c.b16 %v2480, %v2476
        %v2857 = vpack.c.b16 %v2485, %v2481
        %v2858 = vpack.c.b16 %v2486, %v2482
        %v2859 = vpack.c.b16 %v2487, %v2483
        %v2860 = vpack.c.b16 %v2488, %v2484
        %v2861 = vpack.c.b16 %v2493, %v2489
        %v2862 = vpack.c.b16 %v2494, %v2490
        %v2863 = vpack.c.b16 %v2495, %v2491
        %v2864 = vpack.c.b16 %v2496, %v2492
        %v2865 = vpack.c.b16 %v2501, %v2497
        %v2866 = vpack.c.b16 %v2502, %v2498
        %v2867 = vpack.c.b16 %v2503, %v2499
        %v2868 = vpack.c.b16 %v2504, %v2500
        %v2869 = vpack.c.b16 %v2509, %v2505
        %v2870 = vpack.c.b16 %v2510, %v2506
        %v2871 = vpack.c.b16 %v2511, %v2507
        %v2872 = vpack.c.b16 %v2512, %v2508
        %v2873 = vpack.c.b16 %v2517, %v2513
        %v2874 = vpack.c.b16 %v2518, %v2514
        %v2875 = vpack.c.b16 %v2519, %v2515
        %v2876 = vpack.c.b16 %v2520, %v2516
        %v2877 = vpack.c.b16 %v2525, %v2521
        %v2878 = vpack.c.b16 %v2526, %v2522
        %v2879 = vpack.c.b16 %v2527, %v2523
        %v2880 = vpack.c.b16 %v2528, %v2524
        %v2881 = vpack.c.b16 %v2533, %v2529
        %v2882 = vpack.c.b16 %v2534, %v2530
        %v2883 = vpack.c.b16 %v2535, %v2531
        %v2884 = vpack.c.b16 %v2536, %v2532
        %v2885 = vpack.c.b16 %v2541, %v2537
        %v2886 = vpack.c.b16 %v2542, %v2538
        %v2887 = vpack.c.b16 %v2543, %v2539
        %v2888 = vpack.c.b16 %v2544, %v2540
        %v2889 = vpack.c.b16 %v2549, %v2545
        %v2890 = vpack.c.b16 %v2550, %v2546
        %v2891 = vpack.c.b16 %v2551, %v2547
        %v2892 = vpack.c.b16 %v2552, %v2548
        %v2893 = vpack.c.b16 %v2557, %v2553
        %v2894 = vpack.c.b16 %v2558, %v2554
        %v2895 = vpack.c.b16 %v2559, %v2555
        %v2896 = vpack.c.b16 %v2560, %v2556
        %v2897 = vpack.c.b16 %v2565, %v2561
        %v2898 = vpack.c.b16 %v2566, %v2562
        %v2899 = vpack.c.b16 %v2567, %v2563
        %v2900 = vpack.c.b16 %v2568, %v2564
        %v2901 = vpack.c.b16 %v2573, %v2569
        %v2902 = vpack.c.b16 %v2574, %v2570
        %v2903 = vpack.c.b16 %v2575, %v2571
        %v2904 = vpack.c.b16 %v2576, %v2572
        %v2905 = vpack.c.b16 %v2581, %v2577
        %v2906 = vpack.c.b16 %v2582, %v2578
        %v2907 = vpack.c.b16 %v2583, %v2579
        %v2908 = vpack.c.b16 %v2584, %v2580
        %v2909 = vpack.c.b16 %v2589, %v2585
        %v2910 = vpack.c.b16 %v2590, %v2586
        %v2911 = vpack.c.b16 %v2591, %v2587
        %v2912 = vpack.c.b16 %v2592, %v2588
        %v2913 = vpack.c.b16 %v2597, %v2593
        %v2914 = vpack.c.b16 %v2598, %v2594
        %v2915 = vpack.c.b16 %v2599, %v2595
        %v2916 = vpack.c.b16 %v2600, %v2596
        %v2917 = vpack.c.b16 %v2605, %v2601
        %v2918 = vpack.c.b16 %v2606, %v2602
        %v2919 = vpack.c.b16 %v2607, %v2603
        %v2920 = vpack.c.b16 %v2608, %v2604
        %v2921 = vpack.c.b16 %v2613, %v2609
        %v2922 = vpack.c.b16 %v2614, %v2610
        %v2923 = vpack.c.b16 %v2615, %v2611
        %v2924 = vpack.c.b16 %v2616, %v2612
        %v2925 = vpack.c.b16 %v2621, %v2617
        %v2926 = vpack.c.b16 %v2622, %v2618
        %v2927 = vpack.c.b16 %v2623, %v2619
        %v2928 = vpack.c.b16 %v2624, %v2620
        %v2929 = vpack.c.b16 %v2629, %v2625
        %v2930 = vpack.c.b16 %v2630, %v2626
        %v2931 = vpack.c.b16 %v2631, %v2627
        %v2932 = vpack.c.b16 %v2632, %v2628
        %v2933 = vpack.c.b16 %v2637, %v2633
        %v2934 = vpack.c.b16 %v2638, %v2634
        %v2935 = vpack.c.b16 %v2639, %v2635
        %v2936 = vpack.c.b16 %v2640, %v2636
        %v2937 = vpack.c.b16 %v2645, %v2641
        %v2938 = vpack.c.b16 %v2646, %v2642
        %v2939 = vpack.c.b16 %v2647, %v2643
        %v2940 = vpack.c.b16 %v2648, %v2644
        %v2941 = vpack.c.b16 %v2653, %v2649
        %v2942 = vpack.c.b16 %v2654, %v2650
        %v2943 = vpack.c.b16 %v2655, %v2651
        %v2944 = vpack.c.b16 %v2656, %v2652
        %v2945 = vpack.c.b16 %v2661, %v2657
        %v2946 = vpack.c.b16 %v2662, %v2658
        %v2947 = vpack.c.b16 %v2663, %v2659
        %v2948 = vpack.c.b16 %v2664, %v2660
        %v2949 = vpack.c.b16 %v2669, %v2665
        %v2950 = vpack.c.b16 %v2670, %v2666
        %v2951 = vpack.c.b16 %v2671, %v2667
        %v2952 = vpack.c.b16 %v2672, %v2668
        %v2953 = vpack.c.b16 %v2677, %v2673
        %v2954 = vpack.c.b16 %v2678, %v2674
        %v2955 = vpack.c.b16 %v2679, %v2675
        %v2956 = vpack.c.b16 %v2680, %v2676
        %v2957 = vpack.c.b16 %v2685, %v2681
        %v2958 = vpack.c.b16 %v2686, %v2682
        %v2959 = vpack.c.b16 %v2687, %v2683
        %v2960 = vpack.c.b16 %v2688, %v2684
        %v2961 = vpack.c.b16 %v2693, %v2689
        %v2962 = vpack.c.b16 %v2694, %v2690
        %v2963 = vpack.c.b16 %v2695, %v2691
        %v2964 = vpack.c.b16 %v2696, %v2692
        %v2965 = vpack.c.b16 %v2701, %v2697
        %v2966 = vpack.c.b16 %v2702, %v2698
        %v2967 = vpack.c.b16 %v2703, %v2699
        %v2968 = vpack.c.b16 %v2704, %v2700
        %v2969 = vpack.c.b16 %v2709, %v2705
        %v2970 = vpack.c.b16 %v2710, %v2706
        %v2971 = vpack.c.b16 %v2711, %v2707
        %v2972 = vpack.c.b16 %v2712, %v2708
        %v2973 = vpack.c.b16 %v2717, %v2713
        %v2974 = vpack.c.b16 %v2718, %v2714
        %v2975 = vpack.c.b16 %v2719, %v2715
        %v2976 = vpack.c.b16 %v2720, %v2716
        %v2977 = vpack.c.b16 %v2725, %v2721
        %v2978 = vpack.c.b16 %v2726, %v2722
        %v2979 = vpack.c.b16 %v2727, %v2723
        %v2980 = vpack.c.b16 %v2728, %v2724
        %v2981 = vpack.c.b16 %v2733, %v2729
        %v2982 = vpack.c.b16 %v2734, %v2730
        %v2983 = vpack.c.b16 %v2735, %v2731
        %v2984 = vpack.c.b16 %v2736, %v2732
        %v2985 = vpack.c.b16 %v2741, %v2737
        %v2986 = vpack.c.b16 %v2742, %v2738
        %v2987 = vpack.c.b16 %v2743, %v2739
        %v2988 = vpack.c.b16 %v2744, %v2740
        %v2989 = vpack.c.b16 %v2749, %v2745
        %v2990 = vpack.c.b16 %v2750, %v2746
        %v2991 = vpack.c.b16 %v2751, %v2747
        %v2992 = vpack.c.b16 %v2752, %v2748
        %v2993 = vpack.c.b16 %v2757, %v2753
        %v2994 = vpack.c.b16 %v2758, %v2754
        %v2995 = vpack.c.b16 %v2759, %v2755
        %v2996 = vpack.c.b16 %v2760, %v2756
        %v2997 = vpack.c.b16 %v2765, %v2761
        %v2998 = vpack.c.b16 %v2766, %v2762
        %v2999 = vpack.c.b16 %v2767, %v2763
        %v3000 = vpack.c.b16 %v2768, %v2764
        %v3001 = vpack.c.b16 %v2773, %v2769
        %v3002 = vpack.c.b16 %v2774, %v2770
        %v3003 = vpack.c.b16 %v2775, %v2771
        %v3004 = vpack.c.b16 %v2776, %v2772
        %v3005 = vpack.c.b16 %v2781, %v2777
        %v3006 = vpack.c.b16 %v2782, %v2778
        %v3007 = vpack.c.b16 %v2783, %v2779
        %v3008 = vpack.c.b16 %v2784, %v2780
        %v3009 = vpack.c.b16 %v2789, %v2785
        %v3010 = vpack.c.b16 %v2790, %v2786
        %v3011 = vpack.c.b16 %v2791, %v2787
        %v3012 = vpack.c.b16 %v2792, %v2788
        %v3013 = vpack.c.b16 %v2797, %v2793
        %v3014 = vpack.c.b16 %v2798, %v2794
        %v3015 = vpack.c.b16 %v2799, %v2795
        %v3016 = vpack.c.b16 %v2800, %v2796
        %v3017 = vpack.c.b16 %v2805, %v2801
        %v3018 = vpack.c.b16 %v2806, %v2802
        %v3019 = vpack.c.b16 %v2807, %v2803
        %v3020 = vpack.c.b16 %v2808, %v2804
        %v3021 = vpack.c.b16 %v2813, %v2809
        %v3022 = vpack.c.b16 %v2814, %v2810
        %v3023 = vpack.c.b16 %v2815, %v2811
        %v3024 = vpack.c.b16 %v2816, %v2812
        %v3025 = vpack.c.b16 %v2821, %v2817
        %v3026 = vpack.c.b16 %v2822, %v2818
        %v3027 = vpack.c.b16 %v2823, %v2819
        %v3028 = vpack.c.b16 %v2824, %v2820
        %v3029 = vpack.c.b16 %v2829, %v2825
        %v3030 = vpack.c.b16 %v2830, %v2826
        %v3031 = vpack.c.b16 %v2831, %v2827
        %v3032 = vpack.c.b16 %v2832, %v2828
        %v3033 = vpack.c.b16 %v2837, %v2833
        %v3034 = vpack.c.b16 %v2838, %v2834
        %v3035 = vpack.c.b16 %v2839, %v2835
        %v3036 = vpack.c.b16 %v2840, %v2836
        %v3037 = vpack.c.b16 %v2845, %v2841
        %v3038 = vpack.c.b16 %v2846, %v2842
        %v3039 = vpack.c.b16 %v2847, %v2843
        %v3040 = vpack.c.b16 %v2848, %v2844
        %3233 = vmatprep.subr.bf16.mxu0 %v2850
        %3234 = vmatpush1.bf16.msra.mxu0 %v2849
        %3235 = vmatprep.subr.bf16.mxu0 %v2854
        %3236 = vmatpush1.bf16.msra.mxu0 %v2853
        %3237 = vmatprep.subr.bf16.mxu0 %v2858
        %3238 = vmatpush1.bf16.msra.mxu0 %v2857
        %3239 = vmatprep.subr.bf16.mxu0 %v2862
        %3240 = vmatpush1.bf16.msra.mxu0 %v2861
        %3241 = vmatprep.subr.bf16.mxu0 %v2866
        %3242 = vmatpush1.bf16.msra.mxu0 %v2865
        %3243 = vmatprep.subr.bf16.mxu0 %v2870
        %3244 = vmatpush1.bf16.msra.mxu0 %v2869
        %3245 = vmatprep.subr.bf16.mxu0 %v2874
        %3246 = vmatpush1.bf16.msra.mxu0 %v2873
        %3247 = vmatprep.subr.bf16.mxu0 %v2878
        %3248 = vmatpush1.bf16.msra.mxu0 %v2877
        %3249 = vmatprep.subr.bf16.mxu0 %v2882
        %3250 = vmatpush1.bf16.msra.mxu0 %v2881
        %3251 = vmatprep.subr.bf16.mxu0 %v2886
        %3252 = vmatpush1.bf16.msra.mxu0 %v2885
        %3253 = vmatprep.subr.bf16.mxu0 %v2890
        %3254 = vmatpush1.bf16.msra.mxu0 %v2889
        %3255 = vmatprep.subr.bf16.mxu0 %v2894
        %3256 = vmatpush1.bf16.msra.mxu0 %v2893
        %3257 = vmatprep.subr.bf16.mxu0 %v2898
        %3258 = vmatpush1.bf16.msra.mxu0 %v2897
        %3259 = vmatprep.subr.bf16.mxu0 %v2902
        %3260 = vmatpush1.bf16.msra.mxu0 %v2901
        %3261 = vmatprep.subr.bf16.mxu0 %v2906
        %3262 = vmatpush1.bf16.msra.mxu0 %v2905
        %3263 = vmatprep.subr.bf16.mxu0 %v2910
        %3264 = vmatpush1.bf16.msra.mxu0 %v2909
        %3265 = vmatprep.mubr.bf16.mxu0 %v2069
        %3266 = vmatmul.mubr.bf16.gmra.mrb[0].mxu0 %v2068
        %v3267 = vpop.f32.mrb[0].mxu0
        %v3268 = vadd.f32 0.0, %v3267
        %v3269 = vpop.f32.mrb[0].mxu0
        %v3270 = vadd.f32 0.0, %v3269
        %v3271 = vpop.f32.mrb[0].mxu0
        %v3272 = vadd.f32 0.0, %v3271
        %v3273 = vpop.f32.mrb[0].mxu0
        %v3274 = vadd.f32 0.0, %v3273
        %3275 = vdwg.mxu0
        %3276 = vmatprep.subr.bf16.mxu0 %v2914
        %3277 = vmatpush1.bf16.msra.mxu0 %v2913
        %3278 = vmatprep.subr.bf16.mxu0 %v2918
        %3279 = vmatpush1.bf16.msra.mxu0 %v2917
        %3280 = vmatprep.subr.bf16.mxu0 %v2922
        %3281 = vmatpush1.bf16.msra.mxu0 %v2921
        %3282 = vmatprep.subr.bf16.mxu0 %v2926
        %3283 = vmatpush1.bf16.msra.mxu0 %v2925
        %3284 = vmatprep.subr.bf16.mxu0 %v2930
        %3285 = vmatpush1.bf16.msra.mxu0 %v2929
        %3286 = vmatprep.subr.bf16.mxu0 %v2934
        %3287 = vmatpush1.bf16.msra.mxu0 %v2933
        %3288 = vmatprep.subr.bf16.mxu0 %v2938
        %3289 = vmatpush1.bf16.msra.mxu0 %v2937
        %3290 = vmatprep.subr.bf16.mxu0 %v2942
        %3291 = vmatpush1.bf16.msra.mxu0 %v2941
        %3292 = vmatprep.subr.bf16.mxu0 %v2946
        %3293 = vmatpush1.bf16.msra.mxu0 %v2945
        %3294 = vmatprep.subr.bf16.mxu0 %v2950
        %3295 = vmatpush1.bf16.msra.mxu0 %v2949
        %3296 = vmatprep.subr.bf16.mxu0 %v2954
        %3297 = vmatpush1.bf16.msra.mxu0 %v2953
        %3298 = vmatprep.subr.bf16.mxu0 %v2958
        %3299 = vmatpush1.bf16.msra.mxu0 %v2957
        %3300 = vmatprep.subr.bf16.mxu0 %v2962
        %3301 = vmatpush1.bf16.msra.mxu0 %v2961
        %3302 = vmatprep.subr.bf16.mxu0 %v2966
        %3303 = vmatpush1.bf16.msra.mxu0 %v2965
        %3304 = vmatprep.subr.bf16.mxu0 %v2970
        %3305 = vmatpush1.bf16.msra.mxu0 %v2969
        %3306 = vmatprep.subr.bf16.mxu0 %v2974
        %3307 = vmatpush1.bf16.msra.mxu0 %v2973
        %3308 = vmatprep.mubr.bf16.mxu0 %v2071
        %3309 = vmatmul.mubr.bf16.gmra.mrb[0].mxu0 %v2070
        %v3310 = vpop.f32.mrb[0].mxu0
        %v3311 = vadd.f32 %v3268, %v3310
        %v3312 = vpop.f32.mrb[0].mxu0
        %v3313 = vadd.f32 %v3270, %v3312
        %v3314 = vpop.f32.mrb[0].mxu0
        %v3315 = vadd.f32 %v3272, %v3314
        %v3316 = vpop.f32.mrb[0].mxu0
        %v3317 = vadd.f32 %v3274, %v3316
        %3318 = vdwg.mxu0
        %3319 = vmatprep.subr.bf16.mxu0 %v2978
        %3320 = vmatpush1.bf16.msra.mxu0 %v2977
        %3321 = vmatprep.subr.bf16.mxu0 %v2982
        %3322 = vmatpush1.bf16.msra.mxu0 %v2981
        %3323 = vmatprep.subr.bf16.mxu0 %v2986
        %3324 = vmatpush1.bf16.msra.mxu0 %v2985
        %3325 = vmatprep.subr.bf16.mxu0 %v2990
        %3326 = vmatpush1.bf16.msra.mxu0 %v2989
        %3327 = vmatprep.subr.bf16.mxu0 %v2994
        %3328 = vmatpush1.bf16.msra.mxu0 %v2993
        %3329 = vmatprep.subr.bf16.mxu0 %v2998
        %3330 = vmatpush1.bf16.msra.mxu0 %v2997
        %3331 = vmatprep.subr.bf16.mxu0 %v3002
        %3332 = vmatpush1.bf16.msra.mxu0 %v3001
        %3333 = vmatprep.subr.bf16.mxu0 %v3006
        %3334 = vmatpush1.bf16.msra.mxu0 %v3005
        %3335 = vmatprep.subr.bf16.mxu0 %v3010
        %3336 = vmatpush1.bf16.msra.mxu0 %v3009
        %3337 = vmatprep.subr.bf16.mxu0 %v3014
        %3338 = vmatpush1.bf16.msra.mxu0 %v3013
        %3339 = vmatprep.subr.bf16.mxu0 %v3018
        %3340 = vmatpush1.bf16.msra.mxu0 %v3017
        %3341 = vmatprep.subr.bf16.mxu0 %v3022
        %3342 = vmatpush1.bf16.msra.mxu0 %v3021
        %3343 = vmatprep.subr.bf16.mxu0 %v3026
        %3344 = vmatpush1.bf16.msra.mxu0 %v3025
        %3345 = vmatprep.subr.bf16.mxu0 %v3030
        %3346 = vmatpush1.bf16.msra.mxu0 %v3029
        %3347 = vmatprep.subr.bf16.mxu0 %v3034
        %3348 = vmatpush1.bf16.msra.mxu0 %v3033
        %3349 = vmatprep.subr.bf16.mxu0 %v3038
        %3350 = vmatpush1.bf16.msra.mxu0 %v3037
        %3351 = vmatprep.mubr.bf16.mxu0 %v2073
        %3352 = vmatmul.mubr.bf16.gmra.mrb[0].mxu0 %v2072
        %v3353 = vpop.f32.mrb[0].mxu0
        %v3354 = vadd.f32 %v3311, %v3353
        %v3355 = vpop.f32.mrb[0].mxu0
        %v3356 = vadd.f32 %v3313, %v3355
        %v3357 = vpop.f32.mrb[0].mxu0
        %v3358 = vadd.f32 %v3315, %v3357
        %v3359 = vpop.f32.mrb[0].mxu0
        %v3360 = vadd.f32 %v3317, %v3359
        %3361 = vdwg.mxu0
        %3362 = vmatprep.subr.bf16.mxu0 %v2852
        %3363 = vmatpush1.bf16.msra.mxu0 %v2851
        %3364 = vmatprep.subr.bf16.mxu0 %v2856
        %3365 = vmatpush1.bf16.msra.mxu0 %v2855
        %3366 = vmatprep.subr.bf16.mxu0 %v2860
        %3367 = vmatpush1.bf16.msra.mxu0 %v2859
        %3368 = vmatprep.subr.bf16.mxu0 %v2864
        %3369 = vmatpush1.bf16.msra.mxu0 %v2863
        %3370 = vmatprep.subr.bf16.mxu0 %v2868
        %3371 = vmatpush1.bf16.msra.mxu0 %v2867
        %3372 = vmatprep.subr.bf16.mxu0 %v2872
        %3373 = vmatpush1.bf16.msra.mxu0 %v2871
        %3374 = vmatprep.subr.bf16.mxu0 %v2876
        %3375 = vmatpush1.bf16.msra.mxu0 %v2875
        %3376 = vmatprep.subr.bf16.mxu0 %v2880
        %3377 = vmatpush1.bf16.msra.mxu0 %v2879
        %3378 = vmatprep.subr.bf16.mxu0 %v2884
        %3379 = vmatpush1.bf16.msra.mxu0 %v2883
        %3380 = vmatprep.subr.bf16.mxu0 %v2888
        %3381 = vmatpush1.bf16.msra.mxu0 %v2887
        %3382 = vmatprep.subr.bf16.mxu0 %v2892
        %3383 = vmatpush1.bf16.msra.mxu0 %v2891
        %3384 = vmatprep.subr.bf16.mxu0 %v2896
        %3385 = vmatpush1.bf16.msra.mxu0 %v2895
        %3386 = vmatprep.subr.bf16.mxu0 %v2900
        %3387 = vmatpush1.bf16.msra.mxu0 %v2899
        %3388 = vmatprep.subr.bf16.mxu0 %v2904
        %3389 = vmatpush1.bf16.msra.mxu0 %v2903
        %3390 = vmatprep.subr.bf16.mxu0 %v2908
        %3391 = vmatpush1.bf16.msra.mxu0 %v2907
        %3392 = vmatprep.subr.bf16.mxu0 %v2912
        %3393 = vmatpush1.bf16.msra.mxu0 %v2911
        %3394 = vmatprep.mubr.bf16.mxu0 %v2069
        %3395 = vmatmul.mubr.bf16.gmra.mrb[0].mxu0 %v2068
        %v3396 = vpop.f32.mrb[0].mxu0
        %v3397 = vadd.f32 0.0, %v3396
        %v3398 = vpop.f32.mrb[0].mxu0
        %v3399 = vadd.f32 0.0, %v3398
        %v3400 = vpop.f32.mrb[0].mxu0
        %v3401 = vadd.f32 0.0, %v3400
        %v3402 = vpop.f32.mrb[0].mxu0
        %v3403 = vadd.f32 0.0, %v3402
        %3404 = vdwg.mxu0
        %3405 = vmatprep.subr.bf16.mxu0 %v2916
        %3406 = vmatpush1.bf16.msra.mxu0 %v2915
        %3407 = vmatprep.subr.bf16.mxu0 %v2920
        %3408 = vmatpush1.bf16.msra.mxu0 %v2919
        %3409 = vmatprep.subr.bf16.mxu0 %v2924
        %3410 = vmatpush1.bf16.msra.mxu0 %v2923
        %3411 = vmatprep.subr.bf16.mxu0 %v2928
        %3412 = vmatpush1.bf16.msra.mxu0 %v2927
        %3413 = vmatprep.subr.bf16.mxu0 %v2932
        %3414 = vmatpush1.bf16.msra.mxu0 %v2931
        %3415 = vmatprep.subr.bf16.mxu0 %v2936
        %3416 = vmatpush1.bf16.msra.mxu0 %v2935
        %3417 = vmatprep.subr.bf16.mxu0 %v2940
        %3418 = vmatpush1.bf16.msra.mxu0 %v2939
        %3419 = vmatprep.subr.bf16.mxu0 %v2944
        %3420 = vmatpush1.bf16.msra.mxu0 %v2943
        %3421 = vmatprep.subr.bf16.mxu0 %v2948
        %3422 = vmatpush1.bf16.msra.mxu0 %v2947
        %3423 = vmatprep.subr.bf16.mxu0 %v2952
        %3424 = vmatpush1.bf16.msra.mxu0 %v2951
        %3425 = vmatprep.subr.bf16.mxu0 %v2956
        %3426 = vmatpush1.bf16.msra.mxu0 %v2955
        %3427 = vmatprep.subr.bf16.mxu0 %v2960
        %3428 = vmatpush1.bf16.msra.mxu0 %v2959
        %3429 = vmatprep.subr.bf16.mxu0 %v2964
        %3430 = vmatpush1.bf16.msra.mxu0 %v2963
        %3431 = vmatprep.subr.bf16.mxu0 %v2968
        %3432 = vmatpush1.bf16.msra.mxu0 %v2967
        %3433 = vmatprep.subr.bf16.mxu0 %v2972
        %3434 = vmatpush1.bf16.msra.mxu0 %v2971
        %3435 = vmatprep.subr.bf16.mxu0 %v2976
        %3436 = vmatpush1.bf16.msra.mxu0 %v2975
        %3437 = vmatprep.mubr.bf16.mxu0 %v2071
        %3438 = vmatmul.mubr.bf16.gmra.mrb[0].mxu0 %v2070
        %v3439 = vpop.f32.mrb[0].mxu0
        %v3440 = vadd.f32 %v3397, %v3439
        %v3441 = vpop.f32.mrb[0].mxu0
        %v3442 = vadd.f32 %v3399, %v3441
        %v3443 = vpop.f32.mrb[0].mxu0
        %v3444 = vadd.f32 %v3401, %v3443
        %v3445 = vpop.f32.mrb[0].mxu0
        %v3446 = vadd.f32 %v3403, %v3445
        %3447 = vdwg.mxu0
        %3448 = vmatprep.subr.bf16.mxu0 %v2980
        %3449 = vmatpush1.bf16.msra.mxu0 %v2979
        %3450 = vmatprep.subr.bf16.mxu0 %v2984
        %3451 = vmatpush1.bf16.msra.mxu0 %v2983
        %3452 = vmatprep.subr.bf16.mxu0 %v2988
        %3453 = vmatpush1.bf16.msra.mxu0 %v2987
        %3454 = vmatprep.subr.bf16.mxu0 %v2992
        %3455 = vmatpush1.bf16.msra.mxu0 %v2991
        %3456 = vmatprep.subr.bf16.mxu0 %v2996
        %3457 = vmatpush1.bf16.msra.mxu0 %v2995
        %3458 = vmatprep.subr.bf16.mxu0 %v3000
        %3459 = vmatpush1.bf16.msra.mxu0 %v2999
        %3460 = vmatprep.subr.bf16.mxu0 %v3004
        %3461 = vmatpush1.bf16.msra.mxu0 %v3003
        %3462 = vmatprep.subr.bf16.mxu0 %v3008
        %3463 = vmatpush1.bf16.msra.mxu0 %v3007
        %3464 = vmatprep.subr.bf16.mxu0 %v3012
        %3465 = vmatpush1.bf16.msra.mxu0 %v3011
        %3466 = vmatprep.subr.bf16.mxu0 %v3016
        %3467 = vmatpush1.bf16.msra.mxu0 %v3015
        %3468 = vmatprep.subr.bf16.mxu0 %v3020
        %3469 = vmatpush1.bf16.msra.mxu0 %v3019
        %3470 = vmatprep.subr.bf16.mxu0 %v3024
        %3471 = vmatpush1.bf16.msra.mxu0 %v3023
        %3472 = vmatprep.subr.bf16.mxu0 %v3028
        %3473 = vmatpush1.bf16.msra.mxu0 %v3027
        %3474 = vmatprep.subr.bf16.mxu0 %v3032
        %3475 = vmatpush1.bf16.msra.mxu0 %v3031
        %3476 = vmatprep.subr.bf16.mxu0 %v3036
        %3477 = vmatpush1.bf16.msra.mxu0 %v3035
        %3478 = vmatprep.subr.bf16.mxu0 %v3040
        %3479 = vmatpush1.bf16.msra.mxu0 %v3039
        %3480 = vmatprep.mubr.bf16.mxu0 %v2073
        %3481 = vmatmul.mubr.bf16.gmra.mrb[0].mxu0 %v2072
        %v3482 = vpop.f32.mrb[0].mxu0
        %v3483 = vadd.f32 %v3440, %v3482
        %v3484 = vpop.f32.mrb[0].mxu0
        %v3485 = vadd.f32 %v3442, %v3484
        %v3486 = vpop.f32.mrb[0].mxu0
        %v3487 = vadd.f32 %v3444, %v3486
        %v3488 = vpop.f32.mrb[0].mxu0
        %v3489 = vadd.f32 %v3446, %v3488
        %3490 = vdwg.mxu0
        %v3491 = vmax.f32 %v3354, %v3356
        %v3492 = vmax.f32 %v3358, %v3360
        %v3493 = vmax.f32 %v3483, %v3485
        %v3494 = vmax.f32 %v3487, %v3489
        %v3495 = vmax.f32 %v3491, %v3493
        %v3496 = vmax.f32 %v3492, %v3494
        %v3498 = vlaneseq
        %v3499 = vshrl.u32 %v3498, 7
        %v3500 = vsub.s32 0, %v3499
        %v3501 = vrot.slane %v2272, %v3500
        %v3503 = vadd.f32 %v3495, %v3501
        %v3504 = vadd.f32 %v3496, %v3501
        %v3505 = vmax.f32 %v3503, 0.0
        %v3506 = vmax.f32 %v3504, 0.0
        %3507 = vmatprep.subr.bf16.mxu0 %v2850
        %3508 = vmatpush1.bf16.msra.mxu0 %v2849
        %3509 = vmatprep.subr.bf16.mxu0 %v2854
        %3510 = vmatpush1.bf16.msra.mxu0 %v2853
        %3511 = vmatprep.subr.bf16.mxu0 %v2858
        %3512 = vmatpush1.bf16.msra.mxu0 %v2857
        %3513 = vmatprep.subr.bf16.mxu0 %v2862
        %3514 = vmatpush1.bf16.msra.mxu0 %v2861
        %3515 = vmatprep.subr.bf16.mxu0 %v2866
        %3516 = vmatpush1.bf16.msra.mxu0 %v2865
        %3517 = vmatprep.subr.bf16.mxu0 %v2870
        %3518 = vmatpush1.bf16.msra.mxu0 %v2869
        %3519 = vmatprep.subr.bf16.mxu0 %v2874
        %3520 = vmatpush1.bf16.msra.mxu0 %v2873
        %3521 = vmatprep.subr.bf16.mxu0 %v2878
        %3522 = vmatpush1.bf16.msra.mxu0 %v2877
        %3523 = vmatprep.subr.bf16.mxu0 %v2882
        %3524 = vmatpush1.bf16.msra.mxu0 %v2881
        %3525 = vmatprep.subr.bf16.mxu0 %v2886
        %3526 = vmatpush1.bf16.msra.mxu0 %v2885
        %3527 = vmatprep.subr.bf16.mxu0 %v2890
        %3528 = vmatpush1.bf16.msra.mxu0 %v2889
        %3529 = vmatprep.subr.bf16.mxu0 %v2894
        %3530 = vmatpush1.bf16.msra.mxu0 %v2893
        %3531 = vmatprep.subr.bf16.mxu0 %v2898
        %3532 = vmatpush1.bf16.msra.mxu0 %v2897
        %3533 = vmatprep.subr.bf16.mxu0 %v2902
        %3534 = vmatpush1.bf16.msra.mxu0 %v2901
        %3535 = vmatprep.subr.bf16.mxu0 %v2906
        %3536 = vmatpush1.bf16.msra.mxu0 %v2905
        %3537 = vmatprep.subr.bf16.mxu0 %v2910
        %3538 = vmatpush1.bf16.msra.mxu0 %v2909
        %3539 = vmatprep.mubr.bf16.mxu0 %v2071
        %3540 = vmatmul.mubr.bf16.gmra.mrb[0].mxu0 %v2070
        %v3541 = vpop.f32.mrb[0].mxu0
        %v3542 = vadd.f32 0.0, %v3541
        %v3543 = vpop.f32.mrb[0].mxu0
        %v3544 = vadd.f32 0.0, %v3543
        %v3545 = vpop.f32.mrb[0].mxu0
        %v3546 = vadd.f32 0.0, %v3545
        %v3547 = vpop.f32.mrb[0].mxu0
        %v3548 = vadd.f32 0.0, %v3547
        %3549 = vdwg.mxu0
        %3550 = vmatprep.subr.bf16.mxu0 %v2914
        %3551 = vmatpush1.bf16.msra.mxu0 %v2913
        %3552 = vmatprep.subr.bf16.mxu0 %v2918
        %3553 = vmatpush1.bf16.msra.mxu0 %v2917
        %3554 = vmatprep.subr.bf16.mxu0 %v2922
        %3555 = vmatpush1.bf16.msra.mxu0 %v2921
        %3556 = vmatprep.subr.bf16.mxu0 %v2926
        %3557 = vmatpush1.bf16.msra.mxu0 %v2925
        %3558 = vmatprep.subr.bf16.mxu0 %v2930
        %3559 = vmatpush1.bf16.msra.mxu0 %v2929
        %3560 = vmatprep.subr.bf16.mxu0 %v2934
        %3561 = vmatpush1.bf16.msra.mxu0 %v2933
        %3562 = vmatprep.subr.bf16.mxu0 %v2938
        %3563 = vmatpush1.bf16.msra.mxu0 %v2937
        %3564 = vmatprep.subr.bf16.mxu0 %v2942
        %3565 = vmatpush1.bf16.msra.mxu0 %v2941
        %3566 = vmatprep.subr.bf16.mxu0 %v2946
        %3567 = vmatpush1.bf16.msra.mxu0 %v2945
        %3568 = vmatprep.subr.bf16.mxu0 %v2950
        %3569 = vmatpush1.bf16.msra.mxu0 %v2949
        %3570 = vmatprep.subr.bf16.mxu0 %v2954
        %3571 = vmatpush1.bf16.msra.mxu0 %v2953
        %3572 = vmatprep.subr.bf16.mxu0 %v2958
        %3573 = vmatpush1.bf16.msra.mxu0 %v2957
        %3574 = vmatprep.subr.bf16.mxu0 %v2962
        %3575 = vmatpush1.bf16.msra.mxu0 %v2961
        %3576 = vmatprep.subr.bf16.mxu0 %v2966
        %3577 = vmatpush1.bf16.msra.mxu0 %v2965
        %3578 = vmatprep.subr.bf16.mxu0 %v2970
        %3579 = vmatpush1.bf16.msra.mxu0 %v2969
        %3580 = vmatprep.subr.bf16.mxu0 %v2974
        %3581 = vmatpush1.bf16.msra.mxu0 %v2973
        %3582 = vmatprep.mubr.bf16.mxu0 %v2073
        %3583 = vmatmul.mubr.bf16.gmra.mrb[0].mxu0 %v2072
        %v3584 = vpop.f32.mrb[0].mxu0
        %v3585 = vadd.f32 %v3542, %v3584
        %v3586 = vpop.f32.mrb[0].mxu0
        %v3587 = vadd.f32 %v3544, %v3586
        %v3588 = vpop.f32.mrb[0].mxu0
        %v3589 = vadd.f32 %v3546, %v3588
        %v3590 = vpop.f32.mrb[0].mxu0
        %v3591 = vadd.f32 %v3548, %v3590
        %3592 = vdwg.mxu0
        %3593 = vmatprep.subr.bf16.mxu0 %v2978
        %3594 = vmatpush1.bf16.msra.mxu0 %v2977
        %3595 = vmatprep.subr.bf16.mxu0 %v2982
        %3596 = vmatpush1.bf16.msra.mxu0 %v2981
        %3597 = vmatprep.subr.bf16.mxu0 %v2986
        %3598 = vmatpush1.bf16.msra.mxu0 %v2985
        %3599 = vmatprep.subr.bf16.mxu0 %v2990
        %3600 = vmatpush1.bf16.msra.mxu0 %v2989
        %3601 = vmatprep.subr.bf16.mxu0 %v2994
        %3602 = vmatpush1.bf16.msra.mxu0 %v2993
        %3603 = vmatprep.subr.bf16.mxu0 %v2998
        %3604 = vmatpush1.bf16.msra.mxu0 %v2997
        %3605 = vmatprep.subr.bf16.mxu0 %v3002
        %3606 = vmatpush1.bf16.msra.mxu0 %v3001
        %3607 = vmatprep.subr.bf16.mxu0 %v3006
        %3608 = vmatpush1.bf16.msra.mxu0 %v3005
        %3609 = vmatprep.subr.bf16.mxu0 %v3010
        %3610 = vmatpush1.bf16.msra.mxu0 %v3009
        %3611 = vmatprep.subr.bf16.mxu0 %v3014
        %3612 = vmatpush1.bf16.msra.mxu0 %v3013
        %3613 = vmatprep.subr.bf16.mxu0 %v3018
        %3614 = vmatpush1.bf16.msra.mxu0 %v3017
        %3615 = vmatprep.subr.bf16.mxu0 %v3022
        %3616 = vmatpush1.bf16.msra.mxu0 %v3021
        %3617 = vmatprep.subr.bf16.mxu0 %v3026
        %3618 = vmatpush1.bf16.msra.mxu0 %v3025
        %3619 = vmatprep.subr.bf16.mxu0 %v3030
        %3620 = vmatpush1.bf16.msra.mxu0 %v3029
        %3621 = vmatprep.subr.bf16.mxu0 %v3034
        %3622 = vmatpush1.bf16.msra.mxu0 %v3033
        %3623 = vmatprep.subr.bf16.mxu0 %v3038
        %3624 = vmatpush1.bf16.msra.mxu0 %v3037
        %3625 = vmatprep.mubr.bf16.mxu0 %v2075
        %3626 = vmatmul.mubr.bf16.gmra.mrb[0].mxu0 %v2074
        %v3627 = vpop.f32.mrb[0].mxu0
        %v3628 = vadd.f32 %v3585, %v3627
        %v3629 = vpop.f32.mrb[0].mxu0
        %v3630 = vadd.f32 %v3587, %v3629
        %v3631 = vpop.f32.mrb[0].mxu0
        %v3632 = vadd.f32 %v3589, %v3631
        %v3633 = vpop.f32.mrb[0].mxu0
        %v3634 = vadd.f32 %v3591, %v3633
        %3635 = vdwg.mxu0
        %3636 = vmatprep.subr.bf16.mxu0 %v2852
        %3637 = vmatpush1.bf16.msra.mxu0 %v2851
        %3638 = vmatprep.subr.bf16.mxu0 %v2856
        %3639 = vmatpush1.bf16.msra.mxu0 %v2855
        %3640 = vmatprep.subr.bf16.mxu0 %v2860
        %3641 = vmatpush1.bf16.msra.mxu0 %v2859
        %3642 = vmatprep.subr.bf16.mxu0 %v2864
        %3643 = vmatpush1.bf16.msra.mxu0 %v2863
        %3644 = vmatprep.subr.bf16.mxu0 %v2868
        %3645 = vmatpush1.bf16.msra.mxu0 %v2867
        %3646 = vmatprep.subr.bf16.mxu0 %v2872
        %3647 = vmatpush1.bf16.msra.mxu0 %v2871
        %3648 = vmatprep.subr.bf16.mxu0 %v2876
        %3649 = vmatpush1.bf16.msra.mxu0 %v2875
        %3650 = vmatprep.subr.bf16.mxu0 %v2880
        %3651 = vmatpush1.bf16.msra.mxu0 %v2879
        %3652 = vmatprep.subr.bf16.mxu0 %v2884
        %3653 = vmatpush1.bf16.msra.mxu0 %v2883
        %3654 = vmatprep.subr.bf16.mxu0 %v2888
        %3655 = vmatpush1.bf16.msra.mxu0 %v2887
        %3656 = vmatprep.subr.bf16.mxu0 %v2892
        %3657 = vmatpush1.bf16.msra.mxu0 %v2891
        %3658 = vmatprep.subr.bf16.mxu0 %v2896
        %3659 = vmatpush1.bf16.msra.mxu0 %v2895
        %3660 = vmatprep.subr.bf16.mxu0 %v2900
        %3661 = vmatpush1.bf16.msra.mxu0 %v2899
        %3662 = vmatprep.subr.bf16.mxu0 %v2904
        %3663 = vmatpush1.bf16.msra.mxu0 %v2903
        %3664 = vmatprep.subr.bf16.mxu0 %v2908
        %3665 = vmatpush1.bf16.msra.mxu0 %v2907
        %3666 = vmatprep.subr.bf16.mxu0 %v2912
        %3667 = vmatpush1.bf16.msra.mxu0 %v2911
        %3668 = vmatprep.mubr.bf16.mxu0 %v2071
        %3669 = vmatmul.mubr.bf16.gmra.mrb[0].mxu0 %v2070
        %v3670 = vpop.f32.mrb[0].mxu0
        %v3671 = vadd.f32 0.0, %v3670
        %v3672 = vpop.f32.mrb[0].mxu0
        %v3673 = vadd.f32 0.0, %v3672
        %v3674 = vpop.f32.mrb[0].mxu0
        %v3675 = vadd.f32 0.0, %v3674
        %v3676 = vpop.f32.mrb[0].mxu0
        %v3677 = vadd.f32 0.0, %v3676
        %3678 = vdwg.mxu0
        %3679 = vmatprep.subr.bf16.mxu0 %v2916
        %3680 = vmatpush1.bf16.msra.mxu0 %v2915
        %3681 = vmatprep.subr.bf16.mxu0 %v2920
        %3682 = vmatpush1.bf16.msra.mxu0 %v2919
        %3683 = vmatprep.subr.bf16.mxu0 %v2924
        %3684 = vmatpush1.bf16.msra.mxu0 %v2923
        %3685 = vmatprep.subr.bf16.mxu0 %v2928
        %3686 = vmatpush1.bf16.msra.mxu0 %v2927
        %3687 = vmatprep.subr.bf16.mxu0 %v2932
        %3688 = vmatpush1.bf16.msra.mxu0 %v2931
        %3689 = vmatprep.subr.bf16.mxu0 %v2936
        %3690 = vmatpush1.bf16.msra.mxu0 %v2935
        %3691 = vmatprep.subr.bf16.mxu0 %v2940
        %3692 = vmatpush1.bf16.msra.mxu0 %v2939
        %3693 = vmatprep.subr.bf16.mxu0 %v2944
        %3694 = vmatpush1.bf16.msra.mxu0 %v2943
        %3695 = vmatprep.subr.bf16.mxu0 %v2948
        %3696 = vmatpush1.bf16.msra.mxu0 %v2947
        %3697 = vmatprep.subr.bf16.mxu0 %v2952
        %3698 = vmatpush1.bf16.msra.mxu0 %v2951
        %3699 = vmatprep.subr.bf16.mxu0 %v2956
        %3700 = vmatpush1.bf16.msra.mxu0 %v2955
        %3701 = vmatprep.subr.bf16.mxu0 %v2960
        %3702 = vmatpush1.bf16.msra.mxu0 %v2959
        %3703 = vmatprep.subr.bf16.mxu0 %v2964
        %3704 = vmatpush1.bf16.msra.mxu0 %v2963
        %3705 = vmatprep.subr.bf16.mxu0 %v2968
        %3706 = vmatpush1.bf16.msra.mxu0 %v2967
        %3707 = vmatprep.subr.bf16.mxu0 %v2972
        %3708 = vmatpush1.bf16.msra.mxu0 %v2971
        %3709 = vmatprep.subr.bf16.mxu0 %v2976
        %3710 = vmatpush1.bf16.msra.mxu0 %v2975
        %3711 = vmatprep.mubr.bf16.mxu0 %v2073
        %3712 = vmatmul.mubr.bf16.gmra.mrb[0].mxu0 %v2072
        %v3713 = vpop.f32.mrb[0].mxu0
        %v3714 = vadd.f32 %v3671, %v3713
        %v3715 = vpop.f32.mrb[0].mxu0
        %v3716 = vadd.f32 %v3673, %v3715
        %v3717 = vpop.f32.mrb[0].mxu0
        %v3718 = vadd.f32 %v3675, %v3717
        %v3719 = vpop.f32.mrb[0].mxu0
        %v3720 = vadd.f32 %v3677, %v3719
        %3721 = vdwg.mxu0
        %3722 = vmatprep.subr.bf16.mxu0 %v2980
        %3723 = vmatpush1.bf16.msra.mxu0 %v2979
        %3724 = vmatprep.subr.bf16.mxu0 %v2984
        %3725 = vmatpush1.bf16.msra.mxu0 %v2983
        %3726 = vmatprep.subr.bf16.mxu0 %v2988
        %3727 = vmatpush1.bf16.msra.mxu0 %v2987
        %3728 = vmatprep.subr.bf16.mxu0 %v2992
        %3729 = vmatpush1.bf16.msra.mxu0 %v2991
        %3730 = vmatprep.subr.bf16.mxu0 %v2996
        %3731 = vmatpush1.bf16.msra.mxu0 %v2995
        %3732 = vmatprep.subr.bf16.mxu0 %v3000
        %3733 = vmatpush1.bf16.msra.mxu0 %v2999
        %3734 = vmatprep.subr.bf16.mxu0 %v3004
        %3735 = vmatpush1.bf16.msra.mxu0 %v3003
        %3736 = vmatprep.subr.bf16.mxu0 %v3008
        %3737 = vmatpush1.bf16.msra.mxu0 %v3007
        %3738 = vmatprep.subr.bf16.mxu0 %v3012
        %3739 = vmatpush1.bf16.msra.mxu0 %v3011
        %3740 = vmatprep.subr.bf16.mxu0 %v3016
        %3741 = vmatpush1.bf16.msra.mxu0 %v3015
        %3742 = vmatprep.subr.bf16.mxu0 %v3020
        %3743 = vmatpush1.bf16.msra.mxu0 %v3019
        %3744 = vmatprep.subr.bf16.mxu0 %v3024
        %3745 = vmatpush1.bf16.msra.mxu0 %v3023
        %3746 = vmatprep.subr.bf16.mxu0 %v3028
        %3747 = vmatpush1.bf16.msra.mxu0 %v3027
        %3748 = vmatprep.subr.bf16.mxu0 %v3032
        %3749 = vmatpush1.bf16.msra.mxu0 %v3031
        %3750 = vmatprep.subr.bf16.mxu0 %v3036
        %3751 = vmatpush1.bf16.msra.mxu0 %v3035
        %3752 = vmatprep.subr.bf16.mxu0 %v3040
        %3753 = vmatpush1.bf16.msra.mxu0 %v3039
        %3754 = vmatprep.mubr.bf16.mxu0 %v2075
        %3755 = vmatmul.mubr.bf16.gmra.mrb[0].mxu0 %v2074
        %v3756 = vpop.f32.mrb[0].mxu0
        %v3757 = vadd.f32 %v3714, %v3756
        %v3758 = vpop.f32.mrb[0].mxu0
        %v3759 = vadd.f32 %v3716, %v3758
        %v3760 = vpop.f32.mrb[0].mxu0
        %v3761 = vadd.f32 %v3718, %v3760
        %v3762 = vpop.f32.mrb[0].mxu0
        %v3763 = vadd.f32 %v3720, %v3762
        %3764 = vdwg.mxu0
        %v3765 = vmax.f32 %v3628, %v3630
        %v3766 = vmax.f32 %v3632, %v3634
        %v3767 = vmax.f32 %v3757, %v3759
        %v3768 = vmax.f32 %v3761, %v3763
        %v3769 = vmax.f32 %v3765, %v3767
        %v3770 = vmax.f32 %v3766, %v3768
        %v3771 = vadd.f32 %v3769, %v3501
        %v3772 = vadd.f32 %v3770, %v3501
        %v3773 = vmax.f32 %v3771, 0.0
        %v3774 = vmax.f32 %v3772, 0.0
        %3775 = vmatprep.subr.bf16.mxu0 %v2850
        %3776 = vmatpush1.bf16.msra.mxu0 %v2849
        %3777 = vmatprep.subr.bf16.mxu0 %v2854
        %3778 = vmatpush1.bf16.msra.mxu0 %v2853
        %3779 = vmatprep.subr.bf16.mxu0 %v2858
        %3780 = vmatpush1.bf16.msra.mxu0 %v2857
        %3781 = vmatprep.subr.bf16.mxu0 %v2862
        %3782 = vmatpush1.bf16.msra.mxu0 %v2861
        %3783 = vmatprep.subr.bf16.mxu0 %v2866
        %3784 = vmatpush1.bf16.msra.mxu0 %v2865
        %3785 = vmatprep.subr.bf16.mxu0 %v2870
        %3786 = vmatpush1.bf16.msra.mxu0 %v2869
        %3787 = vmatprep.subr.bf16.mxu0 %v2874
        %3788 = vmatpush1.bf16.msra.mxu0 %v2873
        %3789 = vmatprep.subr.bf16.mxu0 %v2878
        %3790 = vmatpush1.bf16.msra.mxu0 %v2877
        %3791 = vmatprep.subr.bf16.mxu0 %v2882
        %3792 = vmatpush1.bf16.msra.mxu0 %v2881
        %3793 = vmatprep.subr.bf16.mxu0 %v2886
        %3794 = vmatpush1.bf16.msra.mxu0 %v2885
        %3795 = vmatprep.subr.bf16.mxu0 %v2890
        %3796 = vmatpush1.bf16.msra.mxu0 %v2889
        %3797 = vmatprep.subr.bf16.mxu0 %v2894
        %3798 = vmatpush1.bf16.msra.mxu0 %v2893
        %3799 = vmatprep.subr.bf16.mxu0 %v2898
        %3800 = vmatpush1.bf16.msra.mxu0 %v2897
        %3801 = vmatprep.subr.bf16.mxu0 %v2902
        %3802 = vmatpush1.bf16.msra.mxu0 %v2901
        %3803 = vmatprep.subr.bf16.mxu0 %v2906
        %3804 = vmatpush1.bf16.msra.mxu0 %v2905
        %3805 = vmatprep.subr.bf16.mxu0 %v2910
        %3806 = vmatpush1.bf16.msra.mxu0 %v2909
        %3807 = vmatprep.mubr.bf16.mxu0 %v2073
        %3808 = vmatmul.mubr.bf16.gmra.mrb[0].mxu0 %v2072
        %v3809 = vpop.f32.mrb[0].mxu0
        %v3810 = vadd.f32 0.0, %v3809
        %v3811 = vpop.f32.mrb[0].mxu0
        %v3812 = vadd.f32 0.0, %v3811
        %v3813 = vpop.f32.mrb[0].mxu0
        %v3814 = vadd.f32 0.0, %v3813
        %v3815 = vpop.f32.mrb[0].mxu0
        %v3816 = vadd.f32 0.0, %v3815
        %3817 = vdwg.mxu0
        %3818 = vmatprep.subr.bf16.mxu0 %v2914
        %3819 = vmatpush1.bf16.msra.mxu0 %v2913
        %3820 = vmatprep.subr.bf16.mxu0 %v2918
        %3821 = vmatpush1.bf16.msra.mxu0 %v2917
        %3822 = vmatprep.subr.bf16.mxu0 %v2922
        %3823 = vmatpush1.bf16.msra.mxu0 %v2921
        %3824 = vmatprep.subr.bf16.mxu0 %v2926
        %3825 = vmatpush1.bf16.msra.mxu0 %v2925
        %3826 = vmatprep.subr.bf16.mxu0 %v2930
        %3827 = vmatpush1.bf16.msra.mxu0 %v2929
        %3828 = vmatprep.subr.bf16.mxu0 %v2934
        %3829 = vmatpush1.bf16.msra.mxu0 %v2933
        %3830 = vmatprep.subr.bf16.mxu0 %v2938
        %3831 = vmatpush1.bf16.msra.mxu0 %v2937
        %3832 = vmatprep.subr.bf16.mxu0 %v2942
        %3833 = vmatpush1.bf16.msra.mxu0 %v2941
        %3834 = vmatprep.subr.bf16.mxu0 %v2946
        %3835 = vmatpush1.bf16.msra.mxu0 %v2945
        %3836 = vmatprep.subr.bf16.mxu0 %v2950
        %3837 = vmatpush1.bf16.msra.mxu0 %v2949
        %3838 = vmatprep.subr.bf16.mxu0 %v2954
        %3839 = vmatpush1.bf16.msra.mxu0 %v2953
        %3840 = vmatprep.subr.bf16.mxu0 %v2958
        %3841 = vmatpush1.bf16.msra.mxu0 %v2957
        %3842 = vmatprep.subr.bf16.mxu0 %v2962
        %3843 = vmatpush1.bf16.msra.mxu0 %v2961
        %3844 = vmatprep.subr.bf16.mxu0 %v2966
        %3845 = vmatpush1.bf16.msra.mxu0 %v2965
        %3846 = vmatprep.subr.bf16.mxu0 %v2970
        %3847 = vmatpush1.bf16.msra.mxu0 %v2969
        %3848 = vmatprep.subr.bf16.mxu0 %v2974
        %3849 = vmatpush1.bf16.msra.mxu0 %v2973
        %3850 = vmatprep.mubr.bf16.mxu0 %v2075
        %3851 = vmatmul.mubr.bf16.gmra.mrb[0].mxu0 %v2074
        %v3852 = vpop.f32.mrb[0].mxu0
        %v3853 = vadd.f32 %v3810, %v3852
        %v3854 = vpop.f32.mrb[0].mxu0
        %v3855 = vadd.f32 %v3812, %v3854
        %v3856 = vpop.f32.mrb[0].mxu0
        %v3857 = vadd.f32 %v3814, %v3856
        %v3858 = vpop.f32.mrb[0].mxu0
        %v3859 = vadd.f32 %v3816, %v3858
        %3860 = vdwg.mxu0
        %3861 = vmatprep.subr.bf16.mxu0 %v2978
        %3862 = vmatpush1.bf16.msra.mxu0 %v2977
        %3863 = vmatprep.subr.bf16.mxu0 %v2982
        %3864 = vmatpush1.bf16.msra.mxu0 %v2981
        %3865 = vmatprep.subr.bf16.mxu0 %v2986
        %3866 = vmatpush1.bf16.msra.mxu0 %v2985
        %3867 = vmatprep.subr.bf16.mxu0 %v2990
        %3868 = vmatpush1.bf16.msra.mxu0 %v2989
        %3869 = vmatprep.subr.bf16.mxu0 %v2994
        %3870 = vmatpush1.bf16.msra.mxu0 %v2993
        %3871 = vmatprep.subr.bf16.mxu0 %v2998
        %3872 = vmatpush1.bf16.msra.mxu0 %v2997
        %3873 = vmatprep.subr.bf16.mxu0 %v3002
        %3874 = vmatpush1.bf16.msra.mxu0 %v3001
        %3875 = vmatprep.subr.bf16.mxu0 %v3006
        %3876 = vmatpush1.bf16.msra.mxu0 %v3005
        %3877 = vmatprep.subr.bf16.mxu0 %v3010
        %3878 = vmatpush1.bf16.msra.mxu0 %v3009
        %3879 = vmatprep.subr.bf16.mxu0 %v3014
        %3880 = vmatpush1.bf16.msra.mxu0 %v3013
        %3881 = vmatprep.subr.bf16.mxu0 %v3018
        %3882 = vmatpush1.bf16.msra.mxu0 %v3017
        %3883 = vmatprep.subr.bf16.mxu0 %v3022
        %3884 = vmatpush1.bf16.msra.mxu0 %v3021
        %3885 = vmatprep.subr.bf16.mxu0 %v3026
        %3886 = vmatpush1.bf16.msra.mxu0 %v3025
        %3887 = vmatprep.subr.bf16.mxu0 %v3030
        %3888 = vmatpush1.bf16.msra.mxu0 %v3029
        %3889 = vmatprep.subr.bf16.mxu0 %v3034
        %3890 = vmatpush1.bf16.msra.mxu0 %v3033
        %3891 = vmatprep.subr.bf16.mxu0 %v3038
        %3892 = vmatpush1.bf16.msra.mxu0 %v3037
        %3893 = vmatprep.mubr.bf16.mxu0 %v2077
        %3894 = vmatmul.mubr.bf16.gmra.mrb[0].mxu0 %v2076
        %v3895 = vpop.f32.mrb[0].mxu0
        %v3896 = vadd.f32 %v3853, %v3895
        %v3897 = vpop.f32.mrb[0].mxu0
        %v3898 = vadd.f32 %v3855, %v3897
        %v3899 = vpop.f32.mrb[0].mxu0
        %v3900 = vadd.f32 %v3857, %v3899
        %v3901 = vpop.f32.mrb[0].mxu0
        %v3902 = vadd.f32 %v3859, %v3901
        %3903 = vdwg.mxu0
        %3904 = vmatprep.subr.bf16.mxu0 %v2852
        %3905 = vmatpush1.bf16.msra.mxu0 %v2851
        %3906 = vmatprep.subr.bf16.mxu0 %v2856
        %3907 = vmatpush1.bf16.msra.mxu0 %v2855
        %3908 = vmatprep.subr.bf16.mxu0 %v2860
        %3909 = vmatpush1.bf16.msra.mxu0 %v2859
        %3910 = vmatprep.subr.bf16.mxu0 %v2864
        %3911 = vmatpush1.bf16.msra.mxu0 %v2863
        %3912 = vmatprep.subr.bf16.mxu0 %v2868
        %3913 = vmatpush1.bf16.msra.mxu0 %v2867
        %3914 = vmatprep.subr.bf16.mxu0 %v2872
        %3915 = vmatpush1.bf16.msra.mxu0 %v2871
        %3916 = vmatprep.subr.bf16.mxu0 %v2876
        %3917 = vmatpush1.bf16.msra.mxu0 %v2875
        %3918 = vmatprep.subr.bf16.mxu0 %v2880
        %3919 = vmatpush1.bf16.msra.mxu0 %v2879
        %3920 = vmatprep.subr.bf16.mxu0 %v2884
        %3921 = vmatpush1.bf16.msra.mxu0 %v2883
        %3922 = vmatprep.subr.bf16.mxu0 %v2888
        %3923 = vmatpush1.bf16.msra.mxu0 %v2887
        %3924 = vmatprep.subr.bf16.mxu0 %v2892
        %3925 = vmatpush1.bf16.msra.mxu0 %v2891
        %3926 = vmatprep.subr.bf16.mxu0 %v2896
        %3927 = vmatpush1.bf16.msra.mxu0 %v2895
        %3928 = vmatprep.subr.bf16.mxu0 %v2900
        %3929 = vmatpush1.bf16.msra.mxu0 %v2899
        %3930 = vmatprep.subr.bf16.mxu0 %v2904
        %3931 = vmatpush1.bf16.msra.mxu0 %v2903
        %3932 = vmatprep.subr.bf16.mxu0 %v2908
        %3933 = vmatpush1.bf16.msra.mxu0 %v2907
        %3934 = vmatprep.subr.bf16.mxu0 %v2912
        %3935 = vmatpush1.bf16.msra.mxu0 %v2911
        %3936 = vmatprep.mubr.bf16.mxu0 %v2073
        %3937 = vmatmul.mubr.bf16.gmra.mrb[0].mxu0 %v2072
        %v3938 = vpop.f32.mrb[0].mxu0
        %v3939 = vadd.f32 0.0, %v3938
        %v3940 = vpop.f32.mrb[0].mxu0
        %v3941 = vadd.f32 0.0, %v3940
        %v3942 = vpop.f32.mrb[0].mxu0
        %v3943 = vadd.f32 0.0, %v3942
        %v3944 = vpop.f32.mrb[0].mxu0
        %v3945 = vadd.f32 0.0, %v3944
        %3946 = vdwg.mxu0
        %3947 = vmatprep.subr.bf16.mxu0 %v2916
        %3948 = vmatpush1.bf16.msra.mxu0 %v2915
        %3949 = vmatprep.subr.bf16.mxu0 %v2920
        %3950 = vmatpush1.bf16.msra.mxu0 %v2919
        %3951 = vmatprep.subr.bf16.mxu0 %v2924
        %3952 = vmatpush1.bf16.msra.mxu0 %v2923
        %3953 = vmatprep.subr.bf16.mxu0 %v2928
        %3954 = vmatpush1.bf16.msra.mxu0 %v2927
        %3955 = vmatprep.subr.bf16.mxu0 %v2932
        %3956 = vmatpush1.bf16.msra.mxu0 %v2931
        %3957 = vmatprep.subr.bf16.mxu0 %v2936
        %3958 = vmatpush1.bf16.msra.mxu0 %v2935
        %3959 = vmatprep.subr.bf16.mxu0 %v2940
        %3960 = vmatpush1.bf16.msra.mxu0 %v2939
        %3961 = vmatprep.subr.bf16.mxu0 %v2944
        %3962 = vmatpush1.bf16.msra.mxu0 %v2943
        %3963 = vmatprep.subr.bf16.mxu0 %v2948
        %3964 = vmatpush1.bf16.msra.mxu0 %v2947
        %3965 = vmatprep.subr.bf16.mxu0 %v2952
        %3966 = vmatpush1.bf16.msra.mxu0 %v2951
        %3967 = vmatprep.subr.bf16.mxu0 %v2956
        %3968 = vmatpush1.bf16.msra.mxu0 %v2955
        %3969 = vmatprep.subr.bf16.mxu0 %v2960
        %3970 = vmatpush1.bf16.msra.mxu0 %v2959
        %3971 = vmatprep.subr.bf16.mxu0 %v2964
        %3972 = vmatpush1.bf16.msra.mxu0 %v2963
        %3973 = vmatprep.subr.bf16.mxu0 %v2968
        %3974 = vmatpush1.bf16.msra.mxu0 %v2967
        %3975 = vmatprep.subr.bf16.mxu0 %v2972
        %3976 = vmatpush1.bf16.msra.mxu0 %v2971
        %3977 = vmatprep.subr.bf16.mxu0 %v2976
        %3978 = vmatpush1.bf16.msra.mxu0 %v2975
        %3979 = vmatprep.mubr.bf16.mxu0 %v2075
        %3980 = vmatmul.mubr.bf16.gmra.mrb[0].mxu0 %v2074
        %v3981 = vpop.f32.mrb[0].mxu0
        %v3982 = vadd.f32 %v3939, %v3981
        %v3983 = vpop.f32.mrb[0].mxu0
        %v3984 = vadd.f32 %v3941, %v3983
        %v3985 = vpop.f32.mrb[0].mxu0
        %v3986 = vadd.f32 %v3943, %v3985
        %v3987 = vpop.f32.mrb[0].mxu0
        %v3988 = vadd.f32 %v3945, %v3987
        %3989 = vdwg.mxu0
        %3990 = vmatprep.subr.bf16.mxu0 %v2980
        %3991 = vmatpush1.bf16.msra.mxu0 %v2979
        %3992 = vmatprep.subr.bf16.mxu0 %v2984
        %3993 = vmatpush1.bf16.msra.mxu0 %v2983
        %3994 = vmatprep.subr.bf16.mxu0 %v2988
        %3995 = vmatpush1.bf16.msra.mxu0 %v2987
        %3996 = vmatprep.subr.bf16.mxu0 %v2992
        %3997 = vmatpush1.bf16.msra.mxu0 %v2991
        %3998 = vmatprep.subr.bf16.mxu0 %v2996
        %3999 = vmatpush1.bf16.msra.mxu0 %v2995
        %4000 = vmatprep.subr.bf16.mxu0 %v3000
        %4001 = vmatpush1.bf16.msra.mxu0 %v2999
        %4002 = vmatprep.subr.bf16.mxu0 %v3004
        %4003 = vmatpush1.bf16.msra.mxu0 %v3003
        %4004 = vmatprep.subr.bf16.mxu0 %v3008
        %4005 = vmatpush1.bf16.msra.mxu0 %v3007
        %4006 = vmatprep.subr.bf16.mxu0 %v3012
        %4007 = vmatpush1.bf16.msra.mxu0 %v3011
        %4008 = vmatprep.subr.bf16.mxu0 %v3016
        %4009 = vmatpush1.bf16.msra.mxu0 %v3015
        %4010 = vmatprep.subr.bf16.mxu0 %v3020
        %4011 = vmatpush1.bf16.msra.mxu0 %v3019
        %4012 = vmatprep.subr.bf16.mxu0 %v3024
        %4013 = vmatpush1.bf16.msra.mxu0 %v3023
        %4014 = vmatprep.subr.bf16.mxu0 %v3028
        %4015 = vmatpush1.bf16.msra.mxu0 %v3027
        %4016 = vmatprep.subr.bf16.mxu0 %v3032
        %4017 = vmatpush1.bf16.msra.mxu0 %v3031
        %4018 = vmatprep.subr.bf16.mxu0 %v3036
        %4019 = vmatpush1.bf16.msra.mxu0 %v3035
        %4020 = vmatprep.subr.bf16.mxu0 %v3040
        %4021 = vmatpush1.bf16.msra.mxu0 %v3039
        %4022 = vmatprep.mubr.bf16.mxu0 %v2077
        %4023 = vmatmul.mubr.bf16.gmra.mrb[0].mxu0 %v2076
        %v4024 = vpop.f32.mrb[0].mxu0
        %v4025 = vadd.f32 %v3982, %v4024
        %v4026 = vpop.f32.mrb[0].mxu0
        %v4027 = vadd.f32 %v3984, %v4026
        %v4028 = vpop.f32.mrb[0].mxu0
        %v4029 = vadd.f32 %v3986, %v4028
        %v4030 = vpop.f32.mrb[0].mxu0
        %v4031 = vadd.f32 %v3988, %v4030
        %4032 = vdwg.mxu0
        %v4033 = vmax.f32 %v3896, %v3898
        %v4034 = vmax.f32 %v3900, %v3902
        %v4035 = vmax.f32 %v4025, %v4027
        %v4036 = vmax.f32 %v4029, %v4031
        %v4037 = vmax.f32 %v4033, %v4035
        %v4038 = vmax.f32 %v4034, %v4036
        %v4039 = vadd.f32 %v4037, %v3501
        %v4040 = vadd.f32 %v4038, %v3501
        %v4041 = vmax.f32 %v4039, 0.0
        %v4042 = vmax.f32 %v4040, 0.0
        %4043 = vmatprep.subr.bf16.mxu0 %v2850
        %4044 = vmatpush1.bf16.msra.mxu0 %v2849
        %4045 = vmatprep.subr.bf16.mxu0 %v2854
        %4046 = vmatpush1.bf16.msra.mxu0 %v2853
        %4047 = vmatprep.subr.bf16.mxu0 %v2858
        %4048 = vmatpush1.bf16.msra.mxu0 %v2857
        %4049 = vmatprep.subr.bf16.mxu0 %v2862
        %4050 = vmatpush1.bf16.msra.mxu0 %v2861
        %4051 = vmatprep.subr.bf16.mxu0 %v2866
        %4052 = vmatpush1.bf16.msra.mxu0 %v2865
        %4053 = vmatprep.subr.bf16.mxu0 %v2870
        %4054 = vmatpush1.bf16.msra.mxu0 %v2869
        %4055 = vmatprep.subr.bf16.mxu0 %v2874
        %4056 = vmatpush1.bf16.msra.mxu0 %v2873
        %4057 = vmatprep.subr.bf16.mxu0 %v2878
        %4058 = vmatpush1.bf16.msra.mxu0 %v2877
        %4059 = vmatprep.subr.bf16.mxu0 %v2882
        %4060 = vmatpush1.bf16.msra.mxu0 %v2881
        %4061 = vmatprep.subr.bf16.mxu0 %v2886
        %4062 = vmatpush1.bf16.msra.mxu0 %v2885
        %4063 = vmatprep.subr.bf16.mxu0 %v2890
        %4064 = vmatpush1.bf16.msra.mxu0 %v2889
        %4065 = vmatprep.subr.bf16.mxu0 %v2894
        %4066 = vmatpush1.bf16.msra.mxu0 %v2893
        %4067 = vmatprep.subr.bf16.mxu0 %v2898
        %4068 = vmatpush1.bf16.msra.mxu0 %v2897
        %4069 = vmatprep.subr.bf16.mxu0 %v2902
        %4070 = vmatpush1.bf16.msra.mxu0 %v2901
        %4071 = vmatprep.subr.bf16.mxu0 %v2906
        %4072 = vmatpush1.bf16.msra.mxu0 %v2905
        %4073 = vmatprep.subr.bf16.mxu0 %v2910
        %4074 = vmatpush1.bf16.msra.mxu0 %v2909
        %4075 = vmatprep.mubr.bf16.mxu0 %v2075
        %4076 = vmatmul.mubr.bf16.gmra.mrb[0].mxu0 %v2074
        %v4077 = vpop.f32.mrb[0].mxu0
        %v4078 = vadd.f32 0.0, %v4077
        %v4079 = vpop.f32.mrb[0].mxu0
        %v4080 = vadd.f32 0.0, %v4079
        %v4081 = vpop.f32.mrb[0].mxu0
        %v4082 = vadd.f32 0.0, %v4081
        %v4083 = vpop.f32.mrb[0].mxu0
        %v4084 = vadd.f32 0.0, %v4083
        %4085 = vdwg.mxu0
        %4086 = vmatprep.subr.bf16.mxu0 %v2914
        %4087 = vmatpush1.bf16.msra.mxu0 %v2913
        %4088 = vmatprep.subr.bf16.mxu0 %v2918
        %4089 = vmatpush1.bf16.msra.mxu0 %v2917
        %4090 = vmatprep.subr.bf16.mxu0 %v2922
        %4091 = vmatpush1.bf16.msra.mxu0 %v2921
        %4092 = vmatprep.subr.bf16.mxu0 %v2926
        %4093 = vmatpush1.bf16.msra.mxu0 %v2925
        %4094 = vmatprep.subr.bf16.mxu0 %v2930
        %4095 = vmatpush1.bf16.msra.mxu0 %v2929
        %4096 = vmatprep.subr.bf16.mxu0 %v2934
        %4097 = vmatpush1.bf16.msra.mxu0 %v2933
        %4098 = vmatprep.subr.bf16.mxu0 %v2938
        %4099 = vmatpush1.bf16.msra.mxu0 %v2937
        %4100 = vmatprep.subr.bf16.mxu0 %v2942
        %4101 = vmatpush1.bf16.msra.mxu0 %v2941
        %4102 = vmatprep.subr.bf16.mxu0 %v2946
        %4103 = vmatpush1.bf16.msra.mxu0 %v2945
        %4104 = vmatprep.subr.bf16.mxu0 %v2950
        %4105 = vmatpush1.bf16.msra.mxu0 %v2949
        %4106 = vmatprep.subr.bf16.mxu0 %v2954
        %4107 = vmatpush1.bf16.msra.mxu0 %v2953
        %4108 = vmatprep.subr.bf16.mxu0 %v2958
        %4109 = vmatpush1.bf16.msra.mxu0 %v2957
        %4110 = vmatprep.subr.bf16.mxu0 %v2962
        %4111 = vmatpush1.bf16.msra.mxu0 %v2961
        %4112 = vmatprep.subr.bf16.mxu0 %v2966
        %4113 = vmatpush1.bf16.msra.mxu0 %v2965
        %4114 = vmatprep.subr.bf16.mxu0 %v2970
        %4115 = vmatpush1.bf16.msra.mxu0 %v2969
        %4116 = vmatprep.subr.bf16.mxu0 %v2974
        %4117 = vmatpush1.bf16.msra.mxu0 %v2973
        %4118 = vmatprep.mubr.bf16.mxu0 %v2077
        %4119 = vmatmul.mubr.bf16.gmra.mrb[0].mxu0 %v2076
        %v4120 = vpop.f32.mrb[0].mxu0
        %v4121 = vadd.f32 %v4078, %v4120
        %v4122 = vpop.f32.mrb[0].mxu0
        %v4123 = vadd.f32 %v4080, %v4122
        %v4124 = vpop.f32.mrb[0].mxu0
        %v4125 = vadd.f32 %v4082, %v4124
        %v4126 = vpop.f32.mrb[0].mxu0
        %v4127 = vadd.f32 %v4084, %v4126
        %4128 = vdwg.mxu0
        %4129 = vmatprep.subr.bf16.mxu0 %v2978
        %4130 = vmatpush1.bf16.msra.mxu0 %v2977
        %4131 = vmatprep.subr.bf16.mxu0 %v2982
        %4132 = vmatpush1.bf16.msra.mxu0 %v2981
        %4133 = vmatprep.subr.bf16.mxu0 %v2986
        %4134 = vmatpush1.bf16.msra.mxu0 %v2985
        %4135 = vmatprep.subr.bf16.mxu0 %v2990
        %4136 = vmatpush1.bf16.msra.mxu0 %v2989
        %4137 = vmatprep.subr.bf16.mxu0 %v2994
        %4138 = vmatpush1.bf16.msra.mxu0 %v2993
        %4139 = vmatprep.subr.bf16.mxu0 %v2998
        %4140 = vmatpush1.bf16.msra.mxu0 %v2997
        %4141 = vmatprep.subr.bf16.mxu0 %v3002
        %4142 = vmatpush1.bf16.msra.mxu0 %v3001
        %4143 = vmatprep.subr.bf16.mxu0 %v3006
        %4144 = vmatpush1.bf16.msra.mxu0 %v3005
        %4145 = vmatprep.subr.bf16.mxu0 %v3010
        %4146 = vmatpush1.bf16.msra.mxu0 %v3009
        %4147 = vmatprep.subr.bf16.mxu0 %v3014
        %4148 = vmatpush1.bf16.msra.mxu0 %v3013
        %4149 = vmatprep.subr.bf16.mxu0 %v3018
        %4150 = vmatpush1.bf16.msra.mxu0 %v3017
        %4151 = vmatprep.subr.bf16.mxu0 %v3022
        %4152 = vmatpush1.bf16.msra.mxu0 %v3021
        %4153 = vmatprep.subr.bf16.mxu0 %v3026
        %4154 = vmatpush1.bf16.msra.mxu0 %v3025
        %4155 = vmatprep.subr.bf16.mxu0 %v3030
        %4156 = vmatpush1.bf16.msra.mxu0 %v3029
        %4157 = vmatprep.subr.bf16.mxu0 %v3034
        %4158 = vmatpush1.bf16.msra.mxu0 %v3033
        %4159 = vmatprep.subr.bf16.mxu0 %v3038
        %4160 = vmatpush1.bf16.msra.mxu0 %v3037
        %4161 = vmatprep.mubr.bf16.mxu0 %v2079
        %4162 = vmatmul.mubr.bf16.gmra.mrb[0].mxu0 %v2078
        %v4163 = vpop.f32.mrb[0].mxu0
        %v4164 = vadd.f32 %v4121, %v4163
        %v4165 = vpop.f32.mrb[0].mxu0
        %v4166 = vadd.f32 %v4123, %v4165
        %v4167 = vpop.f32.mrb[0].mxu0
        %v4168 = vadd.f32 %v4125, %v4167
        %v4169 = vpop.f32.mrb[0].mxu0
        %v4170 = vadd.f32 %v4127, %v4169
        %4171 = vdwg.mxu0
        %4172 = vmatprep.subr.bf16.mxu0 %v2852
        %4173 = vmatpush1.bf16.msra.mxu0 %v2851
        %4174 = vmatprep.subr.bf16.mxu0 %v2856
        %4175 = vmatpush1.bf16.msra.mxu0 %v2855
        %4176 = vmatprep.subr.bf16.mxu0 %v2860
        %4177 = vmatpush1.bf16.msra.mxu0 %v2859
        %4178 = vmatprep.subr.bf16.mxu0 %v2864
        %4179 = vmatpush1.bf16.msra.mxu0 %v2863
        %4180 = vmatprep.subr.bf16.mxu0 %v2868
        %4181 = vmatpush1.bf16.msra.mxu0 %v2867
        %4182 = vmatprep.subr.bf16.mxu0 %v2872
        %4183 = vmatpush1.bf16.msra.mxu0 %v2871
        %4184 = vmatprep.subr.bf16.mxu0 %v2876
        %4185 = vmatpush1.bf16.msra.mxu0 %v2875
        %4186 = vmatprep.subr.bf16.mxu0 %v2880
        %4187 = vmatpush1.bf16.msra.mxu0 %v2879
        %4188 = vmatprep.subr.bf16.mxu0 %v2884
        %4189 = vmatpush1.bf16.msra.mxu0 %v2883
        %4190 = vmatprep.subr.bf16.mxu0 %v2888
        %4191 = vmatpush1.bf16.msra.mxu0 %v2887
        %4192 = vmatprep.subr.bf16.mxu0 %v2892
        %4193 = vmatpush1.bf16.msra.mxu0 %v2891
        %4194 = vmatprep.subr.bf16.mxu0 %v2896
        %4195 = vmatpush1.bf16.msra.mxu0 %v2895
        %4196 = vmatprep.subr.bf16.mxu0 %v2900
        %4197 = vmatpush1.bf16.msra.mxu0 %v2899
        %4198 = vmatprep.subr.bf16.mxu0 %v2904
        %4199 = vmatpush1.bf16.msra.mxu0 %v2903
        %4200 = vmatprep.subr.bf16.mxu0 %v2908
        %4201 = vmatpush1.bf16.msra.mxu0 %v2907
        %4202 = vmatprep.subr.bf16.mxu0 %v2912
        %4203 = vmatpush1.bf16.msra.mxu0 %v2911
        %4204 = vmatprep.mubr.bf16.mxu0 %v2075
        %4205 = vmatmul.mubr.bf16.gmra.mrb[0].mxu0 %v2074
        %v4206 = vpop.f32.mrb[0].mxu0
        %v4207 = vadd.f32 0.0, %v4206
        %v4208 = vpop.f32.mrb[0].mxu0
        %v4209 = vadd.f32 0.0, %v4208
        %v4210 = vpop.f32.mrb[0].mxu0
        %v4211 = vadd.f32 0.0, %v4210
        %v4212 = vpop.f32.mrb[0].mxu0
        %v4213 = vadd.f32 0.0, %v4212
        %4214 = vdwg.mxu0
        %4215 = vmatprep.subr.bf16.mxu0 %v2916
        %4216 = vmatpush1.bf16.msra.mxu0 %v2915
        %4217 = vmatprep.subr.bf16.mxu0 %v2920
        %4218 = vmatpush1.bf16.msra.mxu0 %v2919
        %4219 = vmatprep.subr.bf16.mxu0 %v2924
        %4220 = vmatpush1.bf16.msra.mxu0 %v2923
        %4221 = vmatprep.subr.bf16.mxu0 %v2928
        %4222 = vmatpush1.bf16.msra.mxu0 %v2927
        %4223 = vmatprep.subr.bf16.mxu0 %v2932
        %4224 = vmatpush1.bf16.msra.mxu0 %v2931
        %4225 = vmatprep.subr.bf16.mxu0 %v2936
        %4226 = vmatpush1.bf16.msra.mxu0 %v2935
        %4227 = vmatprep.subr.bf16.mxu0 %v2940
        %4228 = vmatpush1.bf16.msra.mxu0 %v2939
        %4229 = vmatprep.subr.bf16.mxu0 %v2944
        %4230 = vmatpush1.bf16.msra.mxu0 %v2943
        %4231 = vmatprep.subr.bf16.mxu0 %v2948
        %4232 = vmatpush1.bf16.msra.mxu0 %v2947
        %4233 = vmatprep.subr.bf16.mxu0 %v2952
        %4234 = vmatpush1.bf16.msra.mxu0 %v2951
        %4235 = vmatprep.subr.bf16.mxu0 %v2956
        %4236 = vmatpush1.bf16.msra.mxu0 %v2955
        %4237 = vmatprep.subr.bf16.mxu0 %v2960
        %4238 = vmatpush1.bf16.msra.mxu0 %v2959
        %4239 = vmatprep.subr.bf16.mxu0 %v2964
        %4240 = vmatpush1.bf16.msra.mxu0 %v2963
        %4241 = vmatprep.subr.bf16.mxu0 %v2968
        %4242 = vmatpush1.bf16.msra.mxu0 %v2967
        %4243 = vmatprep.subr.bf16.mxu0 %v2972
        %4244 = vmatpush1.bf16.msra.mxu0 %v2971
        %4245 = vmatprep.subr.bf16.mxu0 %v2976
        %4246 = vmatpush1.bf16.msra.mxu0 %v2975
        %4247 = vmatprep.mubr.bf16.mxu0 %v2077
        %4248 = vmatmul.mubr.bf16.gmra.mrb[0].mxu0 %v2076
        %v4249 = vpop.f32.mrb[0].mxu0
        %v4250 = vadd.f32 %v4207, %v4249
        %v4251 = vpop.f32.mrb[0].mxu0
        %v4252 = vadd.f32 %v4209, %v4251
        %v4253 = vpop.f32.mrb[0].mxu0
        %v4254 = vadd.f32 %v4211, %v4253
        %v4255 = vpop.f32.mrb[0].mxu0
        %v4256 = vadd.f32 %v4213, %v4255
        %4257 = vdwg.mxu0
        %4258 = vmatprep.subr.bf16.mxu0 %v2980
        %4259 = vmatpush1.bf16.msra.mxu0 %v2979
        %4260 = vmatprep.subr.bf16.mxu0 %v2984
        %4261 = vmatpush1.bf16.msra.mxu0 %v2983
        %4262 = vmatprep.subr.bf16.mxu0 %v2988
        %4263 = vmatpush1.bf16.msra.mxu0 %v2987
        %4264 = vmatprep.subr.bf16.mxu0 %v2992
        %4265 = vmatpush1.bf16.msra.mxu0 %v2991
        %4266 = vmatprep.subr.bf16.mxu0 %v2996
        %4267 = vmatpush1.bf16.msra.mxu0 %v2995
        %4268 = vmatprep.subr.bf16.mxu0 %v3000
        %4269 = vmatpush1.bf16.msra.mxu0 %v2999
        %4270 = vmatprep.subr.bf16.mxu0 %v3004
        %4271 = vmatpush1.bf16.msra.mxu0 %v3003
        %4272 = vmatprep.subr.bf16.mxu0 %v3008
        %4273 = vmatpush1.bf16.msra.mxu0 %v3007
        %4274 = vmatprep.subr.bf16.mxu0 %v3012
        %4275 = vmatpush1.bf16.msra.mxu0 %v3011
        %4276 = vmatprep.subr.bf16.mxu0 %v3016
        %4277 = vmatpush1.bf16.msra.mxu0 %v3015
        %4278 = vmatprep.subr.bf16.mxu0 %v3020
        %4279 = vmatpush1.bf16.msra.mxu0 %v3019
        %4280 = vmatprep.subr.bf16.mxu0 %v3024
        %4281 = vmatpush1.bf16.msra.mxu0 %v3023
        %4282 = vmatprep.subr.bf16.mxu0 %v3028
        %4283 = vmatpush1.bf16.msra.mxu0 %v3027
        %4284 = vmatprep.subr.bf16.mxu0 %v3032
        %4285 = vmatpush1.bf16.msra.mxu0 %v3031
        %4286 = vmatprep.subr.bf16.mxu0 %v3036
        %4287 = vmatpush1.bf16.msra.mxu0 %v3035
        %4288 = vmatprep.subr.bf16.mxu0 %v3040
        %4289 = vmatpush1.bf16.msra.mxu0 %v3039
        %4290 = vmatprep.mubr.bf16.mxu0 %v2079
        %4291 = vmatmul.mubr.bf16.gmra.mrb[0].mxu0 %v2078
        %v4292 = vpop.f32.mrb[0].mxu0
        %v4293 = vadd.f32 %v4250, %v4292
        %v4294 = vpop.f32.mrb[0].mxu0
        %v4295 = vadd.f32 %v4252, %v4294
        %v4296 = vpop.f32.mrb[0].mxu0
        %v4297 = vadd.f32 %v4254, %v4296
        %v4298 = vpop.f32.mrb[0].mxu0
        %v4299 = vadd.f32 %v4256, %v4298
        %4300 = vdwg.mxu0
        %v4301 = vmax.f32 %v4164, %v4166
        %v4302 = vmax.f32 %v4168, %v4170
        %v4303 = vmax.f32 %v4293, %v4295
        %v4304 = vmax.f32 %v4297, %v4299
        %v4305 = vmax.f32 %v4301, %v4303
        %v4306 = vmax.f32 %v4302, %v4304
        %v4307 = vadd.f32 %v4305, %v3501
        %v4308 = vadd.f32 %v4306, %v3501
        %v4309 = vmax.f32 %v4307, 0.0
        %v4310 = vmax.f32 %v4308, 0.0
        %v4311 = vpack.c.bf16 %v3506, %v3505
        %v4312 = vpack.c.bf16 %v3774, %v3773
        %v4313 = vpack.c.bf16 %v4042, %v4041
        %v4314 = vpack.c.bf16 %v4310, %v4309
        %v4315 = vld [vmem:[%s5] sm:$0xf]
        %v4316 = vld [vmem:[%s5 + $0x4] sm:$0xf]
        %v4317 = vld [vmem:[%s5 + $0x8] sm:$0xf]
        %v4318 = vld [vmem:[%s5 + $0xc] sm:$0xf]
        %v4319 = vld [vmem:[%s5 + $0x10] sm:$0xf]
        %v4320 = vld [vmem:[%s5 + $0x14] sm:$0xf]
        %v4321 = vld [vmem:[%s5 + $0x18] sm:$0xf]
        %v4322 = vld [vmem:[%s5 + $0x1c] sm:$0xf]
        %v4323 = vld [vmem:[%s5 + $0x20] sm:$0xf]
        %v4324 = vld [vmem:[%s5 + $0x24] sm:$0xf]
        %v4325 = vld [vmem:[%s5 + $0x28] sm:$0xf]
        %v4326 = vld [vmem:[%s5 + $0x2c] sm:$0xf]
        %v4327 = vld [vmem:[%s5 + $0x30] sm:$0xf]
        %v4328 = vld [vmem:[%s5 + $0x34] sm:$0xf]
        %v4329 = vld [vmem:[%s5 + $0x38] sm:$0xf]
        %v4330 = vld [vmem:[%s5 + $0x3c] sm:$0xf]
        %v4331 = vld [vmem:[%s5 + $0x40] sm:$0xf]
        %v4332 = vld [vmem:[%s5 + $0x44] sm:$0xf]
        %v4333 = vld [vmem:[%s5 + $0x48] sm:$0xf]
        %v4334 = vld [vmem:[%s5 + $0x4c] sm:$0xf]
        %v4335 = vld [vmem:[%s5 + $0x50] sm:$0xf]
        %v4336 = vld [vmem:[%s5 + $0x54] sm:$0xf]
        %v4337 = vld [vmem:[%s5 + $0x58] sm:$0xf]
        %v4338 = vld [vmem:[%s5 + $0x5c] sm:$0xf]
        %v4339 = vld [vmem:[%s5 + $0x60] sm:$0xf]
        %v4340 = vld [vmem:[%s5 + $0x64] sm:$0xf]
        %v4341 = vld [vmem:[%s5 + $0x68] sm:$0xf]
        %v4342 = vld [vmem:[%s5 + $0x6c] sm:$0xf]
        %v4343 = vld [vmem:[%s5 + $0x70] sm:$0xf]
        %v4344 = vld [vmem:[%s5 + $0x74] sm:$0xf]
        %v4345 = vld [vmem:[%s5 + $0x78] sm:$0xf]
        %v4346 = vld [vmem:[%s5 + $0x7c] sm:$0xf]
        %v4347 = vld [vmem:[%s5 + $0x80] sm:$0xf]
        %v4348 = vld [vmem:[%s5 + $0x84] sm:$0xf]
        %v4349 = vld [vmem:[%s5 + $0x88] sm:$0xf]
        %v4350 = vld [vmem:[%s5 + $0x8c] sm:$0xf]
        %v4351 = vld [vmem:[%s5 + $0x90] sm:$0xf]
        %v4352 = vld [vmem:[%s5 + $0x94] sm:$0xf]
        %v4353 = vld [vmem:[%s5 + $0x98] sm:$0xf]
        %v4354 = vld [vmem:[%s5 + $0x9c] sm:$0xf]
        %v4355 = vld [vmem:[%s5 + $0xa0] sm:$0xf]
        %v4356 = vld [vmem:[%s5 + $0xa4] sm:$0xf]
        %v4357 = vld [vmem:[%s5 + $0xa8] sm:$0xf]
        %v4358 = vld [vmem:[%s5 + $0xac] sm:$0xf]
        %v4359 = vld [vmem:[%s5 + $0xb0] sm:$0xf]
        %v4360 = vld [vmem:[%s5 + $0xb4] sm:$0xf]
        %v4361 = vld [vmem:[%s5 + $0xb8] sm:$0xf]
        %v4362 = vld [vmem:[%s5 + $0xbc] sm:$0xf]
        %v4363 = vld [vmem:[%s5 + $0xc0] sm:$0xf]
        %v4364 = vld [vmem:[%s5 + $0xc4] sm:$0xf]
        %v4365 = vld [vmem:[%s5 + $0xc8] sm:$0xf]
        %v4366 = vld [vmem:[%s5 + $0xcc] sm:$0xf]
        %v4367 = vld [vmem:[%s5 + $0xd0] sm:$0xf]
        %v4368 = vld [vmem:[%s5 + $0xd4] sm:$0xf]
        %v4369 = vld [vmem:[%s5 + $0xd8] sm:$0xf]
        %v4370 = vld [vmem:[%s5 + $0xdc] sm:$0xf]
        %v4371 = vld [vmem:[%s5 + $0xe0] sm:$0xf]
        %v4372 = vld [vmem:[%s5 + $0xe4] sm:$0xf]
        %v4373 = vld [vmem:[%s5 + $0xe8] sm:$0xf]
        %v4374 = vld [vmem:[%s5 + $0xec] sm:$0xf]
        %v4375 = vld [vmem:[%s5 + $0xf0] sm:$0xf]
        %v4376 = vld [vmem:[%s5 + $0xf4] sm:$0xf]
        %v4377 = vld [vmem:[%s5 + $0xf8] sm:$0xf]
        %v4378 = vld [vmem:[%s5 + $0xfc] sm:$0xf]
        %v4379 = vld [vmem:[%s6] sm:$0x1]
        %v4381 = vlaneseq
        %v4382 = vshrl.u32 %v4381, 7
        %v4383 = vsub.s32 0, %v4382
        %v4384 = vrot.slane %v4379, %v4383
        %v4450 = vunpack.c.l.b16 %v4315
        %v4451 = vunpack.c.l.b16 %v4316
        %v4452 = vunpack.c.l.b16 %v4317
        %v4453 = vunpack.c.l.b16 %v4318
        %v4454 = vunpack.c.l.b16 %v4319
        %v4455 = vunpack.c.l.b16 %v4320
        %v4456 = vunpack.c.l.b16 %v4321
        %v4457 = vunpack.c.l.b16 %v4322
        %v4458 = vunpack.c.l.b16 %v4323
        %v4459 = vunpack.c.l.b16 %v4324
        %v4460 = vunpack.c.l.b16 %v4325
        %v4461 = vunpack.c.l.b16 %v4326
        %v4462 = vunpack.c.l.b16 %v4327
        %v4463 = vunpack.c.l.b16 %v4328
        %v4464 = vunpack.c.l.b16 %v4329
        %v4465 = vunpack.c.l.b16 %v4330
        %v4466 = vunpack.c.l.b16 %v4331
        %v4467 = vunpack.c.l.b16 %v4332
        %v4468 = vunpack.c.l.b16 %v4333
        %v4469 = vunpack.c.l.b16 %v4334
        %v4470 = vunpack.c.l.b16 %v4335
        %v4471 = vunpack.c.l.b16 %v4336
        %v4472 = vunpack.c.l.b16 %v4337
        %v4473 = vunpack.c.l.b16 %v4338
        %v4474 = vunpack.c.l.b16 %v4339
        %v4475 = vunpack.c.l.b16 %v4340
        %v4476 = vunpack.c.l.b16 %v4341
        %v4477 = vunpack.c.l.b16 %v4342
        %v4478 = vunpack.c.l.b16 %v4343
        %v4479 = vunpack.c.l.b16 %v4344
        %v4480 = vunpack.c.l.b16 %v4345
        %v4481 = vunpack.c.l.b16 %v4346
        %v4482 = vunpack.c.l.b16 %v4347
        %v4483 = vunpack.c.l.b16 %v4348
        %v4484 = vunpack.c.l.b16 %v4349
        %v4485 = vunpack.c.l.b16 %v4350
        %v4486 = vunpack.c.l.b16 %v4351
        %v4487 = vunpack.c.l.b16 %v4352
        %v4488 = vunpack.c.l.b16 %v4353
        %v4489 = vunpack.c.l.b16 %v4354
        %v4490 = vunpack.c.l.b16 %v4355
        %v4491 = vunpack.c.l.b16 %v4356
        %v4492 = vunpack.c.l.b16 %v4357
        %v4493 = vunpack.c.l.b16 %v4358
        %v4494 = vunpack.c.l.b16 %v4359
        %v4495 = vunpack.c.l.b16 %v4360
        %v4496 = vunpack.c.l.b16 %v4361
        %v4497 = vunpack.c.l.b16 %v4362
        %v4498 = vunpack.c.l.b16 %v4363
        %v4499 = vunpack.c.l.b16 %v4364
        %v4500 = vunpack.c.l.b16 %v4365
        %v4501 = vunpack.c.l.b16 %v4366
        %v4502 = vunpack.c.l.b16 %v4367
        %v4503 = vunpack.c.l.b16 %v4368
        %v4504 = vunpack.c.l.b16 %v4369
        %v4505 = vunpack.c.l.b16 %v4370
        %v4506 = vunpack.c.l.b16 %v4371
        %v4507 = vunpack.c.l.b16 %v4372
        %v4508 = vunpack.c.l.b16 %v4373
        %v4509 = vunpack.c.l.b16 %v4374
        %v4510 = vunpack.c.l.b16 %v4375
        %v4511 = vunpack.c.l.b16 %v4376
        %v4512 = vunpack.c.l.b16 %v4377
        %v4513 = vunpack.c.l.b16 %v4378
        %v4514 = vpack.c.b16 %v4451, %v4450
        %v4515 = vpack.c.b16 %v4453, %v4452
        %v4516 = vpack.c.b16 %v4455, %v4454
        %v4517 = vpack.c.b16 %v4457, %v4456
        %v4518 = vpack.c.b16 %v4459, %v4458
        %v4519 = vpack.c.b16 %v4461, %v4460
        %v4520 = vpack.c.b16 %v4463, %v4462
        %v4521 = vpack.c.b16 %v4465, %v4464
        %v4522 = vpack.c.b16 %v4467, %v4466
        %v4523 = vpack.c.b16 %v4469, %v4468
        %v4524 = vpack.c.b16 %v4471, %v4470
        %v4525 = vpack.c.b16 %v4473, %v4472
        %v4526 = vpack.c.b16 %v4475, %v4474
        %v4527 = vpack.c.b16 %v4477, %v4476
        %v4528 = vpack.c.b16 %v4479, %v4478
        %v4529 = vpack.c.b16 %v4481, %v4480
        %v4530 = vpack.c.b16 %v4483, %v4482
        %v4531 = vpack.c.b16 %v4485, %v4484
        %v4532 = vpack.c.b16 %v4487, %v4486
        %v4533 = vpack.c.b16 %v4489, %v4488
        %v4534 = vpack.c.b16 %v4491, %v4490
        %v4535 = vpack.c.b16 %v4493, %v4492
        %v4536 = vpack.c.b16 %v4495, %v4494
        %v4537 = vpack.c.b16 %v4497, %v4496
        %v4538 = vpack.c.b16 %v4499, %v4498
        %v4539 = vpack.c.b16 %v4501, %v4500
        %v4540 = vpack.c.b16 %v4503, %v4502
        %v4541 = vpack.c.b16 %v4505, %v4504
        %v4542 = vpack.c.b16 %v4507, %v4506
        %v4543 = vpack.c.b16 %v4509, %v4508
        %v4544 = vpack.c.b16 %v4511, %v4510
        %v4545 = vpack.c.b16 %v4513, %v4512
        %4578 = vmatprep.subr.bf16.mxu0 0
        %4579 = vmatpush1.bf16.msra.mxu0 %v4514
        %4580 = vmatprep.subr.bf16.mxu0 0
        %4581 = vmatpush1.bf16.msra.mxu0 %v4515
        %4582 = vmatprep.subr.bf16.mxu0 0
        %4583 = vmatpush1.bf16.msra.mxu0 %v4516
        %4584 = vmatprep.subr.bf16.mxu0 0
        %4585 = vmatpush1.bf16.msra.mxu0 %v4517
        %4586 = vmatprep.subr.bf16.mxu0 0
        %4587 = vmatpush1.bf16.msra.mxu0 %v4518
        %4588 = vmatprep.subr.bf16.mxu0 0
        %4589 = vmatpush1.bf16.msra.mxu0 %v4519
        %4590 = vmatprep.subr.bf16.mxu0 0
        %4591 = vmatpush1.bf16.msra.mxu0 %v4520
        %4592 = vmatprep.subr.bf16.mxu0 0
        %4593 = vmatpush1.bf16.msra.mxu0 %v4521
        %4594 = vmatprep.subr.bf16.mxu0 0
        %4595 = vmatpush1.bf16.msra.mxu0 %v4522
        %4596 = vmatprep.subr.bf16.mxu0 0
        %4597 = vmatpush1.bf16.msra.mxu0 %v4523
        %4598 = vmatprep.subr.bf16.mxu0 0
        %4599 = vmatpush1.bf16.msra.mxu0 %v4524
        %4600 = vmatprep.subr.bf16.mxu0 0
        %4601 = vmatpush1.bf16.msra.mxu0 %v4525
        %4602 = vmatprep.subr.bf16.mxu0 0
        %4603 = vmatpush1.bf16.msra.mxu0 %v4526
        %4604 = vmatprep.subr.bf16.mxu0 0
        %4605 = vmatpush1.bf16.msra.mxu0 %v4527
        %4606 = vmatprep.subr.bf16.mxu0 0
        %4607 = vmatpush1.bf16.msra.mxu0 %v4528
        %4608 = vmatprep.subr.bf16.mxu0 0
        %4609 = vmatpush1.bf16.msra.mxu0 %v4529
        %4610 = vmatprep.mubr.bf16.mxu0 %v4312
        %4611 = vmatmul.mubr.bf16.gmra.mrb[0].mxu0 %v4311
        %v4612 = vpop.f32.mrb[0].mxu0
        %v4613 = vadd.f32 %v4384, %v4612
        %v4614 = vpop.f32.mrb[0].mxu0
        %v4615 = vpop.f32.mrb[0].mxu0
        %v4616 = vadd.f32 %v4384, %v4615
        %v4617 = vpop.f32.mrb[0].mxu0
        %4618 = vdwg.mxu0
        %4619 = vmatprep.subr.bf16.mxu0 0
        %4620 = vmatpush1.bf16.msra.mxu0 %v4530
        %4621 = vmatprep.subr.bf16.mxu0 0
        %4622 = vmatpush1.bf16.msra.mxu0 %v4531
        %4623 = vmatprep.subr.bf16.mxu0 0
        %4624 = vmatpush1.bf16.msra.mxu0 %v4532
        %4625 = vmatprep.subr.bf16.mxu0 0
        %4626 = vmatpush1.bf16.msra.mxu0 %v4533
        %4627 = vmatprep.subr.bf16.mxu0 0
        %4628 = vmatpush1.bf16.msra.mxu0 %v4534
        %4629 = vmatprep.subr.bf16.mxu0 0
        %4630 = vmatpush1.bf16.msra.mxu0 %v4535
        %4631 = vmatprep.subr.bf16.mxu0 0
        %4632 = vmatpush1.bf16.msra.mxu0 %v4536
        %4633 = vmatprep.subr.bf16.mxu0 0
        %4634 = vmatpush1.bf16.msra.mxu0 %v4537
        %4635 = vmatprep.subr.bf16.mxu0 0
        %4636 = vmatpush1.bf16.msra.mxu0 %v4538
        %4637 = vmatprep.subr.bf16.mxu0 0
        %4638 = vmatpush1.bf16.msra.mxu0 %v4539
        %4639 = vmatprep.subr.bf16.mxu0 0
        %4640 = vmatpush1.bf16.msra.mxu0 %v4540
        %4641 = vmatprep.subr.bf16.mxu0 0
        %4642 = vmatpush1.bf16.msra.mxu0 %v4541
        %4643 = vmatprep.subr.bf16.mxu0 0
        %4644 = vmatpush1.bf16.msra.mxu0 %v4542
        %4645 = vmatprep.subr.bf16.mxu0 0
        %4646 = vmatpush1.bf16.msra.mxu0 %v4543
        %4647 = vmatprep.subr.bf16.mxu0 0
        %4648 = vmatpush1.bf16.msra.mxu0 %v4544
        %4649 = vmatprep.subr.bf16.mxu0 0
        %4650 = vmatpush1.bf16.msra.mxu0 %v4545
        %4651 = vmatprep.mubr.bf16.mxu0 %v4314
        %4652 = vmatmul.mubr.bf16.gmra.mrb[0].mxu0 %v4313
        %v4653 = vpop.f32.mrb[0].mxu0
        %v4654 = vadd.f32 %v4613, %v4653
        %v4655 = vpop.f32.mrb[0].mxu0
        %v4656 = vpop.f32.mrb[0].mxu0
        %v4657 = vadd.f32 %v4616, %v4656
        %v4658 = vpop.f32.mrb[0].mxu0
        %4659 = vdwg.mxu0
        %v4660 = vmax.f32 %v4654, 0.0
        %v4661 = vmax.f32 %v4657, 0.0
        %v4662 = vpack.c.bf16 %v4661, %v4660
        %v4663 = vld [vmem:[%s7] sm:$0xf]
        %v4664 = vld [vmem:[%s7 + $0x4] sm:$0xf]
        %v4665 = vld [vmem:[%s7 + $0x8] sm:$0xf]
        %v4666 = vld [vmem:[%s7 + $0xc] sm:$0xf]
        %v4667 = vld [vmem:[%s7 + $0x10] sm:$0xf]
        %v4668 = vld [vmem:[%s7 + $0x14] sm:$0xf]
        %v4669 = vld [vmem:[%s7 + $0x18] sm:$0xf]
        %v4670 = vld [vmem:[%s7 + $0x1c] sm:$0xf]
        %v4671 = vld [vmem:[%s7 + $0x20] sm:$0xf]
        %v4672 = vld [vmem:[%s7 + $0x24] sm:$0xf]
        %v4673 = vld [vmem:[%s7 + $0x28] sm:$0xf]
        %v4674 = vld [vmem:[%s7 + $0x2c] sm:$0xf]
        %v4675 = vld [vmem:[%s7 + $0x30] sm:$0xf]
        %v4676 = vld [vmem:[%s7 + $0x34] sm:$0xf]
        %v4677 = vld [vmem:[%s7 + $0x38] sm:$0xf]
        %v4678 = vld [vmem:[%s7 + $0x3c] sm:$0xf]
        %v4679 = vld [vmem:[%s8] sm:$0x1]
        %v4681 = vlaneseq
        %v4682 = vshrl.u32 %v4681, 7
        %v4683 = vsub.s32 0, %v4682
        %v4684 = vrot.slane %v4679, %v4683
        %v4702 = vunpack.c.l.b16 %v4663
        %v4703 = vunpack.c.l.b16 %v4664
        %v4704 = vunpack.c.l.b16 %v4665
        %v4705 = vunpack.c.l.b16 %v4666
        %v4706 = vunpack.c.l.b16 %v4667
        %v4707 = vunpack.c.l.b16 %v4668
        %v4708 = vunpack.c.l.b16 %v4669
        %v4709 = vunpack.c.l.b16 %v4670
        %v4710 = vunpack.c.l.b16 %v4671
        %v4711 = vunpack.c.l.b16 %v4672
        %v4712 = vunpack.c.l.b16 %v4673
        %v4713 = vunpack.c.l.b16 %v4674
        %v4714 = vunpack.c.l.b16 %v4675
        %v4715 = vunpack.c.l.b16 %v4676
        %v4716 = vunpack.c.l.b16 %v4677
        %v4717 = vunpack.c.l.b16 %v4678
        %v4718 = vpack.c.b16 %v4703, %v4702
        %v4719 = vpack.c.b16 %v4705, %v4704
        %v4720 = vpack.c.b16 %v4707, %v4706
        %v4721 = vpack.c.b16 %v4709, %v4708
        %v4722 = vpack.c.b16 %v4711, %v4710
        %v4723 = vpack.c.b16 %v4713, %v4712
        %v4724 = vpack.c.b16 %v4715, %v4714
        %v4725 = vpack.c.b16 %v4717, %v4716
        %4734 = vmatprep.subr.bf16.mxu0 0
        %4735 = vmatpush1.bf16.msra.mxu0 %v4718
        %4736 = vmatprep.subr.bf16.mxu0 0
        %4737 = vmatpush1.bf16.msra.mxu0 %v4719
        %4738 = vmatprep.subr.bf16.mxu0 0
        %4739 = vmatpush1.bf16.msra.mxu0 %v4720
        %4740 = vmatprep.subr.bf16.mxu0 0
        %4741 = vmatpush1.bf16.msra.mxu0 %v4721
        %4742 = vmatprep.subr.bf16.mxu0 0
        %4743 = vmatpush1.bf16.msra.mxu0 %v4722
        %4744 = vmatprep.subr.bf16.mxu0 0
        %4745 = vmatpush1.bf16.msra.mxu0 %v4723
        %4746 = vmatprep.subr.bf16.mxu0 0
        %4747 = vmatpush1.bf16.msra.mxu0 %v4724
        %4748 = vmatprep.subr.bf16.mxu0 0
        %4749 = vmatpush1.bf16.msra.mxu0 %v4725
        %4750 = vmatprep.subr.bf16.mxu0 0
        %4751 = vmatpush1.bf16.msra.mxu0 0
        %4752 = vmatprep.subr.bf16.mxu0 0
        %4753 = vmatpush1.bf16.msra.mxu0 0
        %4754 = vmatprep.subr.bf16.mxu0 0
        %4755 = vmatpush1.bf16.msra.mxu0 0
        %4756 = vmatprep.subr.bf16.mxu0 0
        %4757 = vmatpush1.bf16.msra.mxu0 0
        %4758 = vmatprep.subr.bf16.mxu0 0
        %4759 = vmatpush1.bf16.msra.mxu0 0
        %4760 = vmatprep.subr.bf16.mxu0 0
        %4761 = vmatpush1.bf16.msra.mxu0 0
        %4762 = vmatprep.subr.bf16.mxu0 0
        %4763 = vmatpush1.bf16.msra.mxu0 0
        %4764 = vmatprep.subr.bf16.mxu0 0
        %4765 = vmatpush1.bf16.msra.mxu0 0
        %4766 = vmatprep.mubr.bf16.mxu0 0
        %4767 = vmatmul.mubr.bf16.gmra.mrb[0].mxu0 %v4662
        %v4768 = vpop.f32.mrb[0].mxu0
        %v4769 = vadd.f32 %v4684, %v4768
        %v4770 = vpop.f32.mrb[0].mxu0
        %v4771 = vpop.f32.mrb[0].mxu0
        %v4772 = vadd.f32 %v4684, %v4771
        %v4773 = vpop.f32.mrb[0].mxu0
        %4774 = vdwg.mxu0
        %v4775 = vlaneseq
        %v4776 = vand.u32 %v4775, 127
        %vm4777 = vcmp.lt.s32.totalorder %v4776, 10
        %v4778 = vsel %vm4777, %v4769, -1e+30
        %v4779 = vsel %vm4777, %v4772, -1e+30
        %4780 = vmax.xlane.f32.xlu0 %v4778
        %v4781 = vpop.xlane.xlu0 %4780
        %4782 = vmax.xlane.f32.xlu0 %v4779
        %v4783 = vpop.xlane.xlu0 %4782
        %v4784 = vsub.f32 %v4778, %v4781
        %v4785 = vsub.f32 %v4779, %v4783
        %v4786 = vmul.f32 %v4784, 1.442695
        %v4787 = vpow.pop %v4786
        %v4788 = vmul.f32 %v4785, 1.442695
        %v4789 = vpow.pop %v4788
        %v4790 = vsel %vm4777, %v4787, 0.0
        %v4791 = vsel %vm4777, %v4789, 0.0
        %4792 = vadd.xlane.f32.xlu0 %v4790
        %v4793 = vpop.xlane.xlu0 %4792
        %4794 = vadd.xlane.f32.xlu0 %v4791
        %v4795 = vpop.xlane.xlu0 %4794
        %v4796 = vlog2.pop %v4793
        %v4797 = vmul.f32 %v4796, 0.6931472
        %v4798 = vlog2.pop %v4795
        %v4799 = vmul.f32 %v4798, 0.6931472
        %v4800 = vsub.f32 %v4784, %v4797
        %v4801 = vsub.f32 %v4785, %v4799
        %v4802 = vsel %vm4777, %v4800, 0.0
        %v4803 = vsel %vm4777, %v4801, 0.0
        %4804 = vst [vmem:[%s461] sm:$0xff] %v4802
        %4805 = vst [vmem:[%s461 + $0x8] sm:$0xff] %v4803
        %s4806 = smul.u32 2, %s20
        %p4807 = scmp.lt.s32.totalorder %s4806, 3
        %s4808 = scalar_select %p4807, %s4806, 3
        %s4809 = smul.addr %s4808, 8
        %s4810 = scalar_lea.vmem %s9, %s4809
        // Predicated region
        $region95: #{net_forward.1} parent=89 // pred_check
          %p4811 = pneg %p232
        $region96: #{net_forward.1} parent=89 // pred_check_branch
          %4813 = sbr.rel (%p4811) target = $region98
        $region97: #{net_forward.1} parent=89 // pred_region
          %s4814 = smul.u32 2, %s20
        $region98: #{net_forward.1} parent=89 // pred_fallthru
          _
      $region90: #{net_forward.1} parent=5 // pred_fallthru
        _
      %p4815 = scmp.le.s32.totalorder 2, %s15
      // Predicated region
      $region99: #{net_forward.1} parent=5 // pred_check
        %p4816 = pneg %p4815
      $region100: #{net_forward.1} parent=5 // pred_check_branch
        %4818 = sbr.rel (%p4816) target = $region102
      $region101: #{net_forward.1} parent=5 // pred_region
        %s4819 = ssub.s32 %s15, 2
        // Predicated region
        $region103: #{net_forward.1} parent=101 // pred_check
          %p4820 = pneg %p238
        $region104: #{net_forward.1} parent=101 // pred_check_branch
          %4822 = sbr.rel (%p4820) target = $region106
        $region105: #{net_forward.1} parent=101 // pred_region
          %s4823 = smul.u32 2, %s21
          %p4824 = scmp.lt.s32.totalorder %s4823, 3
          %s4825 = scalar_select %p4824, %s4823, 3
          %s4826 = smul.addr %s4825, 8
          %s4827 = scalar_lea.vmem %s9, %s4826
        $region106: #{net_forward.1} parent=101 // pred_fallthru
          _
      $region102: #{net_forward.1} parent=5 // pred_fallthru
        _
    $region6: #{net_forward.1} parent=1 // loop_footer
      %s19 = sadd.s32 1, %s15
    $region7: #{net_forward.1} parent=1 // loop_footer_branch
      %14 = sbr.rel target = $region3
    $region8: #{net_forward.1} parent=1 // loop_exit
      _

</llo_original>
